<compile_context>
chip_gen: v7x
topology: tpu7x:2x2x1
jax: 0.10.0
libtpu: 0.0.40
codegen_flags: <defaults>
</compile_context>

<pallas_src>
import jax
import jax.numpy as jnp
import numpy as np
from jax import lax
from jax.experimental import pallas as pl
from jax.experimental.pallas import tpu as pltpu

# Problem sizes (small, consistent with the module: features=C, spatial HxW, batch N)
N, C, H, W = 2, 4, 16, 16
HW = H * W              # 256 lanes (spatial, lane-dense)
GROUP_N = 2             # images per grid step (fills the 8 sublanes)
GROUP_NC = GROUP_N * C  # 8 sublanes (batch*channel) per grid step
NUM_CONVS = 9           # rcu0: 4 convs, crp: 3 convs, output_conv: 2 convs
NEG = -1.0e30           # additive "-inf" for the max-pool boundary masks

# 3x3 tap offsets (dh, dw); order matches the HWIO weight layout (kh = dh+1, kw = dw+1).
OFF3 = tuple((dh, dw) for dh in (-1, 0, 1) for dw in (-1, 0, 1))
# Off-center offsets of the separable 5x5 pool (row pass then column pass).
POOL_OFF = (-2, -1, 1, 2)


def _refine_kernel(x_ref, w_ref, cmask_ref, pmask_ref, o_ref, taps_ref):
    """Entire BaseRefineNetBlock forward on one (GROUP_NC, HW) slab held in VMEM."""

    # Hoisted sublane broadcasts of the tiny boundary masks (reused by every unrolled loop).
    cmasks = {
        j: jnp.broadcast_to(cmask_ref[pl.ds(j, 1), :], (GROUP_NC, HW))
        for j, (dh, dw) in enumerate(OFF3) if (dh, dw) != (0, 0)
    }
    prow = [jnp.broadcast_to(pmask_ref[pl.ds(i, 1), :], (GROUP_NC, HW)) for i in range(4)]
    pcol = [jnp.broadcast_to(pmask_ref[pl.ds(4 + i, 1), :], (GROUP_NC, HW)) for i in range(4)]

    def relu(v):
        return jnp.maximum(v, 0.0)

    def shift(v, off):
        # shifted[:, p] = v[:, (p + off) mod HW]; wrapped-around values are killed by masks.
        if off == 0:
            return v
        return pltpu.roll(v, (-off) % HW, axis=1)

    def conv3x3(v, conv_idx):
        # Stack the 9 masked/shifted taps into the (9*GROUP_NC, HW) scratch, then one MXU dot.
        for j, (dh, dw) in enumerate(OFF3):
            s = shift(v, dh * W + dw)
            if (dh, dw) != (0, 0):
                s = s * cmasks[j]                     # zero padding at image borders
            taps_ref[pl.ds(j * GROUP_NC, GROUP_NC), :] = s
        return jnp.dot(w_ref[conv_idx], taps_ref[...],   # (8,72) @ (72,256) channel mix
                       preferred_element_type=jnp.float32)

    def rcu(v, conv_idx):
        out = conv3x3(relu(v), conv_idx)
        out = conv3x3(relu(out), conv_idx + 1)
        return out + v

    def maxpool5(v):
        # Separable 5x5 max-pool with -inf padding: 5x1 row pass, then 1x5 column pass.
        r = v                                          # center row tap, always valid
        for i, dh in enumerate(POOL_OFF):
            r = jnp.maximum(r, shift(v, dh * W) + prow[i])
        out = r                                        # center column tap, always valid
        for i, dw in enumerate(POOL_OFF):
            out = jnp.maximum(out, shift(r, dw) + pcol[i])
        return out

    x = x_ref[...]
    # rcu0 = nn.Sequential(RCU, RCU)
    x = rcu(x, 0)
    x = rcu(x, 2)
    # self.mrf is None (single input)
    # Chained residual pooling
    x = relu(x)
    path = x
    for i in range(3):
        path = conv3x3(maxpool5(path), 4 + i)
        x = x + path
    # output_conv = RCU
    x = rcu(x, 7)
    o_ref[...] = x


def _build_masks():
    """Tiny boundary masks, one lane-row per tap (broadcast to sublanes inside the kernel).

    cmask: (9, HW)  0/1      multiplicative masks for the 3x3 conv taps (zero padding).
    pmask: (8, HW)  0/-1e30  additive masks for the separable pool:
                    rows 0-3 = row shifts dh in (-2,-1,1,2), rows 4-7 = col shifts dw.
    """
    cmask = np.zeros((9, HW), np.float32)
    pmask = np.zeros((8, HW), np.float32)
    for h in range(H):
        for w in range(W):
            p = h * W + w
            for j, (dh, dw) in enumerate(OFF3):
                if 0 <= h + dh < H and 0 <= w + dw < W:
                    cmask[j, p] = 1.0
            for i, dh in enumerate(POOL_OFF):
                if not (0 <= h + dh < H):
                    pmask[i, p] = NEG
            for i, dw in enumerate(POOL_OFF):
                if not (0 <= w + dw < W):
                    pmask[4 + i, p] = NEG
    return jnp.asarray(cmask), jnp.asarray(pmask)


def _prep_weights(weights_hwio):
    """(NUM_CONVS,3,3,Cin,Cout) HWIO -> (NUM_CONVS, GROUP_NC, 9*GROUP_NC) merged-tap channel
    mixers, block-diagonal over the GROUP_N images that share the sublanes."""
    w = weights_hwio.reshape(NUM_CONVS, 9, C, C)              # [conv, tap, ci, co]
    w = jnp.transpose(w, (0, 1, 3, 2)).astype(jnp.float32)    # [conv, tap, co, ci]
    eye_n = jnp.eye(GROUP_N, dtype=jnp.float32)
    wbd = jnp.einsum('nm,ktoc->ktnomc', eye_n, w)             # [conv, tap, n, co, m, ci]
    wbd = jnp.transpose(wbd, (0, 2, 3, 1, 4, 5))              # [conv, (n,co), tap, (m,ci)]
    return wbd.reshape(NUM_CONVS, GROUP_NC, 9 * GROUP_NC)


def refine_net_block(x_nchw, weights_hwio):
    """BaseRefineNetBlock forward. x_nchw: (N, C, H, W) float32, N a multiple of GROUP_N."""
    n_imgs = x_nchw.shape[0]
    assert n_imgs % GROUP_N == 0
    num_groups = n_imgs // GROUP_N

    cmask, pmask = _build_masks()
    wmat = _prep_weights(weights_hwio)
    # (N, C, H, W) -> (N*C, H*W): spatial positions on the lane axis.
    x2d = x_nchw.reshape(num_groups * GROUP_NC, HW).astype(jnp.float32)

    out2d = pl.pallas_call(
        _refine_kernel,
        out_shape=jax.ShapeDtypeStruct((num_groups * GROUP_NC, HW), jnp.float32),
        grid_spec=pltpu.PrefetchScalarGridSpec(
            num_scalar_prefetch=0,
            grid=(num_groups,),
            in_specs=[
                pl.BlockSpec((GROUP_NC, HW), lambda g: (g, 0)),                         # x
                pl.BlockSpec((NUM_CONVS, GROUP_NC, 9 * GROUP_NC), lambda g: (0, 0, 0)),  # weights
                pl.BlockSpec((9, HW), lambda g: (0, 0)),                                 # conv masks
                pl.BlockSpec((8, HW), lambda g: (0, 0)),                                 # pool masks
            ],
            out_specs=pl.BlockSpec((GROUP_NC, HW), lambda g: (g, 0)),
            scratch_shapes=[pltpu.VMEM((9 * GROUP_NC, HW), jnp.float32)],                # tap stack
        ),
        compiler_params=pltpu.CompilerParams(
            dimension_semantics=("parallel",),       # independent image groups (v7x 2-TC split)
            vmem_limit_bytes=16 * 1024 * 1024,
        ),
    )(x2d, wmat, cmask, pmask)

    # (N*C, H*W) -> (N, C, H, W)
    return out2d.reshape(n_imgs, C, H, W)


def refine_net_block_ref(x_nchw, weights_hwio):
    """Pure-JAX (XLA) reference used to validate the Pallas kernel."""
    def conv(x, w):
        return lax.conv_general_dilated(
            x, w, (1, 1), ((1, 1), (1, 1)),
            dimension_numbers=('NHWC', 'HWIO', 'NHWC'),
            precision=lax.Precision.HIGHEST)

    def rcu(x, w1, w2):
        out = conv(jax.nn.relu(x), w1)
        out = conv(jax.nn.relu(out), w2)
        return out + x

    def maxpool5(x):
        return lax.reduce_window(x, -jnp.inf, lax.max, (1, 5, 5, 1), (1, 1, 1, 1),
                                 ((0, 0), (2, 2), (2, 2), (0, 0)))

    x = jnp.transpose(x_nchw, (0, 2, 3, 1))
    x = rcu(x, weights_hwio[0], weights_hwio[1])
    x = rcu(x, weights_hwio[2], weights_hwio[3])
    x = jax.nn.relu(x)
    path = x
    for i in range(3):
        path = conv(maxpool5(path), weights_hwio[4 + i])
        x = x + path
    x = rcu(x, weights_hwio[7], weights_hwio[8])
    return jnp.transpose(x, (0, 3, 1, 2))


if __name__ == "__main__":
    key = jax.random.PRNGKey(0)
    kx, kw = jax.random.split(key)
    # PyTorch conv input convention: NCHW
    x = jax.random.normal(kx, (N, C, H, W), dtype=jnp.float32)
    # 9 bias-free 3x3 conv weights (HWIO layout), deterministic init
    weights = jax.random.normal(kw, (NUM_CONVS, 3, 3, C, C),
                                dtype=jnp.float32) * (1.0 / (3.0 * C))

    out = jax.block_until_ready(refine_net_block(x, weights))
    ref = jax.block_until_ready(refine_net_block_ref(x, weights))

    assert out.shape == (N, C, H, W) and out.dtype == jnp.float32
    np.testing.assert_allclose(np.asarray(out), np.asarray(ref), rtol=1e-2, atol=1e-2)
    print("KERNEL_OK")
</pallas_src>

<mosaic_0001>
module attributes {stable_mosaic.version = 11 : i64} {
  func.func @_refine_kernel(%arg0: i32, %arg1: memref<8x256xf32, #tpu.memory_space<vmem>>, %arg2: memref<9x8x72xf32, #tpu.memory_space<vmem>>, %arg3: memref<9x256xf32, #tpu.memory_space<vmem>>, %arg4: memref<8x256xf32, #tpu.memory_space<vmem>>, %arg5: memref<8x256xf32, #tpu.memory_space<vmem>>, %arg6: memref<72x256xf32, #tpu.memory_space<vmem>>) attributes {dimension_semantics = [#tpu.dimension_semantics<parallel>], iteration_bounds = array<i64: 1>, scalar_prefetch = 0 : i64, scratch_operands = 1 : i64, tpu.core_type = #tpu.core_type<tc>, window_params = [{transform_indices = @transform_0, window_bounds = array<i64: 8, 256>}, {pipeline_mode = #tpu.pipeline_mode<synchronous>, transform_indices = @transform_1, window_bounds = array<i64: 9, 8, 72>}, {pipeline_mode = #tpu.pipeline_mode<synchronous>, transform_indices = @transform_2, window_bounds = array<i64: 9, 256>}, {pipeline_mode = #tpu.pipeline_mode<synchronous>, transform_indices = @transform_3, window_bounds = array<i64: 8, 256>}, {transform_indices = @transform_4, window_bounds = array<i64: 8, 256>}]} {
    %c0 = arith.constant 0 : index
    %c0_0 = arith.constant 0 : index
    %0 = vector.load %arg3[%c0, %c0_0] : memref<9x256xf32, #tpu.memory_space<vmem>>, vector<1x256xf32>
    %1 = vector.shape_cast %0 : vector<1x256xf32> to vector<1x256xf32>
    %2 = vector.broadcast %1 : vector<1x256xf32> to vector<8x256xf32>
    %c1 = arith.constant 1 : index
    %c0_1 = arith.constant 0 : index
    %3 = vector.load %arg3[%c1, %c0_1] : memref<9x256xf32, #tpu.memory_space<vmem>>, vector<1x256xf32>
    %4 = vector.shape_cast %3 : vector<1x256xf32> to vector<1x256xf32>
    %5 = vector.broadcast %4 : vector<1x256xf32> to vector<8x256xf32>
    %c2 = arith.constant 2 : index
    %c0_2 = arith.constant 0 : index
    %6 = vector.load %arg3[%c2, %c0_2] : memref<9x256xf32, #tpu.memory_space<vmem>>, vector<1x256xf32>
    %7 = vector.shape_cast %6 : vector<1x256xf32> to vector<1x256xf32>
    %8 = vector.broadcast %7 : vector<1x256xf32> to vector<8x256xf32>
    %c3 = arith.constant 3 : index
    %c0_3 = arith.constant 0 : index
    %9 = vector.load %arg3[%c3, %c0_3] : memref<9x256xf32, #tpu.memory_space<vmem>>, vector<1x256xf32>
    %10 = vector.shape_cast %9 : vector<1x256xf32> to vector<1x256xf32>
    %11 = vector.broadcast %10 : vector<1x256xf32> to vector<8x256xf32>
    %c5 = arith.constant 5 : index
    %c0_4 = arith.constant 0 : index
    %12 = vector.load %arg3[%c5, %c0_4] : memref<9x256xf32, #tpu.memory_space<vmem>>, vector<1x256xf32>
    %13 = vector.shape_cast %12 : vector<1x256xf32> to vector<1x256xf32>
    %14 = vector.broadcast %13 : vector<1x256xf32> to vector<8x256xf32>
    %c6 = arith.constant 6 : index
    %c0_5 = arith.constant 0 : index
    %15 = vector.load %arg3[%c6, %c0_5] : memref<9x256xf32, #tpu.memory_space<vmem>>, vector<1x256xf32>
    %16 = vector.shape_cast %15 : vector<1x256xf32> to vector<1x256xf32>
    %17 = vector.broadcast %16 : vector<1x256xf32> to vector<8x256xf32>
    %c7 = arith.constant 7 : index
    %c0_6 = arith.constant 0 : index
    %18 = vector.load %arg3[%c7, %c0_6] : memref<9x256xf32, #tpu.memory_space<vmem>>, vector<1x256xf32>
    %19 = vector.shape_cast %18 : vector<1x256xf32> to vector<1x256xf32>
    %20 = vector.broadcast %19 : vector<1x256xf32> to vector<8x256xf32>
    %c8 = arith.constant 8 : index
    %c0_7 = arith.constant 0 : index
    %21 = vector.load %arg3[%c8, %c0_7] : memref<9x256xf32, #tpu.memory_space<vmem>>, vector<1x256xf32>
    %22 = vector.shape_cast %21 : vector<1x256xf32> to vector<1x256xf32>
    %23 = vector.broadcast %22 : vector<1x256xf32> to vector<8x256xf32>
    %c0_8 = arith.constant 0 : index
    %c0_9 = arith.constant 0 : index
    %24 = vector.load %arg4[%c0_8, %c0_9] : memref<8x256xf32, #tpu.memory_space<vmem>>, vector<1x256xf32>
    %25 = vector.shape_cast %24 : vector<1x256xf32> to vector<1x256xf32>
    %26 = vector.broadcast %25 : vector<1x256xf32> to vector<8x256xf32>
    %c1_10 = arith.constant 1 : index
    %c0_11 = arith.constant 0 : index
    %27 = vector.load %arg4[%c1_10, %c0_11] : memref<8x256xf32, #tpu.memory_space<vmem>>, vector<1x256xf32>
    %28 = vector.shape_cast %27 : vector<1x256xf32> to vector<1x256xf32>
    %29 = vector.broadcast %28 : vector<1x256xf32> to vector<8x256xf32>
    %c2_12 = arith.constant 2 : index
    %c0_13 = arith.constant 0 : index
    %30 = vector.load %arg4[%c2_12, %c0_13] : memref<8x256xf32, #tpu.memory_space<vmem>>, vector<1x256xf32>
    %31 = vector.shape_cast %30 : vector<1x256xf32> to vector<1x256xf32>
    %32 = vector.broadcast %31 : vector<1x256xf32> to vector<8x256xf32>
    %c3_14 = arith.constant 3 : index
    %c0_15 = arith.constant 0 : index
    %33 = vector.load %arg4[%c3_14, %c0_15] : memref<8x256xf32, #tpu.memory_space<vmem>>, vector<1x256xf32>
    %34 = vector.shape_cast %33 : vector<1x256xf32> to vector<1x256xf32>
    %35 = vector.broadcast %34 : vector<1x256xf32> to vector<8x256xf32>
    %c4 = arith.constant 4 : index
    %c0_16 = arith.constant 0 : index
    %36 = vector.load %arg4[%c4, %c0_16] : memref<8x256xf32, #tpu.memory_space<vmem>>, vector<1x256xf32>
    %37 = vector.shape_cast %36 : vector<1x256xf32> to vector<1x256xf32>
    %38 = vector.broadcast %37 : vector<1x256xf32> to vector<8x256xf32>
    %c5_17 = arith.constant 5 : index
    %c0_18 = arith.constant 0 : index
    %39 = vector.load %arg4[%c5_17, %c0_18] : memref<8x256xf32, #tpu.memory_space<vmem>>, vector<1x256xf32>
    %40 = vector.shape_cast %39 : vector<1x256xf32> to vector<1x256xf32>
    %41 = vector.broadcast %40 : vector<1x256xf32> to vector<8x256xf32>
    %c6_19 = arith.constant 6 : index
    %c0_20 = arith.constant 0 : index
    %42 = vector.load %arg4[%c6_19, %c0_20] : memref<8x256xf32, #tpu.memory_space<vmem>>, vector<1x256xf32>
    %43 = vector.shape_cast %42 : vector<1x256xf32> to vector<1x256xf32>
    %44 = vector.broadcast %43 : vector<1x256xf32> to vector<8x256xf32>
    %c7_21 = arith.constant 7 : index
    %c0_22 = arith.constant 0 : index
    %45 = vector.load %arg4[%c7_21, %c0_22] : memref<8x256xf32, #tpu.memory_space<vmem>>, vector<1x256xf32>
    %46 = vector.shape_cast %45 : vector<1x256xf32> to vector<1x256xf32>
    %47 = vector.broadcast %46 : vector<1x256xf32> to vector<8x256xf32>
    %c0_23 = arith.constant 0 : index
    %c0_24 = arith.constant 0 : index
    %48 = vector.load %arg1[%c0_23, %c0_24] : memref<8x256xf32, #tpu.memory_space<vmem>>, vector<8x256xf32>
    %cst = arith.constant 0.000000e+00 : f32
    %49 = vector.broadcast %cst : f32 to vector<8x256xf32>
    %50 = arith.maximumf %48, %49 : vector<8x256xf32>
    %c17_i32 = arith.constant 17 : i32
    %51 = tpu.dynamic_rotate %50 by %c17_i32 dim 1 : vector<8x256xf32>, i32 -> vector<8x256xf32>
    %52 = arith.mulf %51, %2 : vector<8x256xf32>
    %c0_25 = arith.constant 0 : index
    %c0_26 = arith.constant 0 : index
    %53 = vector.load %arg6[%c0_25, %c0_26] : memref<72x256xf32, #tpu.memory_space<vmem>>, vector<8x256xf32>
    tpu.vector_store %arg6[%c0_25, %c0_26], %52 {strides = array<i32>} : memref<72x256xf32, #tpu.memory_space<vmem>>, vector<8x256xf32>,
    %c16_i32 = arith.constant 16 : i32
    %54 = tpu.dynamic_rotate %50 by %c16_i32 dim 1 : vector<8x256xf32>, i32 -> vector<8x256xf32>
    %55 = arith.mulf %54, %5 : vector<8x256xf32>
    %c8_27 = arith.constant 8 : index
    %c0_28 = arith.constant 0 : index
    %56 = vector.load %arg6[%c8_27, %c0_28] : memref<72x256xf32, #tpu.memory_space<vmem>>, vector<8x256xf32>
    tpu.vector_store %arg6[%c8_27, %c0_28], %55 {strides = array<i32>} : memref<72x256xf32, #tpu.memory_space<vmem>>, vector<8x256xf32>,
    %c15_i32 = arith.constant 15 : i32
    %57 = tpu.dynamic_rotate %50 by %c15_i32 dim 1 : vector<8x256xf32>, i32 -> vector<8x256xf32>
    %58 = arith.mulf %57, %8 : vector<8x256xf32>
    %c16 = arith.constant 16 : index
    %c0_29 = arith.constant 0 : index
    %59 = vector.load %arg6[%c16, %c0_29] : memref<72x256xf32, #tpu.memory_space<vmem>>, vector<8x256xf32>
    tpu.vector_store %arg6[%c16, %c0_29], %58 {strides = array<i32>} : memref<72x256xf32, #tpu.memory_space<vmem>>, vector<8x256xf32>,
    %c1_i32 = arith.constant 1 : i32
    %60 = tpu.dynamic_rotate %50 by %c1_i32 dim 1 : vector<8x256xf32>, i32 -> vector<8x256xf32>
    %61 = arith.mulf %60, %11 : vector<8x256xf32>
    %c24 = arith.constant 24 : index
    %c0_30 = arith.constant 0 : index
    %62 = vector.load %arg6[%c24, %c0_30] : memref<72x256xf32, #tpu.memory_space<vmem>>, vector<8x256xf32>
    tpu.vector_store %arg6[%c24, %c0_30], %61 {strides = array<i32>} : memref<72x256xf32, #tpu.memory_space<vmem>>, vector<8x256xf32>,
    %c32 = arith.constant 32 : index
    %c0_31 = arith.constant 0 : index
    %63 = vector.load %arg6[%c32, %c0_31] : memref<72x256xf32, #tpu.memory_space<vmem>>, vector<8x256xf32>
    tpu.vector_store %arg6[%c32, %c0_31], %50 {strides = array<i32>} : memref<72x256xf32, #tpu.memory_space<vmem>>, vector<8x256xf32>,
    %c255_i32 = arith.constant 255 : i32
    %64 = tpu.dynamic_rotate %50 by %c255_i32 dim 1 : vector<8x256xf32>, i32 -> vector<8x256xf32>
    %65 = arith.mulf %64, %14 : vector<8x256xf32>
    %c40 = arith.constant 40 : index
    %c0_32 = arith.constant 0 : index
    %66 = vector.load %arg6[%c40, %c0_32] : memref<72x256xf32, #tpu.memory_space<vmem>>, vector<8x256xf32>
    tpu.vector_store %arg6[%c40, %c0_32], %65 {strides = array<i32>} : memref<72x256xf32, #tpu.memory_space<vmem>>, vector<8x256xf32>,
    %c241_i32 = arith.constant 241 : i32
    %67 = tpu.dynamic_rotate %50 by %c241_i32 dim 1 : vector<8x256xf32>, i32 -> vector<8x256xf32>
    %68 = arith.mulf %67, %17 : vector<8x256xf32>
    %c48 = arith.constant 48 : index
    %c0_33 = arith.constant 0 : index
    %69 = vector.load %arg6[%c48, %c0_33] : memref<72x256xf32, #tpu.memory_space<vmem>>, vector<8x256xf32>
    tpu.vector_store %arg6[%c48, %c0_33], %68 {strides = array<i32>} : memref<72x256xf32, #tpu.memory_space<vmem>>, vector<8x256xf32>,
    %c240_i32 = arith.constant 240 : i32
    %70 = tpu.dynamic_rotate %50 by %c240_i32 dim 1 : vector<8x256xf32>, i32 -> vector<8x256xf32>
    %71 = arith.mulf %70, %20 : vector<8x256xf32>
    %c56 = arith.constant 56 : index
    %c0_34 = arith.constant 0 : index
    %72 = vector.load %arg6[%c56, %c0_34] : memref<72x256xf32, #tpu.memory_space<vmem>>, vector<8x256xf32>
    tpu.vector_store %arg6[%c56, %c0_34], %71 {strides = array<i32>} : memref<72x256xf32, #tpu.memory_space<vmem>>, vector<8x256xf32>,
    %c239_i32 = arith.constant 239 : i32
    %73 = tpu.dynamic_rotate %50 by %c239_i32 dim 1 : vector<8x256xf32>, i32 -> vector<8x256xf32>
    %74 = arith.mulf %73, %23 : vector<8x256xf32>
    %c64 = arith.constant 64 : index
    %c0_35 = arith.constant 0 : index
    %75 = vector.load %arg6[%c64, %c0_35] : memref<72x256xf32, #tpu.memory_space<vmem>>, vector<8x256xf32>
    tpu.vector_store %arg6[%c64, %c0_35], %74 {strides = array<i32>} : memref<72x256xf32, #tpu.memory_space<vmem>>, vector<8x256xf32>,
    %c0_36 = arith.constant 0 : index
    %c0_37 = arith.constant 0 : index
    %c0_38 = arith.constant 0 : index
    %76 = vector.load %arg2[%c0_36, %c0_37, %c0_38] : memref<9x8x72xf32, #tpu.memory_space<vmem>>, vector<1x8x72xf32>
    %77 = vector.shape_cast %76 : vector<1x8x72xf32> to vector<8x72xf32>
    %c0_39 = arith.constant 0 : index
    %c0_40 = arith.constant 0 : index
    %78 = vector.load %arg6[%c0_39, %c0_40] : memref<72x256xf32, #tpu.memory_space<vmem>>, vector<72x256xf32>
    %cst_41 = arith.constant dense<0.000000e+00> : vector<8x256xf32>
    %79 = tpu.matmul %77, %78, %cst_41 {dimension_numbers = #tpu.dot_dimension_numbers<[1], [0], [0], [1], [0, 0, 1, 1], [], []>} : vector<8x72xf32>, vector<72x256xf32>, vector<8x256xf32> -> vector<8x256xf32>
    %cst_42 = arith.constant 0.000000e+00 : f32
    %80 = vector.broadcast %cst_42 : f32 to vector<8x256xf32>
    %81 = arith.maximumf %79, %80 : vector<8x256xf32>
    %c17_i32_43 = arith.constant 17 : i32
    %82 = tpu.dynamic_rotate %81 by %c17_i32_43 dim 1 : vector<8x256xf32>, i32 -> vector<8x256xf32>
    %83 = arith.mulf %82, %2 : vector<8x256xf32>
    %c0_44 = arith.constant 0 : index
    %c0_45 = arith.constant 0 : index
    %84 = vector.load %arg6[%c0_44, %c0_45] : memref<72x256xf32, #tpu.memory_space<vmem>>, vector<8x256xf32>
    tpu.vector_store %arg6[%c0_44, %c0_45], %83 {strides = array<i32>} : memref<72x256xf32, #tpu.memory_space<vmem>>, vector<8x256xf32>,
    %c16_i32_46 = arith.constant 16 : i32
    %85 = tpu.dynamic_rotate %81 by %c16_i32_46 dim 1 : vector<8x256xf32>, i32 -> vector<8x256xf32>
    %86 = arith.mulf %85, %5 : vector<8x256xf32>
    %c8_47 = arith.constant 8 : index
    %c0_48 = arith.constant 0 : index
    %87 = vector.load %arg6[%c8_47, %c0_48] : memref<72x256xf32, #tpu.memory_space<vmem>>, vector<8x256xf32>
    tpu.vector_store %arg6[%c8_47, %c0_48], %86 {strides = array<i32>} : memref<72x256xf32, #tpu.memory_space<vmem>>, vector<8x256xf32>,
    %c15_i32_49 = arith.constant 15 : i32
    %88 = tpu.dynamic_rotate %81 by %c15_i32_49 dim 1 : vector<8x256xf32>, i32 -> vector<8x256xf32>
    %89 = arith.mulf %88, %8 : vector<8x256xf32>
    %c16_50 = arith.constant 16 : index
    %c0_51 = arith.constant 0 : index
    %90 = vector.load %arg6[%c16_50, %c0_51] : memref<72x256xf32, #tpu.memory_space<vmem>>, vector<8x256xf32>
    tpu.vector_store %arg6[%c16_50, %c0_51], %89 {strides = array<i32>} : memref<72x256xf32, #tpu.memory_space<vmem>>, vector<8x256xf32>,
    %c1_i32_52 = arith.constant 1 : i32
    %91 = tpu.dynamic_rotate %81 by %c1_i32_52 dim 1 : vector<8x256xf32>, i32 -> vector<8x256xf32>
    %92 = arith.mulf %91, %11 : vector<8x256xf32>
    %c24_53 = arith.constant 24 : index
    %c0_54 = arith.constant 0 : index
    %93 = vector.load %arg6[%c24_53, %c0_54] : memref<72x256xf32, #tpu.memory_space<vmem>>, vector<8x256xf32>
    tpu.vector_store %arg6[%c24_53, %c0_54], %92 {strides = array<i32>} : memref<72x256xf32, #tpu.memory_space<vmem>>, vector<8x256xf32>,
    %c32_55 = arith.constant 32 : index
    %c0_56 = arith.constant 0 : index
    %94 = vector.load %arg6[%c32_55, %c0_56] : memref<72x256xf32, #tpu.memory_space<vmem>>, vector<8x256xf32>
    tpu.vector_store %arg6[%c32_55, %c0_56], %81 {strides = array<i32>} : memref<72x256xf32, #tpu.memory_space<vmem>>, vector<8x256xf32>,
    %c255_i32_57 = arith.constant 255 : i32
    %95 = tpu.dynamic_rotate %81 by %c255_i32_57 dim 1 : vector<8x256xf32>, i32 -> vector<8x256xf32>
    %96 = arith.mulf %95, %14 : vector<8x256xf32>
    %c40_58 = arith.constant 40 : index
    %c0_59 = arith.constant 0 : index
    %97 = vector.load %arg6[%c40_58, %c0_59] : memref<72x256xf32, #tpu.memory_space<vmem>>, vector<8x256xf32>
    tpu.vector_store %arg6[%c40_58, %c0_59], %96 {strides = array<i32>} : memref<72x256xf32, #tpu.memory_space<vmem>>, vector<8x256xf32>,
    %c241_i32_60 = arith.constant 241 : i32
    %98 = tpu.dynamic_rotate %81 by %c241_i32_60 dim 1 : vector<8x256xf32>, i32 -> vector<8x256xf32>
    %99 = arith.mulf %98, %17 : vector<8x256xf32>
    %c48_61 = arith.constant 48 : index
    %c0_62 = arith.constant 0 : index
    %100 = vector.load %arg6[%c48_61, %c0_62] : memref<72x256xf32, #tpu.memory_space<vmem>>, vector<8x256xf32>
    tpu.vector_store %arg6[%c48_61, %c0_62], %99 {strides = array<i32>} : memref<72x256xf32, #tpu.memory_space<vmem>>, vector<8x256xf32>,
    %c240_i32_63 = arith.constant 240 : i32
    %101 = tpu.dynamic_rotate %81 by %c240_i32_63 dim 1 : vector<8x256xf32>, i32 -> vector<8x256xf32>
    %102 = arith.mulf %101, %20 : vector<8x256xf32>
    %c56_64 = arith.constant 56 : index
    %c0_65 = arith.constant 0 : index
    %103 = vector.load %arg6[%c56_64, %c0_65] : memref<72x256xf32, #tpu.memory_space<vmem>>, vector<8x256xf32>
    tpu.vector_store %arg6[%c56_64, %c0_65], %102 {strides = array<i32>} : memref<72x256xf32, #tpu.memory_space<vmem>>, vector<8x256xf32>,
    %c239_i32_66 = arith.constant 239 : i32
    %104 = tpu.dynamic_rotate %81 by %c239_i32_66 dim 1 : vector<8x256xf32>, i32 -> vector<8x256xf32>
    %105 = arith.mulf %104, %23 : vector<8x256xf32>
    %c64_67 = arith.constant 64 : index
    %c0_68 = arith.constant 0 : index
    %106 = vector.load %arg6[%c64_67, %c0_68] : memref<72x256xf32, #tpu.memory_space<vmem>>, vector<8x256xf32>
    tpu.vector_store %arg6[%c64_67, %c0_68], %105 {strides = array<i32>} : memref<72x256xf32, #tpu.memory_space<vmem>>, vector<8x256xf32>,
    %c1_69 = arith.constant 1 : index
    %c0_70 = arith.constant 0 : index
    %c0_71 = arith.constant 0 : index
    %107 = vector.load %arg2[%c1_69, %c0_70, %c0_71] : memref<9x8x72xf32, #tpu.memory_space<vmem>>, vector<1x8x72xf32>
    %108 = vector.shape_cast %107 : vector<1x8x72xf32> to vector<8x72xf32>
    %c0_72 = arith.constant 0 : index
    %c0_73 = arith.constant 0 : index
    %109 = vector.load %arg6[%c0_72, %c0_73] : memref<72x256xf32, #tpu.memory_space<vmem>>, vector<72x256xf32>
    %cst_74 = arith.constant dense<0.000000e+00> : vector<8x256xf32>
    %110 = tpu.matmul %108, %109, %cst_74 {dimension_numbers = #tpu.dot_dimension_numbers<[1], [0], [0], [1], [0, 0, 1, 1], [], []>} : vector<8x72xf32>, vector<72x256xf32>, vector<8x256xf32> -> vector<8x256xf32>
    %111 = arith.addf %110, %48 : vector<8x256xf32>
    %cst_75 = arith.constant 0.000000e+00 : f32
    %112 = vector.broadcast %cst_75 : f32 to vector<8x256xf32>
    %113 = arith.maximumf %111, %112 : vector<8x256xf32>
    %c17_i32_76 = arith.constant 17 : i32
    %114 = tpu.dynamic_rotate %113 by %c17_i32_76 dim 1 : vector<8x256xf32>, i32 -> vector<8x256xf32>
    %115 = arith.mulf %114, %2 : vector<8x256xf32>
    %c0_77 = arith.constant 0 : index
    %c0_78 = arith.constant 0 : index
    %116 = vector.load %arg6[%c0_77, %c0_78] : memref<72x256xf32, #tpu.memory_space<vmem>>, vector<8x256xf32>
    tpu.vector_store %arg6[%c0_77, %c0_78], %115 {strides = array<i32>} : memref<72x256xf32, #tpu.memory_space<vmem>>, vector<8x256xf32>,
    %c16_i32_79 = arith.constant 16 : i32
    %117 = tpu.dynamic_rotate %113 by %c16_i32_79 dim 1 : vector<8x256xf32>, i32 -> vector<8x256xf32>
    %118 = arith.mulf %117, %5 : vector<8x256xf32>
    %c8_80 = arith.constant 8 : index
    %c0_81 = arith.constant 0 : index
    %119 = vector.load %arg6[%c8_80, %c0_81] : memref<72x256xf32, #tpu.memory_space<vmem>>, vector<8x256xf32>
    tpu.vector_store %arg6[%c8_80, %c0_81], %118 {strides = array<i32>} : memref<72x256xf32, #tpu.memory_space<vmem>>, vector<8x256xf32>,
    %c15_i32_82 = arith.constant 15 : i32
    %120 = tpu.dynamic_rotate %113 by %c15_i32_82 dim 1 : vector<8x256xf32>, i32 -> vector<8x256xf32>
    %121 = arith.mulf %120, %8 : vector<8x256xf32>
    %c16_83 = arith.constant 16 : index
    %c0_84 = arith.constant 0 : index
    %122 = vector.load %arg6[%c16_83, %c0_84] : memref<72x256xf32, #tpu.memory_space<vmem>>, vector<8x256xf32>
    tpu.vector_store %arg6[%c16_83, %c0_84], %121 {strides = array<i32>} : memref<72x256xf32, #tpu.memory_space<vmem>>, vector<8x256xf32>,
    %c1_i32_85 = arith.constant 1 : i32
    %123 = tpu.dynamic_rotate %113 by %c1_i32_85 dim 1 : vector<8x256xf32>, i32 -> vector<8x256xf32>
    %124 = arith.mulf %123, %11 : vector<8x256xf32>
    %c24_86 = arith.constant 24 : index
    %c0_87 = arith.constant 0 : index
    %125 = vector.load %arg6[%c24_86, %c0_87] : memref<72x256xf32, #tpu.memory_space<vmem>>, vector<8x256xf32>
    tpu.vector_store %arg6[%c24_86, %c0_87], %124 {strides = array<i32>} : memref<72x256xf32, #tpu.memory_space<vmem>>, vector<8x256xf32>,
    %c32_88 = arith.constant 32 : index
    %c0_89 = arith.constant 0 : index
    %126 = vector.load %arg6[%c32_88, %c0_89] : memref<72x256xf32, #tpu.memory_space<vmem>>, vector<8x256xf32>
    tpu.vector_store %arg6[%c32_88, %c0_89], %113 {strides = array<i32>} : memref<72x256xf32, #tpu.memory_space<vmem>>, vector<8x256xf32>,
    %c255_i32_90 = arith.constant 255 : i32
    %127 = tpu.dynamic_rotate %113 by %c255_i32_90 dim 1 : vector<8x256xf32>, i32 -> vector<8x256xf32>
    %128 = arith.mulf %127, %14 : vector<8x256xf32>
    %c40_91 = arith.constant 40 : index
    %c0_92 = arith.constant 0 : index
    %129 = vector.load %arg6[%c40_91, %c0_92] : memref<72x256xf32, #tpu.memory_space<vmem>>, vector<8x256xf32>
    tpu.vector_store %arg6[%c40_91, %c0_92], %128 {strides = array<i32>} : memref<72x256xf32, #tpu.memory_space<vmem>>, vector<8x256xf32>,
    %c241_i32_93 = arith.constant 241 : i32
    %130 = tpu.dynamic_rotate %113 by %c241_i32_93 dim 1 : vector<8x256xf32>, i32 -> vector<8x256xf32>
    %131 = arith.mulf %130, %17 : vector<8x256xf32>
    %c48_94 = arith.constant 48 : index
    %c0_95 = arith.constant 0 : index
    %132 = vector.load %arg6[%c48_94, %c0_95] : memref<72x256xf32, #tpu.memory_space<vmem>>, vector<8x256xf32>
    tpu.vector_store %arg6[%c48_94, %c0_95], %131 {strides = array<i32>} : memref<72x256xf32, #tpu.memory_space<vmem>>, vector<8x256xf32>,
    %c240_i32_96 = arith.constant 240 : i32
    %133 = tpu.dynamic_rotate %113 by %c240_i32_96 dim 1 : vector<8x256xf32>, i32 -> vector<8x256xf32>
    %134 = arith.mulf %133, %20 : vector<8x256xf32>
    %c56_97 = arith.constant 56 : index
    %c0_98 = arith.constant 0 : index
    %135 = vector.load %arg6[%c56_97, %c0_98] : memref<72x256xf32, #tpu.memory_space<vmem>>, vector<8x256xf32>
    tpu.vector_store %arg6[%c56_97, %c0_98], %134 {strides = array<i32>} : memref<72x256xf32, #tpu.memory_space<vmem>>, vector<8x256xf32>,
    %c239_i32_99 = arith.constant 239 : i32
    %136 = tpu.dynamic_rotate %113 by %c239_i32_99 dim 1 : vector<8x256xf32>, i32 -> vector<8x256xf32>
    %137 = arith.mulf %136, %23 : vector<8x256xf32>
    %c64_100 = arith.constant 64 : index
    %c0_101 = arith.constant 0 : index
    %138 = vector.load %arg6[%c64_100, %c0_101] : memref<72x256xf32, #tpu.memory_space<vmem>>, vector<8x256xf32>
    tpu.vector_store %arg6[%c64_100, %c0_101], %137 {strides = array<i32>} : memref<72x256xf32, #tpu.memory_space<vmem>>, vector<8x256xf32>,
    %c2_102 = arith.constant 2 : index
    %c0_103 = arith.constant 0 : index
    %c0_104 = arith.constant 0 : index
    %139 = vector.load %arg2[%c2_102, %c0_103, %c0_104] : memref<9x8x72xf32, #tpu.memory_space<vmem>>, vector<1x8x72xf32>
    %140 = vector.shape_cast %139 : vector<1x8x72xf32> to vector<8x72xf32>
    %c0_105 = arith.constant 0 : index
    %c0_106 = arith.constant 0 : index
    %141 = vector.load %arg6[%c0_105, %c0_106] : memref<72x256xf32, #tpu.memory_space<vmem>>, vector<72x256xf32>
    %cst_107 = arith.constant dense<0.000000e+00> : vector<8x256xf32>
    %142 = tpu.matmul %140, %141, %cst_107 {dimension_numbers = #tpu.dot_dimension_numbers<[1], [0], [0], [1], [0, 0, 1, 1], [], []>} : vector<8x72xf32>, vector<72x256xf32>, vector<8x256xf32> -> vector<8x256xf32>
    %cst_108 = arith.constant 0.000000e+00 : f32
    %143 = vector.broadcast %cst_108 : f32 to vector<8x256xf32>
    %144 = arith.maximumf %142, %143 : vector<8x256xf32>
    %c17_i32_109 = arith.constant 17 : i32
    %145 = tpu.dynamic_rotate %144 by %c17_i32_109 dim 1 : vector<8x256xf32>, i32 -> vector<8x256xf32>
    %146 = arith.mulf %145, %2 : vector<8x256xf32>
    %c0_110 = arith.constant 0 : index
    %c0_111 = arith.constant 0 : index
    %147 = vector.load %arg6[%c0_110, %c0_111] : memref<72x256xf32, #tpu.memory_space<vmem>>, vector<8x256xf32>
    tpu.vector_store %arg6[%c0_110, %c0_111], %146 {strides = array<i32>} : memref<72x256xf32, #tpu.memory_space<vmem>>, vector<8x256xf32>,
    %c16_i32_112 = arith.constant 16 : i32
    %148 = tpu.dynamic_rotate %144 by %c16_i32_112 dim 1 : vector<8x256xf32>, i32 -> vector<8x256xf32>
    %149 = arith.mulf %148, %5 : vector<8x256xf32>
    %c8_113 = arith.constant 8 : index
    %c0_114 = arith.constant 0 : index
    %150 = vector.load %arg6[%c8_113, %c0_114] : memref<72x256xf32, #tpu.memory_space<vmem>>, vector<8x256xf32>
    tpu.vector_store %arg6[%c8_113, %c0_114], %149 {strides = array<i32>} : memref<72x256xf32, #tpu.memory_space<vmem>>, vector<8x256xf32>,
    %c15_i32_115 = arith.constant 15 : i32
    %151 = tpu.dynamic_rotate %144 by %c15_i32_115 dim 1 : vector<8x256xf32>, i32 -> vector<8x256xf32>
    %152 = arith.mulf %151, %8 : vector<8x256xf32>
    %c16_116 = arith.constant 16 : index
    %c0_117 = arith.constant 0 : index
    %153 = vector.load %arg6[%c16_116, %c0_117] : memref<72x256xf32, #tpu.memory_space<vmem>>, vector<8x256xf32>
    tpu.vector_store %arg6[%c16_116, %c0_117], %152 {strides = array<i32>} : memref<72x256xf32, #tpu.memory_space<vmem>>, vector<8x256xf32>,
    %c1_i32_118 = arith.constant 1 : i32
    %154 = tpu.dynamic_rotate %144 by %c1_i32_118 dim 1 : vector<8x256xf32>, i32 -> vector<8x256xf32>
    %155 = arith.mulf %154, %11 : vector<8x256xf32>
    %c24_119 = arith.constant 24 : index
    %c0_120 = arith.constant 0 : index
    %156 = vector.load %arg6[%c24_119, %c0_120] : memref<72x256xf32, #tpu.memory_space<vmem>>, vector<8x256xf32>
    tpu.vector_store %arg6[%c24_119, %c0_120], %155 {strides = array<i32>} : memref<72x256xf32, #tpu.memory_space<vmem>>, vector<8x256xf32>,
    %c32_121 = arith.constant 32 : index
    %c0_122 = arith.constant 0 : index
    %157 = vector.load %arg6[%c32_121, %c0_122] : memref<72x256xf32, #tpu.memory_space<vmem>>, vector<8x256xf32>
    tpu.vector_store %arg6[%c32_121, %c0_122], %144 {strides = array<i32>} : memref<72x256xf32, #tpu.memory_space<vmem>>, vector<8x256xf32>,
    %c255_i32_123 = arith.constant 255 : i32
    %158 = tpu.dynamic_rotate %144 by %c255_i32_123 dim 1 : vector<8x256xf32>, i32 -> vector<8x256xf32>
    %159 = arith.mulf %158, %14 : vector<8x256xf32>
    %c40_124 = arith.constant 40 : index
    %c0_125 = arith.constant 0 : index
    %160 = vector.load %arg6[%c40_124, %c0_125] : memref<72x256xf32, #tpu.memory_space<vmem>>, vector<8x256xf32>
    tpu.vector_store %arg6[%c40_124, %c0_125], %159 {strides = array<i32>} : memref<72x256xf32, #tpu.memory_space<vmem>>, vector<8x256xf32>,
    %c241_i32_126 = arith.constant 241 : i32
    %161 = tpu.dynamic_rotate %144 by %c241_i32_126 dim 1 : vector<8x256xf32>, i32 -> vector<8x256xf32>
    %162 = arith.mulf %161, %17 : vector<8x256xf32>
    %c48_127 = arith.constant 48 : index
    %c0_128 = arith.constant 0 : index
    %163 = vector.load %arg6[%c48_127, %c0_128] : memref<72x256xf32, #tpu.memory_space<vmem>>, vector<8x256xf32>
    tpu.vector_store %arg6[%c48_127, %c0_128], %162 {strides = array<i32>} : memref<72x256xf32, #tpu.memory_space<vmem>>, vector<8x256xf32>,
    %c240_i32_129 = arith.constant 240 : i32
    %164 = tpu.dynamic_rotate %144 by %c240_i32_129 dim 1 : vector<8x256xf32>, i32 -> vector<8x256xf32>
    %165 = arith.mulf %164, %20 : vector<8x256xf32>
    %c56_130 = arith.constant 56 : index
    %c0_131 = arith.constant 0 : index
    %166 = vector.load %arg6[%c56_130, %c0_131] : memref<72x256xf32, #tpu.memory_space<vmem>>, vector<8x256xf32>
    tpu.vector_store %arg6[%c56_130, %c0_131], %165 {strides = array<i32>} : memref<72x256xf32, #tpu.memory_space<vmem>>, vector<8x256xf32>,
    %c239_i32_132 = arith.constant 239 : i32
    %167 = tpu.dynamic_rotate %144 by %c239_i32_132 dim 1 : vector<8x256xf32>, i32 -> vector<8x256xf32>
    %168 = arith.mulf %167, %23 : vector<8x256xf32>
    %c64_133 = arith.constant 64 : index
    %c0_134 = arith.constant 0 : index
    %169 = vector.load %arg6[%c64_133, %c0_134] : memref<72x256xf32, #tpu.memory_space<vmem>>, vector<8x256xf32>
    tpu.vector_store %arg6[%c64_133, %c0_134], %168 {strides = array<i32>} : memref<72x256xf32, #tpu.memory_space<vmem>>, vector<8x256xf32>,
    %c3_135 = arith.constant 3 : index
    %c0_136 = arith.constant 0 : index
    %c0_137 = arith.constant 0 : index
    %170 = vector.load %arg2[%c3_135, %c0_136, %c0_137] : memref<9x8x72xf32, #tpu.memory_space<vmem>>, vector<1x8x72xf32>
    %171 = vector.shape_cast %170 : vector<1x8x72xf32> to vector<8x72xf32>
    %c0_138 = arith.constant 0 : index
    %c0_139 = arith.constant 0 : index
    %172 = vector.load %arg6[%c0_138, %c0_139] : memref<72x256xf32, #tpu.memory_space<vmem>>, vector<72x256xf32>
    %cst_140 = arith.constant dense<0.000000e+00> : vector<8x256xf32>
    %173 = tpu.matmul %171, %172, %cst_140 {dimension_numbers = #tpu.dot_dimension_numbers<[1], [0], [0], [1], [0, 0, 1, 1], [], []>} : vector<8x72xf32>, vector<72x256xf32>, vector<8x256xf32> -> vector<8x256xf32>
    %174 = arith.addf %173, %111 : vector<8x256xf32>
    %cst_141 = arith.constant 0.000000e+00 : f32
    %175 = vector.broadcast %cst_141 : f32 to vector<8x256xf32>
    %176 = arith.maximumf %174, %175 : vector<8x256xf32>
    %c32_i32 = arith.constant 32 : i32
    %177 = tpu.dynamic_rotate %176 by %c32_i32 dim 1 : vector<8x256xf32>, i32 -> vector<8x256xf32>
    %178 = arith.addf %177, %26 : vector<8x256xf32>
    %179 = arith.maximumf %176, %178 : vector<8x256xf32>
    %c16_i32_142 = arith.constant 16 : i32
    %180 = tpu.dynamic_rotate %176 by %c16_i32_142 dim 1 : vector<8x256xf32>, i32 -> vector<8x256xf32>
    %181 = arith.addf %180, %29 : vector<8x256xf32>
    %182 = arith.maximumf %179, %181 : vector<8x256xf32>
    %c240_i32_143 = arith.constant 240 : i32
    %183 = tpu.dynamic_rotate %176 by %c240_i32_143 dim 1 : vector<8x256xf32>, i32 -> vector<8x256xf32>
    %184 = arith.addf %183, %32 : vector<8x256xf32>
    %185 = arith.maximumf %182, %184 : vector<8x256xf32>
    %c224_i32 = arith.constant 224 : i32
    %186 = tpu.dynamic_rotate %176 by %c224_i32 dim 1 : vector<8x256xf32>, i32 -> vector<8x256xf32>
    %187 = arith.addf %186, %35 : vector<8x256xf32>
    %188 = arith.maximumf %185, %187 : vector<8x256xf32>
    %c2_i32 = arith.constant 2 : i32
    %189 = tpu.dynamic_rotate %188 by %c2_i32 dim 1 : vector<8x256xf32>, i32 -> vector<8x256xf32>
    %190 = arith.addf %189, %38 : vector<8x256xf32>
    %191 = arith.maximumf %188, %190 : vector<8x256xf32>
    %c1_i32_144 = arith.constant 1 : i32
    %192 = tpu.dynamic_rotate %188 by %c1_i32_144 dim 1 : vector<8x256xf32>, i32 -> vector<8x256xf32>
    %193 = arith.addf %192, %41 : vector<8x256xf32>
    %194 = arith.maximumf %191, %193 : vector<8x256xf32>
    %c255_i32_145 = arith.constant 255 : i32
    %195 = tpu.dynamic_rotate %188 by %c255_i32_145 dim 1 : vector<8x256xf32>, i32 -> vector<8x256xf32>
    %196 = arith.addf %195, %44 : vector<8x256xf32>
    %197 = arith.maximumf %194, %196 : vector<8x256xf32>
    %c254_i32 = arith.constant 254 : i32
    %198 = tpu.dynamic_rotate %188 by %c254_i32 dim 1 : vector<8x256xf32>, i32 -> vector<8x256xf32>
    %199 = arith.addf %198, %47 : vector<8x256xf32>
    %200 = arith.maximumf %197, %199 : vector<8x256xf32>
    %c17_i32_146 = arith.constant 17 : i32
    %201 = tpu.dynamic_rotate %200 by %c17_i32_146 dim 1 : vector<8x256xf32>, i32 -> vector<8x256xf32>
    %202 = arith.mulf %201, %2 : vector<8x256xf32>
    %c0_147 = arith.constant 0 : index
    %c0_148 = arith.constant 0 : index
    %203 = vector.load %arg6[%c0_147, %c0_148] : memref<72x256xf32, #tpu.memory_space<vmem>>, vector<8x256xf32>
    tpu.vector_store %arg6[%c0_147, %c0_148], %202 {strides = array<i32>} : memref<72x256xf32, #tpu.memory_space<vmem>>, vector<8x256xf32>,
    %c16_i32_149 = arith.constant 16 : i32
    %204 = tpu.dynamic_rotate %200 by %c16_i32_149 dim 1 : vector<8x256xf32>, i32 -> vector<8x256xf32>
    %205 = arith.mulf %204, %5 : vector<8x256xf32>
    %c8_150 = arith.constant 8 : index
    %c0_151 = arith.constant 0 : index
    %206 = vector.load %arg6[%c8_150, %c0_151] : memref<72x256xf32, #tpu.memory_space<vmem>>, vector<8x256xf32>
    tpu.vector_store %arg6[%c8_150, %c0_151], %205 {strides = array<i32>} : memref<72x256xf32, #tpu.memory_space<vmem>>, vector<8x256xf32>,
    %c15_i32_152 = arith.constant 15 : i32
    %207 = tpu.dynamic_rotate %200 by %c15_i32_152 dim 1 : vector<8x256xf32>, i32 -> vector<8x256xf32>
    %208 = arith.mulf %207, %8 : vector<8x256xf32>
    %c16_153 = arith.constant 16 : index
    %c0_154 = arith.constant 0 : index
    %209 = vector.load %arg6[%c16_153, %c0_154] : memref<72x256xf32, #tpu.memory_space<vmem>>, vector<8x256xf32>
    tpu.vector_store %arg6[%c16_153, %c0_154], %208 {strides = array<i32>} : memref<72x256xf32, #tpu.memory_space<vmem>>, vector<8x256xf32>,
    %c1_i32_155 = arith.constant 1 : i32
    %210 = tpu.dynamic_rotate %200 by %c1_i32_155 dim 1 : vector<8x256xf32>, i32 -> vector<8x256xf32>
    %211 = arith.mulf %210, %11 : vector<8x256xf32>
    %c24_156 = arith.constant 24 : index
    %c0_157 = arith.constant 0 : index
    %212 = vector.load %arg6[%c24_156, %c0_157] : memref<72x256xf32, #tpu.memory_space<vmem>>, vector<8x256xf32>
    tpu.vector_store %arg6[%c24_156, %c0_157], %211 {strides = array<i32>} : memref<72x256xf32, #tpu.memory_space<vmem>>, vector<8x256xf32>,
    %c32_158 = arith.constant 32 : index
    %c0_159 = arith.constant 0 : index
    %213 = vector.load %arg6[%c32_158, %c0_159] : memref<72x256xf32, #tpu.memory_space<vmem>>, vector<8x256xf32>
    tpu.vector_store %arg6[%c32_158, %c0_159], %200 {strides = array<i32>} : memref<72x256xf32, #tpu.memory_space<vmem>>, vector<8x256xf32>,
    %c255_i32_160 = arith.constant 255 : i32
    %214 = tpu.dynamic_rotate %200 by %c255_i32_160 dim 1 : vector<8x256xf32>, i32 -> vector<8x256xf32>
    %215 = arith.mulf %214, %14 : vector<8x256xf32>
    %c40_161 = arith.constant 40 : index
    %c0_162 = arith.constant 0 : index
    %216 = vector.load %arg6[%c40_161, %c0_162] : memref<72x256xf32, #tpu.memory_space<vmem>>, vector<8x256xf32>
    tpu.vector_store %arg6[%c40_161, %c0_162], %215 {strides = array<i32>} : memref<72x256xf32, #tpu.memory_space<vmem>>, vector<8x256xf32>,
    %c241_i32_163 = arith.constant 241 : i32
    %217 = tpu.dynamic_rotate %200 by %c241_i32_163 dim 1 : vector<8x256xf32>, i32 -> vector<8x256xf32>
    %218 = arith.mulf %217, %17 : vector<8x256xf32>
    %c48_164 = arith.constant 48 : index
    %c0_165 = arith.constant 0 : index
    %219 = vector.load %arg6[%c48_164, %c0_165] : memref<72x256xf32, #tpu.memory_space<vmem>>, vector<8x256xf32>
    tpu.vector_store %arg6[%c48_164, %c0_165], %218 {strides = array<i32>} : memref<72x256xf32, #tpu.memory_space<vmem>>, vector<8x256xf32>,
    %c240_i32_166 = arith.constant 240 : i32
    %220 = tpu.dynamic_rotate %200 by %c240_i32_166 dim 1 : vector<8x256xf32>, i32 -> vector<8x256xf32>
    %221 = arith.mulf %220, %20 : vector<8x256xf32>
    %c56_167 = arith.constant 56 : index
    %c0_168 = arith.constant 0 : index
    %222 = vector.load %arg6[%c56_167, %c0_168] : memref<72x256xf32, #tpu.memory_space<vmem>>, vector<8x256xf32>
    tpu.vector_store %arg6[%c56_167, %c0_168], %221 {strides = array<i32>} : memref<72x256xf32, #tpu.memory_space<vmem>>, vector<8x256xf32>,
    %c239_i32_169 = arith.constant 239 : i32
    %223 = tpu.dynamic_rotate %200 by %c239_i32_169 dim 1 : vector<8x256xf32>, i32 -> vector<8x256xf32>
    %224 = arith.mulf %223, %23 : vector<8x256xf32>
    %c64_170 = arith.constant 64 : index
    %c0_171 = arith.constant 0 : index
    %225 = vector.load %arg6[%c64_170, %c0_171] : memref<72x256xf32, #tpu.memory_space<vmem>>, vector<8x256xf32>
    tpu.vector_store %arg6[%c64_170, %c0_171], %224 {strides = array<i32>} : memref<72x256xf32, #tpu.memory_space<vmem>>, vector<8x256xf32>,
    %c4_172 = arith.constant 4 : index
    %c0_173 = arith.constant 0 : index
    %c0_174 = arith.constant 0 : index
    %226 = vector.load %arg2[%c4_172, %c0_173, %c0_174] : memref<9x8x72xf32, #tpu.memory_space<vmem>>, vector<1x8x72xf32>
    %227 = vector.shape_cast %226 : vector<1x8x72xf32> to vector<8x72xf32>
    %c0_175 = arith.constant 0 : index
    %c0_176 = arith.constant 0 : index
    %228 = vector.load %arg6[%c0_175, %c0_176] : memref<72x256xf32, #tpu.memory_space<vmem>>, vector<72x256xf32>
    %cst_177 = arith.constant dense<0.000000e+00> : vector<8x256xf32>
    %229 = tpu.matmul %227, %228, %cst_177 {dimension_numbers = #tpu.dot_dimension_numbers<[1], [0], [0], [1], [0, 0, 1, 1], [], []>} : vector<8x72xf32>, vector<72x256xf32>, vector<8x256xf32> -> vector<8x256xf32>
    %230 = arith.addf %176, %229 : vector<8x256xf32>
    %c32_i32_178 = arith.constant 32 : i32
    %231 = tpu.dynamic_rotate %229 by %c32_i32_178 dim 1 : vector<8x256xf32>, i32 -> vector<8x256xf32>
    %232 = arith.addf %231, %26 : vector<8x256xf32>
    %233 = arith.maximumf %229, %232 : vector<8x256xf32>
    %c16_i32_179 = arith.constant 16 : i32
    %234 = tpu.dynamic_rotate %229 by %c16_i32_179 dim 1 : vector<8x256xf32>, i32 -> vector<8x256xf32>
    %235 = arith.addf %234, %29 : vector<8x256xf32>
    %236 = arith.maximumf %233, %235 : vector<8x256xf32>
    %c240_i32_180 = arith.constant 240 : i32
    %237 = tpu.dynamic_rotate %229 by %c240_i32_180 dim 1 : vector<8x256xf32>, i32 -> vector<8x256xf32>
    %238 = arith.addf %237, %32 : vector<8x256xf32>
    %239 = arith.maximumf %236, %238 : vector<8x256xf32>
    %c224_i32_181 = arith.constant 224 : i32
    %240 = tpu.dynamic_rotate %229 by %c224_i32_181 dim 1 : vector<8x256xf32>, i32 -> vector<8x256xf32>
    %241 = arith.addf %240, %35 : vector<8x256xf32>
    %242 = arith.maximumf %239, %241 : vector<8x256xf32>
    %c2_i32_182 = arith.constant 2 : i32
    %243 = tpu.dynamic_rotate %242 by %c2_i32_182 dim 1 : vector<8x256xf32>, i32 -> vector<8x256xf32>
    %244 = arith.addf %243, %38 : vector<8x256xf32>
    %245 = arith.maximumf %242, %244 : vector<8x256xf32>
    %c1_i32_183 = arith.constant 1 : i32
    %246 = tpu.dynamic_rotate %242 by %c1_i32_183 dim 1 : vector<8x256xf32>, i32 -> vector<8x256xf32>
    %247 = arith.addf %246, %41 : vector<8x256xf32>
    %248 = arith.maximumf %245, %247 : vector<8x256xf32>
    %c255_i32_184 = arith.constant 255 : i32
    %249 = tpu.dynamic_rotate %242 by %c255_i32_184 dim 1 : vector<8x256xf32>, i32 -> vector<8x256xf32>
    %250 = arith.addf %249, %44 : vector<8x256xf32>
    %251 = arith.maximumf %248, %250 : vector<8x256xf32>
    %c254_i32_185 = arith.constant 254 : i32
    %252 = tpu.dynamic_rotate %242 by %c254_i32_185 dim 1 : vector<8x256xf32>, i32 -> vector<8x256xf32>
    %253 = arith.addf %252, %47 : vector<8x256xf32>
    %254 = arith.maximumf %251, %253 : vector<8x256xf32>
    %c17_i32_186 = arith.constant 17 : i32
    %255 = tpu.dynamic_rotate %254 by %c17_i32_186 dim 1 : vector<8x256xf32>, i32 -> vector<8x256xf32>
    %256 = arith.mulf %255, %2 : vector<8x256xf32>
    %c0_187 = arith.constant 0 : index
    %c0_188 = arith.constant 0 : index
    %257 = vector.load %arg6[%c0_187, %c0_188] : memref<72x256xf32, #tpu.memory_space<vmem>>, vector<8x256xf32>
    tpu.vector_store %arg6[%c0_187, %c0_188], %256 {strides = array<i32>} : memref<72x256xf32, #tpu.memory_space<vmem>>, vector<8x256xf32>,
    %c16_i32_189 = arith.constant 16 : i32
    %258 = tpu.dynamic_rotate %254 by %c16_i32_189 dim 1 : vector<8x256xf32>, i32 -> vector<8x256xf32>
    %259 = arith.mulf %258, %5 : vector<8x256xf32>
    %c8_190 = arith.constant 8 : index
    %c0_191 = arith.constant 0 : index
    %260 = vector.load %arg6[%c8_190, %c0_191] : memref<72x256xf32, #tpu.memory_space<vmem>>, vector<8x256xf32>
    tpu.vector_store %arg6[%c8_190, %c0_191], %259 {strides = array<i32>} : memref<72x256xf32, #tpu.memory_space<vmem>>, vector<8x256xf32>,
    %c15_i32_192 = arith.constant 15 : i32
    %261 = tpu.dynamic_rotate %254 by %c15_i32_192 dim 1 : vector<8x256xf32>, i32 -> vector<8x256xf32>
    %262 = arith.mulf %261, %8 : vector<8x256xf32>
    %c16_193 = arith.constant 16 : index
    %c0_194 = arith.constant 0 : index
    %263 = vector.load %arg6[%c16_193, %c0_194] : memref<72x256xf32, #tpu.memory_space<vmem>>, vector<8x256xf32>
    tpu.vector_store %arg6[%c16_193, %c0_194], %262 {strides = array<i32>} : memref<72x256xf32, #tpu.memory_space<vmem>>, vector<8x256xf32>,
    %c1_i32_195 = arith.constant 1 : i32
    %264 = tpu.dynamic_rotate %254 by %c1_i32_195 dim 1 : vector<8x256xf32>, i32 -> vector<8x256xf32>
    %265 = arith.mulf %264, %11 : vector<8x256xf32>
    %c24_196 = arith.constant 24 : index
    %c0_197 = arith.constant 0 : index
    %266 = vector.load %arg6[%c24_196, %c0_197] : memref<72x256xf32, #tpu.memory_space<vmem>>, vector<8x256xf32>
    tpu.vector_store %arg6[%c24_196, %c0_197], %265 {strides = array<i32>} : memref<72x256xf32, #tpu.memory_space<vmem>>, vector<8x256xf32>,
    %c32_198 = arith.constant 32 : index
    %c0_199 = arith.constant 0 : index
    %267 = vector.load %arg6[%c32_198, %c0_199] : memref<72x256xf32, #tpu.memory_space<vmem>>, vector<8x256xf32>
    tpu.vector_store %arg6[%c32_198, %c0_199], %254 {strides = array<i32>} : memref<72x256xf32, #tpu.memory_space<vmem>>, vector<8x256xf32>,
    %c255_i32_200 = arith.constant 255 : i32
    %268 = tpu.dynamic_rotate %254 by %c255_i32_200 dim 1 : vector<8x256xf32>, i32 -> vector<8x256xf32>
    %269 = arith.mulf %268, %14 : vector<8x256xf32>
    %c40_201 = arith.constant 40 : index
    %c0_202 = arith.constant 0 : index
    %270 = vector.load %arg6[%c40_201, %c0_202] : memref<72x256xf32, #tpu.memory_space<vmem>>, vector<8x256xf32>
    tpu.vector_store %arg6[%c40_201, %c0_202], %269 {strides = array<i32>} : memref<72x256xf32, #tpu.memory_space<vmem>>, vector<8x256xf32>,
    %c241_i32_203 = arith.constant 241 : i32
    %271 = tpu.dynamic_rotate %254 by %c241_i32_203 dim 1 : vector<8x256xf32>, i32 -> vector<8x256xf32>
    %272 = arith.mulf %271, %17 : vector<8x256xf32>
    %c48_204 = arith.constant 48 : index
    %c0_205 = arith.constant 0 : index
    %273 = vector.load %arg6[%c48_204, %c0_205] : memref<72x256xf32, #tpu.memory_space<vmem>>, vector<8x256xf32>
    tpu.vector_store %arg6[%c48_204, %c0_205], %272 {strides = array<i32>} : memref<72x256xf32, #tpu.memory_space<vmem>>, vector<8x256xf32>,
    %c240_i32_206 = arith.constant 240 : i32
    %274 = tpu.dynamic_rotate %254 by %c240_i32_206 dim 1 : vector<8x256xf32>, i32 -> vector<8x256xf32>
    %275 = arith.mulf %274, %20 : vector<8x256xf32>
    %c56_207 = arith.constant 56 : index
    %c0_208 = arith.constant 0 : index
    %276 = vector.load %arg6[%c56_207, %c0_208] : memref<72x256xf32, #tpu.memory_space<vmem>>, vector<8x256xf32>
    tpu.vector_store %arg6[%c56_207, %c0_208], %275 {strides = array<i32>} : memref<72x256xf32, #tpu.memory_space<vmem>>, vector<8x256xf32>,
    %c239_i32_209 = arith.constant 239 : i32
    %277 = tpu.dynamic_rotate %254 by %c239_i32_209 dim 1 : vector<8x256xf32>, i32 -> vector<8x256xf32>
    %278 = arith.mulf %277, %23 : vector<8x256xf32>
    %c64_210 = arith.constant 64 : index
    %c0_211 = arith.constant 0 : index
    %279 = vector.load %arg6[%c64_210, %c0_211] : memref<72x256xf32, #tpu.memory_space<vmem>>, vector<8x256xf32>
    tpu.vector_store %arg6[%c64_210, %c0_211], %278 {strides = array<i32>} : memref<72x256xf32, #tpu.memory_space<vmem>>, vector<8x256xf32>,
    %c5_212 = arith.constant 5 : index
    %c0_213 = arith.constant 0 : index
    %c0_214 = arith.constant 0 : index
    %280 = vector.load %arg2[%c5_212, %c0_213, %c0_214] : memref<9x8x72xf32, #tpu.memory_space<vmem>>, vector<1x8x72xf32>
    %281 = vector.shape_cast %280 : vector<1x8x72xf32> to vector<8x72xf32>
    %c0_215 = arith.constant 0 : index
    %c0_216 = arith.constant 0 : index
    %282 = vector.load %arg6[%c0_215, %c0_216] : memref<72x256xf32, #tpu.memory_space<vmem>>, vector<72x256xf32>
    %cst_217 = arith.constant dense<0.000000e+00> : vector<8x256xf32>
    %283 = tpu.matmul %281, %282, %cst_217 {dimension_numbers = #tpu.dot_dimension_numbers<[1], [0], [0], [1], [0, 0, 1, 1], [], []>} : vector<8x72xf32>, vector<72x256xf32>, vector<8x256xf32> -> vector<8x256xf32>
    %284 = arith.addf %230, %283 : vector<8x256xf32>
    %c32_i32_218 = arith.constant 32 : i32
    %285 = tpu.dynamic_rotate %283 by %c32_i32_218 dim 1 : vector<8x256xf32>, i32 -> vector<8x256xf32>
    %286 = arith.addf %285, %26 : vector<8x256xf32>
    %287 = arith.maximumf %283, %286 : vector<8x256xf32>
    %c16_i32_219 = arith.constant 16 : i32
    %288 = tpu.dynamic_rotate %283 by %c16_i32_219 dim 1 : vector<8x256xf32>, i32 -> vector<8x256xf32>
    %289 = arith.addf %288, %29 : vector<8x256xf32>
    %290 = arith.maximumf %287, %289 : vector<8x256xf32>
    %c240_i32_220 = arith.constant 240 : i32
    %291 = tpu.dynamic_rotate %283 by %c240_i32_220 dim 1 : vector<8x256xf32>, i32 -> vector<8x256xf32>
    %292 = arith.addf %291, %32 : vector<8x256xf32>
    %293 = arith.maximumf %290, %292 : vector<8x256xf32>
    %c224_i32_221 = arith.constant 224 : i32
    %294 = tpu.dynamic_rotate %283 by %c224_i32_221 dim 1 : vector<8x256xf32>, i32 -> vector<8x256xf32>
    %295 = arith.addf %294, %35 : vector<8x256xf32>
    %296 = arith.maximumf %293, %295 : vector<8x256xf32>
    %c2_i32_222 = arith.constant 2 : i32
    %297 = tpu.dynamic_rotate %296 by %c2_i32_222 dim 1 : vector<8x256xf32>, i32 -> vector<8x256xf32>
    %298 = arith.addf %297, %38 : vector<8x256xf32>
    %299 = arith.maximumf %296, %298 : vector<8x256xf32>
    %c1_i32_223 = arith.constant 1 : i32
    %300 = tpu.dynamic_rotate %296 by %c1_i32_223 dim 1 : vector<8x256xf32>, i32 -> vector<8x256xf32>
    %301 = arith.addf %300, %41 : vector<8x256xf32>
    %302 = arith.maximumf %299, %301 : vector<8x256xf32>
    %c255_i32_224 = arith.constant 255 : i32
    %303 = tpu.dynamic_rotate %296 by %c255_i32_224 dim 1 : vector<8x256xf32>, i32 -> vector<8x256xf32>
    %304 = arith.addf %303, %44 : vector<8x256xf32>
    %305 = arith.maximumf %302, %304 : vector<8x256xf32>
    %c254_i32_225 = arith.constant 254 : i32
    %306 = tpu.dynamic_rotate %296 by %c254_i32_225 dim 1 : vector<8x256xf32>, i32 -> vector<8x256xf32>
    %307 = arith.addf %306, %47 : vector<8x256xf32>
    %308 = arith.maximumf %305, %307 : vector<8x256xf32>
    %c17_i32_226 = arith.constant 17 : i32
    %309 = tpu.dynamic_rotate %308 by %c17_i32_226 dim 1 : vector<8x256xf32>, i32 -> vector<8x256xf32>
    %310 = arith.mulf %309, %2 : vector<8x256xf32>
    %c0_227 = arith.constant 0 : index
    %c0_228 = arith.constant 0 : index
    %311 = vector.load %arg6[%c0_227, %c0_228] : memref<72x256xf32, #tpu.memory_space<vmem>>, vector<8x256xf32>
    tpu.vector_store %arg6[%c0_227, %c0_228], %310 {strides = array<i32>} : memref<72x256xf32, #tpu.memory_space<vmem>>, vector<8x256xf32>,
    %c16_i32_229 = arith.constant 16 : i32
    %312 = tpu.dynamic_rotate %308 by %c16_i32_229 dim 1 : vector<8x256xf32>, i32 -> vector<8x256xf32>
    %313 = arith.mulf %312, %5 : vector<8x256xf32>
    %c8_230 = arith.constant 8 : index
    %c0_231 = arith.constant 0 : index
    %314 = vector.load %arg6[%c8_230, %c0_231] : memref<72x256xf32, #tpu.memory_space<vmem>>, vector<8x256xf32>
    tpu.vector_store %arg6[%c8_230, %c0_231], %313 {strides = array<i32>} : memref<72x256xf32, #tpu.memory_space<vmem>>, vector<8x256xf32>,
    %c15_i32_232 = arith.constant 15 : i32
    %315 = tpu.dynamic_rotate %308 by %c15_i32_232 dim 1 : vector<8x256xf32>, i32 -> vector<8x256xf32>
    %316 = arith.mulf %315, %8 : vector<8x256xf32>
    %c16_233 = arith.constant 16 : index
    %c0_234 = arith.constant 0 : index
    %317 = vector.load %arg6[%c16_233, %c0_234] : memref<72x256xf32, #tpu.memory_space<vmem>>, vector<8x256xf32>
    tpu.vector_store %arg6[%c16_233, %c0_234], %316 {strides = array<i32>} : memref<72x256xf32, #tpu.memory_space<vmem>>, vector<8x256xf32>,
    %c1_i32_235 = arith.constant 1 : i32
    %318 = tpu.dynamic_rotate %308 by %c1_i32_235 dim 1 : vector<8x256xf32>, i32 -> vector<8x256xf32>
    %319 = arith.mulf %318, %11 : vector<8x256xf32>
    %c24_236 = arith.constant 24 : index
    %c0_237 = arith.constant 0 : index
    %320 = vector.load %arg6[%c24_236, %c0_237] : memref<72x256xf32, #tpu.memory_space<vmem>>, vector<8x256xf32>
    tpu.vector_store %arg6[%c24_236, %c0_237], %319 {strides = array<i32>} : memref<72x256xf32, #tpu.memory_space<vmem>>, vector<8x256xf32>,
    %c32_238 = arith.constant 32 : index
    %c0_239 = arith.constant 0 : index
    %321 = vector.load %arg6[%c32_238, %c0_239] : memref<72x256xf32, #tpu.memory_space<vmem>>, vector<8x256xf32>
    tpu.vector_store %arg6[%c32_238, %c0_239], %308 {strides = array<i32>} : memref<72x256xf32, #tpu.memory_space<vmem>>, vector<8x256xf32>,
    %c255_i32_240 = arith.constant 255 : i32
    %322 = tpu.dynamic_rotate %308 by %c255_i32_240 dim 1 : vector<8x256xf32>, i32 -> vector<8x256xf32>
    %323 = arith.mulf %322, %14 : vector<8x256xf32>
    %c40_241 = arith.constant 40 : index
    %c0_242 = arith.constant 0 : index
    %324 = vector.load %arg6[%c40_241, %c0_242] : memref<72x256xf32, #tpu.memory_space<vmem>>, vector<8x256xf32>
    tpu.vector_store %arg6[%c40_241, %c0_242], %323 {strides = array<i32>} : memref<72x256xf32, #tpu.memory_space<vmem>>, vector<8x256xf32>,
    %c241_i32_243 = arith.constant 241 : i32
    %325 = tpu.dynamic_rotate %308 by %c241_i32_243 dim 1 : vector<8x256xf32>, i32 -> vector<8x256xf32>
    %326 = arith.mulf %325, %17 : vector<8x256xf32>
    %c48_244 = arith.constant 48 : index
    %c0_245 = arith.constant 0 : index
    %327 = vector.load %arg6[%c48_244, %c0_245] : memref<72x256xf32, #tpu.memory_space<vmem>>, vector<8x256xf32>
    tpu.vector_store %arg6[%c48_244, %c0_245], %326 {strides = array<i32>} : memref<72x256xf32, #tpu.memory_space<vmem>>, vector<8x256xf32>,
    %c240_i32_246 = arith.constant 240 : i32
    %328 = tpu.dynamic_rotate %308 by %c240_i32_246 dim 1 : vector<8x256xf32>, i32 -> vector<8x256xf32>
    %329 = arith.mulf %328, %20 : vector<8x256xf32>
    %c56_247 = arith.constant 56 : index
    %c0_248 = arith.constant 0 : index
    %330 = vector.load %arg6[%c56_247, %c0_248] : memref<72x256xf32, #tpu.memory_space<vmem>>, vector<8x256xf32>
    tpu.vector_store %arg6[%c56_247, %c0_248], %329 {strides = array<i32>} : memref<72x256xf32, #tpu.memory_space<vmem>>, vector<8x256xf32>,
    %c239_i32_249 = arith.constant 239 : i32
    %331 = tpu.dynamic_rotate %308 by %c239_i32_249 dim 1 : vector<8x256xf32>, i32 -> vector<8x256xf32>
    %332 = arith.mulf %331, %23 : vector<8x256xf32>
    %c64_250 = arith.constant 64 : index
    %c0_251 = arith.constant 0 : index
    %333 = vector.load %arg6[%c64_250, %c0_251] : memref<72x256xf32, #tpu.memory_space<vmem>>, vector<8x256xf32>
    tpu.vector_store %arg6[%c64_250, %c0_251], %332 {strides = array<i32>} : memref<72x256xf32, #tpu.memory_space<vmem>>, vector<8x256xf32>,
    %c6_252 = arith.constant 6 : index
    %c0_253 = arith.constant 0 : index
    %c0_254 = arith.constant 0 : index
    %334 = vector.load %arg2[%c6_252, %c0_253, %c0_254] : memref<9x8x72xf32, #tpu.memory_space<vmem>>, vector<1x8x72xf32>
    %335 = vector.shape_cast %334 : vector<1x8x72xf32> to vector<8x72xf32>
    %c0_255 = arith.constant 0 : index
    %c0_256 = arith.constant 0 : index
    %336 = vector.load %arg6[%c0_255, %c0_256] : memref<72x256xf32, #tpu.memory_space<vmem>>, vector<72x256xf32>
    %cst_257 = arith.constant dense<0.000000e+00> : vector<8x256xf32>
    %337 = tpu.matmul %335, %336, %cst_257 {dimension_numbers = #tpu.dot_dimension_numbers<[1], [0], [0], [1], [0, 0, 1, 1], [], []>} : vector<8x72xf32>, vector<72x256xf32>, vector<8x256xf32> -> vector<8x256xf32>
    %338 = arith.addf %284, %337 : vector<8x256xf32>
    %cst_258 = arith.constant 0.000000e+00 : f32
    %339 = vector.broadcast %cst_258 : f32 to vector<8x256xf32>
    %340 = arith.maximumf %338, %339 : vector<8x256xf32>
    %c17_i32_259 = arith.constant 17 : i32
    %341 = tpu.dynamic_rotate %340 by %c17_i32_259 dim 1 : vector<8x256xf32>, i32 -> vector<8x256xf32>
    %342 = arith.mulf %341, %2 : vector<8x256xf32>
    %c0_260 = arith.constant 0 : index
    %c0_261 = arith.constant 0 : index
    %343 = vector.load %arg6[%c0_260, %c0_261] : memref<72x256xf32, #tpu.memory_space<vmem>>, vector<8x256xf32>
    tpu.vector_store %arg6[%c0_260, %c0_261], %342 {strides = array<i32>} : memref<72x256xf32, #tpu.memory_space<vmem>>, vector<8x256xf32>,
    %c16_i32_262 = arith.constant 16 : i32
    %344 = tpu.dynamic_rotate %340 by %c16_i32_262 dim 1 : vector<8x256xf32>, i32 -> vector<8x256xf32>
    %345 = arith.mulf %344, %5 : vector<8x256xf32>
    %c8_263 = arith.constant 8 : index
    %c0_264 = arith.constant 0 : index
    %346 = vector.load %arg6[%c8_263, %c0_264] : memref<72x256xf32, #tpu.memory_space<vmem>>, vector<8x256xf32>
    tpu.vector_store %arg6[%c8_263, %c0_264], %345 {strides = array<i32>} : memref<72x256xf32, #tpu.memory_space<vmem>>, vector<8x256xf32>,
    %c15_i32_265 = arith.constant 15 : i32
    %347 = tpu.dynamic_rotate %340 by %c15_i32_265 dim 1 : vector<8x256xf32>, i32 -> vector<8x256xf32>
    %348 = arith.mulf %347, %8 : vector<8x256xf32>
    %c16_266 = arith.constant 16 : index
    %c0_267 = arith.constant 0 : index
    %349 = vector.load %arg6[%c16_266, %c0_267] : memref<72x256xf32, #tpu.memory_space<vmem>>, vector<8x256xf32>
    tpu.vector_store %arg6[%c16_266, %c0_267], %348 {strides = array<i32>} : memref<72x256xf32, #tpu.memory_space<vmem>>, vector<8x256xf32>,
    %c1_i32_268 = arith.constant 1 : i32
    %350 = tpu.dynamic_rotate %340 by %c1_i32_268 dim 1 : vector<8x256xf32>, i32 -> vector<8x256xf32>
    %351 = arith.mulf %350, %11 : vector<8x256xf32>
    %c24_269 = arith.constant 24 : index
    %c0_270 = arith.constant 0 : index
    %352 = vector.load %arg6[%c24_269, %c0_270] : memref<72x256xf32, #tpu.memory_space<vmem>>, vector<8x256xf32>
    tpu.vector_store %arg6[%c24_269, %c0_270], %351 {strides = array<i32>} : memref<72x256xf32, #tpu.memory_space<vmem>>, vector<8x256xf32>,
    %c32_271 = arith.constant 32 : index
    %c0_272 = arith.constant 0 : index
    %353 = vector.load %arg6[%c32_271, %c0_272] : memref<72x256xf32, #tpu.memory_space<vmem>>, vector<8x256xf32>
    tpu.vector_store %arg6[%c32_271, %c0_272], %340 {strides = array<i32>} : memref<72x256xf32, #tpu.memory_space<vmem>>, vector<8x256xf32>,
    %c255_i32_273 = arith.constant 255 : i32
    %354 = tpu.dynamic_rotate %340 by %c255_i32_273 dim 1 : vector<8x256xf32>, i32 -> vector<8x256xf32>
    %355 = arith.mulf %354, %14 : vector<8x256xf32>
    %c40_274 = arith.constant 40 : index
    %c0_275 = arith.constant 0 : index
    %356 = vector.load %arg6[%c40_274, %c0_275] : memref<72x256xf32, #tpu.memory_space<vmem>>, vector<8x256xf32>
    tpu.vector_store %arg6[%c40_274, %c0_275], %355 {strides = array<i32>} : memref<72x256xf32, #tpu.memory_space<vmem>>, vector<8x256xf32>,
    %c241_i32_276 = arith.constant 241 : i32
    %357 = tpu.dynamic_rotate %340 by %c241_i32_276 dim 1 : vector<8x256xf32>, i32 -> vector<8x256xf32>
    %358 = arith.mulf %357, %17 : vector<8x256xf32>
    %c48_277 = arith.constant 48 : index
    %c0_278 = arith.constant 0 : index
    %359 = vector.load %arg6[%c48_277, %c0_278] : memref<72x256xf32, #tpu.memory_space<vmem>>, vector<8x256xf32>
    tpu.vector_store %arg6[%c48_277, %c0_278], %358 {strides = array<i32>} : memref<72x256xf32, #tpu.memory_space<vmem>>, vector<8x256xf32>,
    %c240_i32_279 = arith.constant 240 : i32
    %360 = tpu.dynamic_rotate %340 by %c240_i32_279 dim 1 : vector<8x256xf32>, i32 -> vector<8x256xf32>
    %361 = arith.mulf %360, %20 : vector<8x256xf32>
    %c56_280 = arith.constant 56 : index
    %c0_281 = arith.constant 0 : index
    %362 = vector.load %arg6[%c56_280, %c0_281] : memref<72x256xf32, #tpu.memory_space<vmem>>, vector<8x256xf32>
    tpu.vector_store %arg6[%c56_280, %c0_281], %361 {strides = array<i32>} : memref<72x256xf32, #tpu.memory_space<vmem>>, vector<8x256xf32>,
    %c239_i32_282 = arith.constant 239 : i32
    %363 = tpu.dynamic_rotate %340 by %c239_i32_282 dim 1 : vector<8x256xf32>, i32 -> vector<8x256xf32>
    %364 = arith.mulf %363, %23 : vector<8x256xf32>
    %c64_283 = arith.constant 64 : index
    %c0_284 = arith.constant 0 : index
    %365 = vector.load %arg6[%c64_283, %c0_284] : memref<72x256xf32, #tpu.memory_space<vmem>>, vector<8x256xf32>
    tpu.vector_store %arg6[%c64_283, %c0_284], %364 {strides = array<i32>} : memref<72x256xf32, #tpu.memory_space<vmem>>, vector<8x256xf32>,
    %c7_285 = arith.constant 7 : index
    %c0_286 = arith.constant 0 : index
    %c0_287 = arith.constant 0 : index
    %366 = vector.load %arg2[%c7_285, %c0_286, %c0_287] : memref<9x8x72xf32, #tpu.memory_space<vmem>>, vector<1x8x72xf32>
    %367 = vector.shape_cast %366 : vector<1x8x72xf32> to vector<8x72xf32>
    %c0_288 = arith.constant 0 : index
    %c0_289 = arith.constant 0 : index
    %368 = vector.load %arg6[%c0_288, %c0_289] : memref<72x256xf32, #tpu.memory_space<vmem>>, vector<72x256xf32>
    %cst_290 = arith.constant dense<0.000000e+00> : vector<8x256xf32>
    %369 = tpu.matmul %367, %368, %cst_290 {dimension_numbers = #tpu.dot_dimension_numbers<[1], [0], [0], [1], [0, 0, 1, 1], [], []>} : vector<8x72xf32>, vector<72x256xf32>, vector<8x256xf32> -> vector<8x256xf32>
    %cst_291 = arith.constant 0.000000e+00 : f32
    %370 = vector.broadcast %cst_291 : f32 to vector<8x256xf32>
    %371 = arith.maximumf %369, %370 : vector<8x256xf32>
    %c17_i32_292 = arith.constant 17 : i32
    %372 = tpu.dynamic_rotate %371 by %c17_i32_292 dim 1 : vector<8x256xf32>, i32 -> vector<8x256xf32>
    %373 = arith.mulf %372, %2 : vector<8x256xf32>
    %c0_293 = arith.constant 0 : index
    %c0_294 = arith.constant 0 : index
    %374 = vector.load %arg6[%c0_293, %c0_294] : memref<72x256xf32, #tpu.memory_space<vmem>>, vector<8x256xf32>
    tpu.vector_store %arg6[%c0_293, %c0_294], %373 {strides = array<i32>} : memref<72x256xf32, #tpu.memory_space<vmem>>, vector<8x256xf32>,
    %c16_i32_295 = arith.constant 16 : i32
    %375 = tpu.dynamic_rotate %371 by %c16_i32_295 dim 1 : vector<8x256xf32>, i32 -> vector<8x256xf32>
    %376 = arith.mulf %375, %5 : vector<8x256xf32>
    %c8_296 = arith.constant 8 : index
    %c0_297 = arith.constant 0 : index
    %377 = vector.load %arg6[%c8_296, %c0_297] : memref<72x256xf32, #tpu.memory_space<vmem>>, vector<8x256xf32>
    tpu.vector_store %arg6[%c8_296, %c0_297], %376 {strides = array<i32>} : memref<72x256xf32, #tpu.memory_space<vmem>>, vector<8x256xf32>,
    %c15_i32_298 = arith.constant 15 : i32
    %378 = tpu.dynamic_rotate %371 by %c15_i32_298 dim 1 : vector<8x256xf32>, i32 -> vector<8x256xf32>
    %379 = arith.mulf %378, %8 : vector<8x256xf32>
    %c16_299 = arith.constant 16 : index
    %c0_300 = arith.constant 0 : index
    %380 = vector.load %arg6[%c16_299, %c0_300] : memref<72x256xf32, #tpu.memory_space<vmem>>, vector<8x256xf32>
    tpu.vector_store %arg6[%c16_299, %c0_300], %379 {strides = array<i32>} : memref<72x256xf32, #tpu.memory_space<vmem>>, vector<8x256xf32>,
    %c1_i32_301 = arith.constant 1 : i32
    %381 = tpu.dynamic_rotate %371 by %c1_i32_301 dim 1 : vector<8x256xf32>, i32 -> vector<8x256xf32>
    %382 = arith.mulf %381, %11 : vector<8x256xf32>
    %c24_302 = arith.constant 24 : index
    %c0_303 = arith.constant 0 : index
    %383 = vector.load %arg6[%c24_302, %c0_303] : memref<72x256xf32, #tpu.memory_space<vmem>>, vector<8x256xf32>
    tpu.vector_store %arg6[%c24_302, %c0_303], %382 {strides = array<i32>} : memref<72x256xf32, #tpu.memory_space<vmem>>, vector<8x256xf32>,
    %c32_304 = arith.constant 32 : index
    %c0_305 = arith.constant 0 : index
    %384 = vector.load %arg6[%c32_304, %c0_305] : memref<72x256xf32, #tpu.memory_space<vmem>>, vector<8x256xf32>
    tpu.vector_store %arg6[%c32_304, %c0_305], %371 {strides = array<i32>} : memref<72x256xf32, #tpu.memory_space<vmem>>, vector<8x256xf32>,
    %c255_i32_306 = arith.constant 255 : i32
    %385 = tpu.dynamic_rotate %371 by %c255_i32_306 dim 1 : vector<8x256xf32>, i32 -> vector<8x256xf32>
    %386 = arith.mulf %385, %14 : vector<8x256xf32>
    %c40_307 = arith.constant 40 : index
    %c0_308 = arith.constant 0 : index
    %387 = vector.load %arg6[%c40_307, %c0_308] : memref<72x256xf32, #tpu.memory_space<vmem>>, vector<8x256xf32>
    tpu.vector_store %arg6[%c40_307, %c0_308], %386 {strides = array<i32>} : memref<72x256xf32, #tpu.memory_space<vmem>>, vector<8x256xf32>,
    %c241_i32_309 = arith.constant 241 : i32
    %388 = tpu.dynamic_rotate %371 by %c241_i32_309 dim 1 : vector<8x256xf32>, i32 -> vector<8x256xf32>
    %389 = arith.mulf %388, %17 : vector<8x256xf32>
    %c48_310 = arith.constant 48 : index
    %c0_311 = arith.constant 0 : index
    %390 = vector.load %arg6[%c48_310, %c0_311] : memref<72x256xf32, #tpu.memory_space<vmem>>, vector<8x256xf32>
    tpu.vector_store %arg6[%c48_310, %c0_311], %389 {strides = array<i32>} : memref<72x256xf32, #tpu.memory_space<vmem>>, vector<8x256xf32>,
    %c240_i32_312 = arith.constant 240 : i32
    %391 = tpu.dynamic_rotate %371 by %c240_i32_312 dim 1 : vector<8x256xf32>, i32 -> vector<8x256xf32>
    %392 = arith.mulf %391, %20 : vector<8x256xf32>
    %c56_313 = arith.constant 56 : index
    %c0_314 = arith.constant 0 : index
    %393 = vector.load %arg6[%c56_313, %c0_314] : memref<72x256xf32, #tpu.memory_space<vmem>>, vector<8x256xf32>
    tpu.vector_store %arg6[%c56_313, %c0_314], %392 {strides = array<i32>} : memref<72x256xf32, #tpu.memory_space<vmem>>, vector<8x256xf32>,
    %c239_i32_315 = arith.constant 239 : i32
    %394 = tpu.dynamic_rotate %371 by %c239_i32_315 dim 1 : vector<8x256xf32>, i32 -> vector<8x256xf32>
    %395 = arith.mulf %394, %23 : vector<8x256xf32>
    %c64_316 = arith.constant 64 : index
    %c0_317 = arith.constant 0 : index
    %396 = vector.load %arg6[%c64_316, %c0_317] : memref<72x256xf32, #tpu.memory_space<vmem>>, vector<8x256xf32>
    tpu.vector_store %arg6[%c64_316, %c0_317], %395 {strides = array<i32>} : memref<72x256xf32, #tpu.memory_space<vmem>>, vector<8x256xf32>,
    %c8_318 = arith.constant 8 : index
    %c0_319 = arith.constant 0 : index
    %c0_320 = arith.constant 0 : index
    %397 = vector.load %arg2[%c8_318, %c0_319, %c0_320] : memref<9x8x72xf32, #tpu.memory_space<vmem>>, vector<1x8x72xf32>
    %398 = vector.shape_cast %397 : vector<1x8x72xf32> to vector<8x72xf32>
    %c0_321 = arith.constant 0 : index
    %c0_322 = arith.constant 0 : index
    %399 = vector.load %arg6[%c0_321, %c0_322] : memref<72x256xf32, #tpu.memory_space<vmem>>, vector<72x256xf32>
    %cst_323 = arith.constant dense<0.000000e+00> : vector<8x256xf32>
    %400 = tpu.matmul %398, %399, %cst_323 {dimension_numbers = #tpu.dot_dimension_numbers<[1], [0], [0], [1], [0, 0, 1, 1], [], []>} : vector<8x72xf32>, vector<72x256xf32>, vector<8x256xf32> -> vector<8x256xf32>
    %401 = arith.addf %400, %338 : vector<8x256xf32>
    %c0_324 = arith.constant 0 : index
    %c0_325 = arith.constant 0 : index
    %402 = vector.load %arg5[%c0_324, %c0_325] : memref<8x256xf32, #tpu.memory_space<vmem>>, vector<8x256xf32>
    tpu.vector_store %arg5[%c0_324, %c0_325], %401 {strides = array<i32>} : memref<8x256xf32, #tpu.memory_space<vmem>>, vector<8x256xf32>,
    return
  }
  func.func @transform_0(%arg0: i32) -> (i32, i32) {
    %c0_i32 = arith.constant 0 : i32
    %c0_i32_0 = arith.constant 0 : i32
    return %arg0, %c0_i32 : i32, i32
  }
  func.func @transform_1(%arg0: i32) -> (i32, i32, i32) {
    %c0_i32 = arith.constant 0 : i32
    %c0_i32_0 = arith.constant 0 : i32
    %c0_i32_1 = arith.constant 0 : i32
    %c0_i32_2 = arith.constant 0 : i32
    return %c0_i32, %c0_i32_0, %c0_i32_1 : i32, i32, i32
  }
  func.func @transform_2(%arg0: i32) -> (i32, i32) {
    %c0_i32 = arith.constant 0 : i32
    %c0_i32_0 = arith.constant 0 : i32
    %c0_i32_1 = arith.constant 0 : i32
    return %c0_i32, %c0_i32_0 : i32, i32
  }
  func.func @transform_3(%arg0: i32) -> (i32, i32) {
    %c0_i32 = arith.constant 0 : i32
    %c0_i32_0 = arith.constant 0 : i32
    %c0_i32_1 = arith.constant 0 : i32
    return %c0_i32, %c0_i32_0 : i32, i32
  }
  func.func @transform_4(%arg0: i32) -> (i32, i32) {
    %c0_i32 = arith.constant 0 : i32
    %c0_i32_0 = arith.constant 0 : i32
    return %arg0, %c0_i32 : i32, i32
  }
}

</mosaic_0001>

<llo_original>
// kernel: tpu_custom_call.1
$region0: #{tpu_custom_call.1}
  #allocation0 [shape = 'u32[]', space=smem, size = 0x4, offset = 0x4, fixed_abs, tag = 'smem constant byte address 0x4 - core index']
  #allocation1 [shape = 'u32[144,128]{1,0:T(1,128)}', space=vmem, size = 0x12000, scoped, tag = 'internal scratch']
  #allocation2 [shape = 'f32[72,256]{1,0:T(8,128)}', space=vmem, size = 0x12000, scoped, tag = 'scratch operand']
  %s0 = inlined_call_operand.hbm [shape: f32[8,256], index: 0, kind: input, shape index: {}]
  %s1 = inlined_call_operand.hbm [shape: f32[9,8,72], index: 1, kind: input, shape index: {}]
  %s2 = inlined_call_operand.hbm [shape: f32[9,256], index: 2, kind: input, shape index: {}]
  %s3 = inlined_call_operand.hbm [shape: f32[8,256], index: 3, kind: input, shape index: {}]
  %s4 = inlined_call_operand.hbm [shape: f32[8,256], index: 4, kind: output, shape index: {}]
  %s5 = sld [smem:[#allocation0]]
  $region42: #{tpu_custom_call.1} parent=0
    _
  %s7 = ssub.s32 1, %s5
  %s8 = scalar_select 0, %s7, %s5
  $region1: #{tpu_custom_call.1} parent=0
    #allocation3 [shape = 'u8[8192]{0}', space=vmem, size = 0x2000, scoped, tag = 'input window, operand 0, single buffered']
    #allocation4 [shape = 's32[1]{0}', space=sflag, size = 0x4, scoped, tag = 'scoped memory for tpu_custom_call.1']
    #allocation5 [shape = 's32[1]{0}', space=sflag, size = 0x4, scoped, tag = 'scoped memory for tpu_custom_call.1']
    #allocation6 [shape = 'u8[36864]{0}', space=vmem, size = 0x9000, scoped, tag = 'input window, operand 1, single buffered']
    #allocation7 [shape = 's32[1]{0}', space=sflag, size = 0x4, scoped, tag = 'scoped memory for tpu_custom_call.1']
    #allocation8 [shape = 'u8[16384]{0}', space=vmem, size = 0x4000, scoped, tag = 'input window, operand 2, single buffered']
    #allocation9 [shape = 'u8[8192]{0}', space=vmem, size = 0x2000, scoped, tag = 'input window, operand 3, single buffered']
    #allocation10 [shape = 's32[1]{0}', space=sflag, size = 0x4, scoped, tag = 'scoped memory for tpu_custom_call.1']
    #allocation11 [shape = 'u8[8192]{0}', space=vmem, size = 0x2000, scoped, tag = 'output window, operand 0, single buffered']
    %9 = vsyncpa [#allocation4], 0
    %10 = vsyncpa [#allocation7], 0
    %11 = vsyncpa [#allocation10], 0
    %12 = vsyncpa [#allocation5], 0
    // Predicated region
    $region2: #{tpu_custom_call.1} parent=1 // pred_check
      _
    $region3: #{tpu_custom_call.1} parent=1 // pred_check_branch
      %14 = sbr.rel (0) target = $region5
    $region4: #{tpu_custom_call.1} parent=1 // pred_region
      %s16 = ssub.s32 256, 256
      %17 = vsyncadd [#allocation4], %s16
      %s19 = sshll.u32 [#allocation3], 4
      %s20 = int_to_ptr.vmem [resolvable:$true] %s19
      %22 = dma.hbm_to_vmem [thread:$0]  %s0, 256, %s20, [#allocation4]
    $region5: #{tpu_custom_call.1} parent=1 // pred_fallthru
      _
    // Predicated region
    $region6: #{tpu_custom_call.1} parent=1 // pred_check
      _
    $region7: #{tpu_custom_call.1} parent=1 // pred_check_branch
      %24 = sbr.rel (0) target = $region9
    $region8: #{tpu_custom_call.1} parent=1 // pred_region
      %s26 = ssub.s32 1152, 1152
      %27 = vsyncadd [#allocation7], %s26
      %s28 = sshll.u32 [#allocation6], 4
      %s29 = int_to_ptr.vmem [resolvable:$true] %s28
      %34 = dma.hbm_to_vmem [thread:$0]  %s1, 1152, %s29, [#allocation7], 128, 128, 8
    $region9: #{tpu_custom_call.1} parent=1 // pred_fallthru
      _
    // Predicated region
    $region10: #{tpu_custom_call.1} parent=1 // pred_check
      _
    $region11: #{tpu_custom_call.1} parent=1 // pred_check_branch
      %36 = sbr.rel (0) target = $region13
    $region12: #{tpu_custom_call.1} parent=1 // pred_region
      %s38 = ssub.s32 512, 512
      %39 = vsyncadd [#allocation7], %s38
      %s40 = sshll.u32 [#allocation8], 4
      %s41 = int_to_ptr.vmem [resolvable:$true] %s40
      %46 = dma.hbm_to_vmem [thread:$0]  %s2, 512, %s41, [#allocation7], 256, 256, 16
    $region13: #{tpu_custom_call.1} parent=1 // pred_fallthru
      _
    // Predicated region
    $region14: #{tpu_custom_call.1} parent=1 // pred_check
      _
    $region15: #{tpu_custom_call.1} parent=1 // pred_check_branch
      %48 = sbr.rel (0) target = $region17
    $region16: #{tpu_custom_call.1} parent=1 // pred_region
      %s50 = ssub.s32 256, 256
      %51 = vsyncadd [#allocation10], %s50
      %s53 = sshll.u32 [#allocation9], 4
      %s54 = int_to_ptr.vmem [resolvable:$true] %s53
      %56 = dma.hbm_to_vmem [thread:$0]  %s3, 256, %s54, [#allocation10]
    $region17: #{tpu_custom_call.1} parent=1 // pred_fallthru
      _
    // Predicated region
    $region18: #{tpu_custom_call.1} parent=1 // pred_check
      _
    $region19: #{tpu_custom_call.1} parent=1 // pred_check_branch
      %58 = sbr.rel (0) target = $region21
    $region20: #{tpu_custom_call.1} parent=1 // pred_region
      %59 = dma.done [#allocation4], 256
    $region21: #{tpu_custom_call.1} parent=1 // pred_fallthru
      _
    // Predicated region
    $region22: #{tpu_custom_call.1} parent=1 // pred_check
      _
    $region23: #{tpu_custom_call.1} parent=1 // pred_check_branch
      %61 = sbr.rel (0) target = $region25
    $region24: #{tpu_custom_call.1} parent=1 // pred_region
      %62 = dma.done [#allocation7], 1152
    $region25: #{tpu_custom_call.1} parent=1 // pred_fallthru
      _
    // Predicated region
    $region26: #{tpu_custom_call.1} parent=1 // pred_check
      _
    $region27: #{tpu_custom_call.1} parent=1 // pred_check_branch
      %64 = sbr.rel (0) target = $region29
    $region28: #{tpu_custom_call.1} parent=1 // pred_region
      %65 = dma.done [#allocation7], 512
    $region29: #{tpu_custom_call.1} parent=1 // pred_fallthru
      _
    // Predicated region
    $region30: #{tpu_custom_call.1} parent=1 // pred_check
      _
    $region31: #{tpu_custom_call.1} parent=1 // pred_check_branch
      %67 = sbr.rel (0) target = $region33
    $region32: #{tpu_custom_call.1} parent=1 // pred_region
      %68 = dma.done [#allocation10], 256
    $region33: #{tpu_custom_call.1} parent=1 // pred_fallthru
      _
    %v69 = vld [vmem:[#allocation8] ss:$8 sm:$0x3]
    %v71 = vlaneseq
    %v72 = vshrl.u32 %v71, 7
    %v73 = vsub.s32 0, %v72
    %v74 = vrot.slane %v69, %v73
    %v75 = vlaneseq
    %v76 = vshrl.u32 %v75, 7
    %v77 = vsub.s32 1, %v76
    %v78 = vrot.slane %v69, %v77
    %s81 = scalar_lea.vmem [#allocation8], 1
    %v82 = vld [vmem:[%s81] ss:$8 sm:$0x3]
    %v84 = vlaneseq
    %v85 = vshrl.u32 %v84, 7
    %v86 = vsub.s32 0, %v85
    %v87 = vrot.slane %v82, %v86
    %v88 = vlaneseq
    %v89 = vshrl.u32 %v88, 7
    %v90 = vsub.s32 1, %v89
    %v91 = vrot.slane %v82, %v90
    %s94 = scalar_lea.vmem [#allocation8], 2
    %v95 = vld [vmem:[%s94] ss:$8 sm:$0x3]
    %v97 = vlaneseq
    %v98 = vshrl.u32 %v97, 7
    %v99 = vsub.s32 0, %v98
    %v100 = vrot.slane %v95, %v99
    %v101 = vlaneseq
    %v102 = vshrl.u32 %v101, 7
    %v103 = vsub.s32 1, %v102
    %v104 = vrot.slane %v95, %v103
    %s107 = scalar_lea.vmem [#allocation8], 3
    %v108 = vld [vmem:[%s107] ss:$8 sm:$0x3]
    %v110 = vlaneseq
    %v111 = vshrl.u32 %v110, 7
    %v112 = vsub.s32 0, %v111
    %v113 = vrot.slane %v108, %v112
    %v114 = vlaneseq
    %v115 = vshrl.u32 %v114, 7
    %v116 = vsub.s32 1, %v115
    %v117 = vrot.slane %v108, %v116
    %s120 = scalar_lea.vmem [#allocation8], 5
    %v121 = vld [vmem:[%s120] ss:$8 sm:$0x3]
    %v123 = vlaneseq
    %v124 = vshrl.u32 %v123, 7
    %v125 = vsub.s32 0, %v124
    %v126 = vrot.slane %v121, %v125
    %v127 = vlaneseq
    %v128 = vshrl.u32 %v127, 7
    %v129 = vsub.s32 1, %v128
    %v130 = vrot.slane %v121, %v129
    %s133 = scalar_lea.vmem [#allocation8], 6
    %v134 = vld [vmem:[%s133] ss:$8 sm:$0x3]
    %v136 = vlaneseq
    %v137 = vshrl.u32 %v136, 7
    %v138 = vsub.s32 0, %v137
    %v139 = vrot.slane %v134, %v138
    %v140 = vlaneseq
    %v141 = vshrl.u32 %v140, 7
    %v142 = vsub.s32 1, %v141
    %v143 = vrot.slane %v134, %v142
    %s146 = scalar_lea.vmem [#allocation8], 7
    %v147 = vld [vmem:[%s146] ss:$8 sm:$0x3]
    %v149 = vlaneseq
    %v150 = vshrl.u32 %v149, 7
    %v151 = vsub.s32 0, %v150
    %v152 = vrot.slane %v147, %v151
    %v153 = vlaneseq
    %v154 = vshrl.u32 %v153, 7
    %v155 = vsub.s32 1, %v154
    %v156 = vrot.slane %v147, %v155
    %s159 = scalar_lea.vmem [#allocation8], 16
    %v160 = vld [vmem:[%s159] ss:$8 sm:$0x3]
    %v162 = vlaneseq
    %v163 = vshrl.u32 %v162, 7
    %v164 = vsub.s32 0, %v163
    %v165 = vrot.slane %v160, %v164
    %v166 = vlaneseq
    %v167 = vshrl.u32 %v166, 7
    %v168 = vsub.s32 1, %v167
    %v169 = vrot.slane %v160, %v168
    %v172 = vld [vmem:[#allocation9] ss:$8 sm:$0x3]
    %v174 = vlaneseq
    %v175 = vshrl.u32 %v174, 7
    %v176 = vsub.s32 0, %v175
    %v177 = vrot.slane %v172, %v176
    %v178 = vlaneseq
    %v179 = vshrl.u32 %v178, 7
    %v180 = vsub.s32 1, %v179
    %v181 = vrot.slane %v172, %v180
    %s184 = scalar_lea.vmem [#allocation9], 1
    %v185 = vld [vmem:[%s184] ss:$8 sm:$0x3]
    %v187 = vlaneseq
    %v188 = vshrl.u32 %v187, 7
    %v189 = vsub.s32 0, %v188
    %v190 = vrot.slane %v185, %v189
    %v191 = vlaneseq
    %v192 = vshrl.u32 %v191, 7
    %v193 = vsub.s32 1, %v192
    %v194 = vrot.slane %v185, %v193
    %s197 = scalar_lea.vmem [#allocation9], 2
    %v198 = vld [vmem:[%s197] ss:$8 sm:$0x3]
    %v200 = vlaneseq
    %v201 = vshrl.u32 %v200, 7
    %v202 = vsub.s32 0, %v201
    %v203 = vrot.slane %v198, %v202
    %v204 = vlaneseq
    %v205 = vshrl.u32 %v204, 7
    %v206 = vsub.s32 1, %v205
    %v207 = vrot.slane %v198, %v206
    %s210 = scalar_lea.vmem [#allocation9], 3
    %v211 = vld [vmem:[%s210] ss:$8 sm:$0x3]
    %v213 = vlaneseq
    %v214 = vshrl.u32 %v213, 7
    %v215 = vsub.s32 0, %v214
    %v216 = vrot.slane %v211, %v215
    %v217 = vlaneseq
    %v218 = vshrl.u32 %v217, 7
    %v219 = vsub.s32 1, %v218
    %v220 = vrot.slane %v211, %v219
    %s223 = scalar_lea.vmem [#allocation9], 4
    %v224 = vld [vmem:[%s223] ss:$8 sm:$0x3]
    %v226 = vlaneseq
    %v227 = vshrl.u32 %v226, 7
    %v228 = vsub.s32 0, %v227
    %v229 = vrot.slane %v224, %v228
    %v230 = vlaneseq
    %v231 = vshrl.u32 %v230, 7
    %v232 = vsub.s32 1, %v231
    %v233 = vrot.slane %v224, %v232
    %s236 = scalar_lea.vmem [#allocation9], 5
    %v237 = vld [vmem:[%s236] ss:$8 sm:$0x3]
    %v239 = vlaneseq
    %v240 = vshrl.u32 %v239, 7
    %v241 = vsub.s32 0, %v240
    %v242 = vrot.slane %v237, %v241
    %v243 = vlaneseq
    %v244 = vshrl.u32 %v243, 7
    %v245 = vsub.s32 1, %v244
    %v246 = vrot.slane %v237, %v245
    %s249 = scalar_lea.vmem [#allocation9], 6
    %v250 = vld [vmem:[%s249] ss:$8 sm:$0x3]
    %v252 = vlaneseq
    %v253 = vshrl.u32 %v252, 7
    %v254 = vsub.s32 0, %v253
    %v255 = vrot.slane %v250, %v254
    %v256 = vlaneseq
    %v257 = vshrl.u32 %v256, 7
    %v258 = vsub.s32 1, %v257
    %v259 = vrot.slane %v250, %v258
    %s262 = scalar_lea.vmem [#allocation9], 7
    %v263 = vld [vmem:[%s262] ss:$8 sm:$0x3]
    %v265 = vlaneseq
    %v266 = vshrl.u32 %v265, 7
    %v267 = vsub.s32 0, %v266
    %v268 = vrot.slane %v263, %v267
    %v269 = vlaneseq
    %v270 = vshrl.u32 %v269, 7
    %v271 = vsub.s32 1, %v270
    %v272 = vrot.slane %v263, %v271
    %v275 = vld [vmem:[#allocation3] sm:$0xff]
    %v276 = vld [vmem:[#allocation3 + $0x8] sm:$0xff]
    %v277 = vmax.f32 %v275, 0.0
    %v278 = vmax.f32 %v276, 0.0
    %279 = vrot.lane.b32.xlu0 %v277, 17
    %v280 = vpop.permute.xlu0 %279
    %281 = vrot.lane.b32.xlu0 %v278, 17
    %v282 = vpop.permute.xlu0 %281
    %v283 = vlaneseq
    %v284 = vand.u32 %v283, 127
    %vm285 = vcmp.lt.s32.totalorder %v284, 17
    %v286 = vsel %vm285, %v280, %v282
    %v287 = vsel %vm285, %v282, %v280
    %v288 = vmul.f32 %v287, %v74
    %v289 = vmul.f32 %v286, %v78
    %290 = vst [vmem:[#allocation2] sm:$0xff] %v288
    %291 = vst [vmem:[#allocation2 + $0x8] sm:$0xff] %v289
    %292 = vrot.lane.b32.xlu0 %v277, 16
    %v293 = vpop.permute.xlu0 %292
    %294 = vrot.lane.b32.xlu0 %v278, 16
    %v295 = vpop.permute.xlu0 %294
    %vm296 = vcmp.lt.s32.totalorder %v284, 16
    %v297 = vsel %vm296, %v293, %v295
    %v298 = vsel %vm296, %v295, %v293
    %v299 = vmul.f32 %v298, %v87
    %v300 = vmul.f32 %v297, %v91
    %301 = vst [vmem:[#allocation2 + $0x10] sm:$0xff] %v299
    %302 = vst [vmem:[#allocation2 + $0x18] sm:$0xff] %v300
    %303 = vrot.lane.b32.xlu0 %v277, 15
    %v304 = vpop.permute.xlu0 %303
    %305 = vrot.lane.b32.xlu0 %v278, 15
    %v306 = vpop.permute.xlu0 %305
    %vm307 = vcmp.lt.s32.totalorder %v284, 15
    %v308 = vsel %vm307, %v304, %v306
    %v309 = vsel %vm307, %v306, %v304
    %v310 = vmul.f32 %v309, %v100
    %v311 = vmul.f32 %v308, %v104
    %312 = vst [vmem:[#allocation2 + $0x20] sm:$0xff] %v310
    %313 = vst [vmem:[#allocation2 + $0x28] sm:$0xff] %v311
    %314 = vrot.lane.b32.xlu0 %v277, 1
    %v315 = vpop.permute.xlu0 %314
    %316 = vrot.lane.b32.xlu0 %v278, 1
    %v317 = vpop.permute.xlu0 %316
    %vm318 = vcmp.lt.s32.totalorder %v284, 1
    %v319 = vsel %vm318, %v315, %v317
    %v320 = vsel %vm318, %v317, %v315
    %v321 = vmul.f32 %v320, %v113
    %v322 = vmul.f32 %v319, %v117
    %323 = vst [vmem:[#allocation2 + $0x30] sm:$0xff] %v321
    %324 = vst [vmem:[#allocation2 + $0x38] sm:$0xff] %v322
    %325 = vst [vmem:[#allocation2 + $0x40] sm:$0xff] %v277
    %326 = vst [vmem:[#allocation2 + $0x48] sm:$0xff] %v278
    %327 = vrot.lane.b32.xlu0 %v277, 127
    %v328 = vpop.permute.xlu0 %327
    %329 = vrot.lane.b32.xlu0 %v278, 127
    %v330 = vpop.permute.xlu0 %329
    %vm331 = vcmp.lt.s32.totalorder %v284, 127
    %v332 = vsel %vm331, %v328, %v330
    %v333 = vsel %vm331, %v330, %v328
    %v334 = vmul.f32 %v332, %v126
    %v335 = vmul.f32 %v333, %v130
    %336 = vst [vmem:[#allocation2 + $0x50] sm:$0xff] %v334
    %337 = vst [vmem:[#allocation2 + $0x58] sm:$0xff] %v335
    %338 = vrot.lane.b32.xlu0 %v277, 113
    %v339 = vpop.permute.xlu0 %338
    %340 = vrot.lane.b32.xlu0 %v278, 113
    %v341 = vpop.permute.xlu0 %340
    %vm342 = vcmp.lt.s32.totalorder %v284, 113
    %v343 = vsel %vm342, %v339, %v341
    %v344 = vsel %vm342, %v341, %v339
    %v345 = vmul.f32 %v343, %v139
    %v346 = vmul.f32 %v344, %v143
    %347 = vst [vmem:[#allocation2 + $0x60] sm:$0xff] %v345
    %348 = vst [vmem:[#allocation2 + $0x68] sm:$0xff] %v346
    %349 = vrot.lane.b32.xlu0 %v277, 112
    %v350 = vpop.permute.xlu0 %349
    %351 = vrot.lane.b32.xlu0 %v278, 112
    %v352 = vpop.permute.xlu0 %351
    %vm353 = vcmp.lt.s32.totalorder %v284, 112
    %v354 = vsel %vm353, %v350, %v352
    %v355 = vsel %vm353, %v352, %v350
    %v356 = vmul.f32 %v354, %v152
    %v357 = vmul.f32 %v355, %v156
    %358 = vst [vmem:[#allocation2 + $0x70] sm:$0xff] %v356
    %359 = vst [vmem:[#allocation2 + $0x78] sm:$0xff] %v357
    %360 = vrot.lane.b32.xlu0 %v277, 111
    %v361 = vpop.permute.xlu0 %360
    %362 = vrot.lane.b32.xlu0 %v278, 111
    %v363 = vpop.permute.xlu0 %362
    %vm364 = vcmp.lt.s32.totalorder %v284, 111
    %v365 = vsel %vm364, %v361, %v363
    %v366 = vsel %vm364, %v363, %v361
    %v367 = vmul.f32 %v365, %v165
    %v368 = vmul.f32 %v366, %v169
    %369 = vst [vmem:[#allocation2 + $0x80] sm:$0xff] %v367
    %370 = vst [vmem:[#allocation2 + $0x88] sm:$0xff] %v368
    %v371 = vld [vmem:[#allocation6] sm:$0xff]
    %v372 = vld [vmem:[#allocation2] sm:$0xff]
    %v373 = vld [vmem:[#allocation2 + $0x8] sm:$0xff]
    %v374 = vld [vmem:[#allocation2 + $0x10] sm:$0xff]
    %v375 = vld [vmem:[#allocation2 + $0x18] sm:$0xff]
    %v376 = vld [vmem:[#allocation2 + $0x20] sm:$0xff]
    %v377 = vld [vmem:[#allocation2 + $0x28] sm:$0xff]
    %v378 = vld [vmem:[#allocation2 + $0x30] sm:$0xff]
    %v379 = vld [vmem:[#allocation2 + $0x38] sm:$0xff]
    %v380 = vld [vmem:[#allocation2 + $0x40] sm:$0xff]
    %v381 = vld [vmem:[#allocation2 + $0x48] sm:$0xff]
    %v382 = vld [vmem:[#allocation2 + $0x50] sm:$0xff]
    %v383 = vld [vmem:[#allocation2 + $0x58] sm:$0xff]
    %v384 = vld [vmem:[#allocation2 + $0x60] sm:$0xff]
    %v385 = vld [vmem:[#allocation2 + $0x68] sm:$0xff]
    %v386 = vld [vmem:[#allocation2 + $0x70] sm:$0xff]
    %v387 = vld [vmem:[#allocation2 + $0x78] sm:$0xff]
    %v388 = vld [vmem:[#allocation2 + $0x80] sm:$0xff]
    %v389 = vld [vmem:[#allocation2 + $0x88] sm:$0xff]
    %vm390 = vcmask 588800
    %v392 = vsel %vm390, %v371, 0
    %394 = vmatprep.subr.mxu0 %v373
    %395 = vmatpush1.msra.mxu0 %v372
    %396 = vmatprep.subr.mxu0 %v375
    %397 = vmatpush1.msra.mxu0 %v374
    %398 = vmatprep.subr.mxu0 %v377
    %399 = vmatpush1.msra.mxu0 %v376
    %400 = vmatprep.subr.mxu0 %v379
    %401 = vmatpush1.msra.mxu0 %v378
    %402 = vmatprep.subr.mxu0 %v381
    %403 = vmatpush1.msra.mxu0 %v380
    %404 = vmatprep.subr.mxu0 %v383
    %405 = vmatpush1.msra.mxu0 %v382
    %406 = vmatprep.subr.mxu0 %v385
    %407 = vmatpush1.msra.mxu0 %v384
    %408 = vmatprep.subr.mxu0 %v387
    %409 = vmatpush1.msra.mxu0 %v386
    %410 = vmatprep.subr.mxu0 %v389
    %411 = vmatpush1.msra.mxu0 %v388
    %412 = vmatprep.subr.mxu0 0.0
    %413 = vmatpush1.msra.mxu0 0.0
    %414 = vmatprep.subr.mxu0 0.0
    %415 = vmatpush1.msra.mxu0 0.0
    %416 = vmatprep.subr.mxu0 0.0
    %417 = vmatpush1.msra.mxu0 0.0
    %418 = vmatprep.subr.mxu0 0.0
    %419 = vmatpush1.msra.mxu0 0.0
    %420 = vmatprep.subr.mxu0 0.0
    %421 = vmatpush1.msra.mxu0 0.0
    %422 = vmatprep.subr.mxu0 0.0
    %423 = vmatpush1.msra.mxu0 0.0
    %424 = vmatprep.subr.mxu0 0.0
    %425 = vmatpush1.msra.mxu0 0.0
    %426 = vmatprep.subr.mxu0 0.0
    %427 = vmatpush1.msra.mxu0 0.0
    %428 = vmatprep.subr.mxu0 0.0
    %429 = vmatpush1.msra.mxu0 0.0
    %430 = vmatprep.subr.mxu0 0.0
    %431 = vmatpush1.msra.mxu0 0.0
    %432 = vmatprep.subr.mxu0 0.0
    %433 = vmatpush1.msra.mxu0 0.0
    %434 = vmatprep.subr.mxu0 0.0
    %435 = vmatpush1.msra.mxu0 0.0
    %436 = vmatprep.subr.mxu0 0.0
    %437 = vmatpush1.msra.mxu0 0.0
    %438 = vmatprep.subr.mxu0 0.0
    %439 = vmatpush1.msra.mxu0 0.0
    %440 = vmatprep.subr.mxu0 0.0
    %441 = vmatpush1.msra.mxu0 0.0
    %442 = vmatprep.subr.mxu0 0.0
    %443 = vmatpush1.msra.mxu0 0.0
    %444 = vmatprep.subr.mxu0 0.0
    %445 = vmatpush1.msra.mxu0 0.0
    %446 = vmatprep.subr.mxu0 0.0
    %447 = vmatpush1.msra.mxu0 0.0
    %448 = vmatprep.subr.mxu0 0.0
    %449 = vmatpush1.msra.mxu0 0.0
    %450 = vmatprep.subr.mxu0 0.0
    %451 = vmatpush1.msra.mxu0 0.0
    %452 = vmatprep.subr.mxu0 0.0
    %453 = vmatpush1.msra.mxu0 0.0
    %454 = vmatprep.subr.mxu0 0.0
    %455 = vmatpush1.msra.mxu0 0.0
    %456 = vmatprep.subr.mxu0 0.0
    %457 = vmatpush1.msra.mxu0 0.0
    %458 = vmatprep.mubr.f32.mxu0 0.0
    %459 = vmatmul.mubr.f32.gmra.mrb[0].mxu0 %v392
    %v460 = vpop.f32.mrb[0].mxu0
    %v461 = vadd.f32 0.0, %v460
    %v462 = vpop.f32.mrb[0].mxu0
    %v463 = vadd.f32 0.0, %v462
    %464 = vdwg.mxu0
    %v465 = vmax.f32 %v461, 0.0
    %v466 = vmax.f32 %v463, 0.0
    %467 = vrot.lane.b32.xlu0 %v465, 17
    %v468 = vpop.permute.xlu0 %467
    %469 = vrot.lane.b32.xlu0 %v466, 17
    %v470 = vpop.permute.xlu0 %469
    %v471 = vsel %vm285, %v468, %v470
    %v472 = vsel %vm285, %v470, %v468
    %v473 = vmul.f32 %v472, %v74
    %v474 = vmul.f32 %v471, %v78
    %475 = vst [vmem:[#allocation2] sm:$0xff] %v473
    %476 = vst [vmem:[#allocation2 + $0x8] sm:$0xff] %v474
    %477 = vrot.lane.b32.xlu0 %v465, 16
    %v478 = vpop.permute.xlu0 %477
    %479 = vrot.lane.b32.xlu0 %v466, 16
    %v480 = vpop.permute.xlu0 %479
    %v481 = vsel %vm296, %v478, %v480
    %v482 = vsel %vm296, %v480, %v478
    %v483 = vmul.f32 %v482, %v87
    %v484 = vmul.f32 %v481, %v91
    %485 = vst [vmem:[#allocation2 + $0x10] sm:$0xff] %v483
    %486 = vst [vmem:[#allocation2 + $0x18] sm:$0xff] %v484
    %487 = vrot.lane.b32.xlu0 %v465, 15
    %v488 = vpop.permute.xlu0 %487
    %489 = vrot.lane.b32.xlu0 %v466, 15
    %v490 = vpop.permute.xlu0 %489
    %v491 = vsel %vm307, %v488, %v490
    %v492 = vsel %vm307, %v490, %v488
    %v493 = vmul.f32 %v492, %v100
    %v494 = vmul.f32 %v491, %v104
    %495 = vst [vmem:[#allocation2 + $0x20] sm:$0xff] %v493
    %496 = vst [vmem:[#allocation2 + $0x28] sm:$0xff] %v494
    %497 = vrot.lane.b32.xlu0 %v465, 1
    %v498 = vpop.permute.xlu0 %497
    %499 = vrot.lane.b32.xlu0 %v466, 1
    %v500 = vpop.permute.xlu0 %499
    %v501 = vsel %vm318, %v498, %v500
    %v502 = vsel %vm318, %v500, %v498
    %v503 = vmul.f32 %v502, %v113
    %v504 = vmul.f32 %v501, %v117
    %505 = vst [vmem:[#allocation2 + $0x30] sm:$0xff] %v503
    %506 = vst [vmem:[#allocation2 + $0x38] sm:$0xff] %v504
    %507 = vst [vmem:[#allocation2 + $0x40] sm:$0xff] %v465
    %508 = vst [vmem:[#allocation2 + $0x48] sm:$0xff] %v466
    %509 = vrot.lane.b32.xlu0 %v465, 127
    %v510 = vpop.permute.xlu0 %509
    %511 = vrot.lane.b32.xlu0 %v466, 127
    %v512 = vpop.permute.xlu0 %511
    %v513 = vsel %vm331, %v510, %v512
    %v514 = vsel %vm331, %v512, %v510
    %v515 = vmul.f32 %v513, %v126
    %v516 = vmul.f32 %v514, %v130
    %517 = vst [vmem:[#allocation2 + $0x50] sm:$0xff] %v515
    %518 = vst [vmem:[#allocation2 + $0x58] sm:$0xff] %v516
    %519 = vrot.lane.b32.xlu0 %v465, 113
    %v520 = vpop.permute.xlu0 %519
    %521 = vrot.lane.b32.xlu0 %v466, 113
    %v522 = vpop.permute.xlu0 %521
    %v523 = vsel %vm342, %v520, %v522
    %v524 = vsel %vm342, %v522, %v520
    %v525 = vmul.f32 %v523, %v139
    %v526 = vmul.f32 %v524, %v143
    %527 = vst [vmem:[#allocation2 + $0x60] sm:$0xff] %v525
    %528 = vst [vmem:[#allocation2 + $0x68] sm:$0xff] %v526
    %529 = vrot.lane.b32.xlu0 %v465, 112
    %v530 = vpop.permute.xlu0 %529
    %531 = vrot.lane.b32.xlu0 %v466, 112
    %v532 = vpop.permute.xlu0 %531
    %v533 = vsel %vm353, %v530, %v532
    %v534 = vsel %vm353, %v532, %v530
    %v535 = vmul.f32 %v533, %v152
    %v536 = vmul.f32 %v534, %v156
    %537 = vst [vmem:[#allocation2 + $0x70] sm:$0xff] %v535
    %538 = vst [vmem:[#allocation2 + $0x78] sm:$0xff] %v536
    %539 = vrot.lane.b32.xlu0 %v465, 111
    %v540 = vpop.permute.xlu0 %539
    %541 = vrot.lane.b32.xlu0 %v466, 111
    %v542 = vpop.permute.xlu0 %541
    %v543 = vsel %vm364, %v540, %v542
    %v544 = vsel %vm364, %v542, %v540
    %v545 = vmul.f32 %v543, %v165
    %v546 = vmul.f32 %v544, %v169
    %547 = vst [vmem:[#allocation2 + $0x80] sm:$0xff] %v545
    %548 = vst [vmem:[#allocation2 + $0x88] sm:$0xff] %v546
    %s549 = scalar_lea.vmem [#allocation6], 8
    %v550 = vld [vmem:[%s549] sm:$0xff]
    %v551 = vld [vmem:[#allocation2] sm:$0xff]
    %v552 = vld [vmem:[#allocation2 + $0x8] sm:$0xff]
    %v553 = vld [vmem:[#allocation2 + $0x10] sm:$0xff]
    %v554 = vld [vmem:[#allocation2 + $0x18] sm:$0xff]
    %v555 = vld [vmem:[#allocation2 + $0x20] sm:$0xff]
    %v556 = vld [vmem:[#allocation2 + $0x28] sm:$0xff]
    %v557 = vld [vmem:[#allocation2 + $0x30] sm:$0xff]
    %v558 = vld [vmem:[#allocation2 + $0x38] sm:$0xff]
    %v559 = vld [vmem:[#allocation2 + $0x40] sm:$0xff]
    %v560 = vld [vmem:[#allocation2 + $0x48] sm:$0xff]
    %v561 = vld [vmem:[#allocation2 + $0x50] sm:$0xff]
    %v562 = vld [vmem:[#allocation2 + $0x58] sm:$0xff]
    %v563 = vld [vmem:[#allocation2 + $0x60] sm:$0xff]
    %v564 = vld [vmem:[#allocation2 + $0x68] sm:$0xff]
    %v565 = vld [vmem:[#allocation2 + $0x70] sm:$0xff]
    %v566 = vld [vmem:[#allocation2 + $0x78] sm:$0xff]
    %v567 = vld [vmem:[#allocation2 + $0x80] sm:$0xff]
    %v568 = vld [vmem:[#allocation2 + $0x88] sm:$0xff]
    %v570 = vsel %vm390, %v550, 0
    %572 = vmatprep.subr.mxu0 %v552
    %573 = vmatpush1.msra.mxu0 %v551
    %574 = vmatprep.subr.mxu0 %v554
    %575 = vmatpush1.msra.mxu0 %v553
    %576 = vmatprep.subr.mxu0 %v556
    %577 = vmatpush1.msra.mxu0 %v555
    %578 = vmatprep.subr.mxu0 %v558
    %579 = vmatpush1.msra.mxu0 %v557
    %580 = vmatprep.subr.mxu0 %v560
    %581 = vmatpush1.msra.mxu0 %v559
    %582 = vmatprep.subr.mxu0 %v562
    %583 = vmatpush1.msra.mxu0 %v561
    %584 = vmatprep.subr.mxu0 %v564
    %585 = vmatpush1.msra.mxu0 %v563
    %586 = vmatprep.subr.mxu0 %v566
    %587 = vmatpush1.msra.mxu0 %v565
    %588 = vmatprep.subr.mxu0 %v568
    %589 = vmatpush1.msra.mxu0 %v567
    %590 = vmatprep.subr.mxu0 0.0
    %591 = vmatpush1.msra.mxu0 0.0
    %592 = vmatprep.subr.mxu0 0.0
    %593 = vmatpush1.msra.mxu0 0.0
    %594 = vmatprep.subr.mxu0 0.0
    %595 = vmatpush1.msra.mxu0 0.0
    %596 = vmatprep.subr.mxu0 0.0
    %597 = vmatpush1.msra.mxu0 0.0
    %598 = vmatprep.subr.mxu0 0.0
    %599 = vmatpush1.msra.mxu0 0.0
    %600 = vmatprep.subr.mxu0 0.0
    %601 = vmatpush1.msra.mxu0 0.0
    %602 = vmatprep.subr.mxu0 0.0
    %603 = vmatpush1.msra.mxu0 0.0
    %604 = vmatprep.subr.mxu0 0.0
    %605 = vmatpush1.msra.mxu0 0.0
    %606 = vmatprep.subr.mxu0 0.0
    %607 = vmatpush1.msra.mxu0 0.0
    %608 = vmatprep.subr.mxu0 0.0
    %609 = vmatpush1.msra.mxu0 0.0
    %610 = vmatprep.subr.mxu0 0.0
    %611 = vmatpush1.msra.mxu0 0.0
    %612 = vmatprep.subr.mxu0 0.0
    %613 = vmatpush1.msra.mxu0 0.0
    %614 = vmatprep.subr.mxu0 0.0
    %615 = vmatpush1.msra.mxu0 0.0
    %616 = vmatprep.subr.mxu0 0.0
    %617 = vmatpush1.msra.mxu0 0.0
    %618 = vmatprep.subr.mxu0 0.0
    %619 = vmatpush1.msra.mxu0 0.0
    %620 = vmatprep.subr.mxu0 0.0
    %621 = vmatpush1.msra.mxu0 0.0
    %622 = vmatprep.subr.mxu0 0.0
    %623 = vmatpush1.msra.mxu0 0.0
    %624 = vmatprep.subr.mxu0 0.0
    %625 = vmatpush1.msra.mxu0 0.0
    %626 = vmatprep.subr.mxu0 0.0
    %627 = vmatpush1.msra.mxu0 0.0
    %628 = vmatprep.subr.mxu0 0.0
    %629 = vmatpush1.msra.mxu0 0.0
    %630 = vmatprep.subr.mxu0 0.0
    %631 = vmatpush1.msra.mxu0 0.0
    %632 = vmatprep.subr.mxu0 0.0
    %633 = vmatpush1.msra.mxu0 0.0
    %634 = vmatprep.subr.mxu0 0.0
    %635 = vmatpush1.msra.mxu0 0.0
    %636 = vmatprep.mubr.f32.mxu0 0.0
    %637 = vmatmul.mubr.f32.gmra.mrb[0].mxu0 %v570
    %v638 = vpop.f32.mrb[0].mxu0
    %v639 = vadd.f32 %v275, %v638
    %v640 = vpop.f32.mrb[0].mxu0
    %v641 = vadd.f32 %v276, %v640
    %642 = vdwg.mxu0
    %v643 = vmax.f32 %v639, 0.0
    %v644 = vmax.f32 %v641, 0.0
    %645 = vrot.lane.b32.xlu0 %v643, 17
    %v646 = vpop.permute.xlu0 %645
    %647 = vrot.lane.b32.xlu0 %v644, 17
    %v648 = vpop.permute.xlu0 %647
    %v649 = vsel %vm285, %v646, %v648
    %v650 = vsel %vm285, %v648, %v646
    %v651 = vmul.f32 %v650, %v74
    %v652 = vmul.f32 %v649, %v78
    %653 = vst [vmem:[#allocation2] sm:$0xff] %v651
    %654 = vst [vmem:[#allocation2 + $0x8] sm:$0xff] %v652
    %655 = vrot.lane.b32.xlu0 %v643, 16
    %v656 = vpop.permute.xlu0 %655
    %657 = vrot.lane.b32.xlu0 %v644, 16
    %v658 = vpop.permute.xlu0 %657
    %v659 = vsel %vm296, %v656, %v658
    %v660 = vsel %vm296, %v658, %v656
    %v661 = vmul.f32 %v660, %v87
    %v662 = vmul.f32 %v659, %v91
    %663 = vst [vmem:[#allocation2 + $0x10] sm:$0xff] %v661
    %664 = vst [vmem:[#allocation2 + $0x18] sm:$0xff] %v662
    %665 = vrot.lane.b32.xlu0 %v643, 15
    %v666 = vpop.permute.xlu0 %665
    %667 = vrot.lane.b32.xlu0 %v644, 15
    %v668 = vpop.permute.xlu0 %667
    %v669 = vsel %vm307, %v666, %v668
    %v670 = vsel %vm307, %v668, %v666
    %v671 = vmul.f32 %v670, %v100
    %v672 = vmul.f32 %v669, %v104
    %673 = vst [vmem:[#allocation2 + $0x20] sm:$0xff] %v671
    %674 = vst [vmem:[#allocation2 + $0x28] sm:$0xff] %v672
    %675 = vrot.lane.b32.xlu0 %v643, 1
    %v676 = vpop.permute.xlu0 %675
    %677 = vrot.lane.b32.xlu0 %v644, 1
    %v678 = vpop.permute.xlu0 %677
    %v679 = vsel %vm318, %v676, %v678
    %v680 = vsel %vm318, %v678, %v676
    %v681 = vmul.f32 %v680, %v113
    %v682 = vmul.f32 %v679, %v117
    %683 = vst [vmem:[#allocation2 + $0x30] sm:$0xff] %v681
    %684 = vst [vmem:[#allocation2 + $0x38] sm:$0xff] %v682
    %685 = vst [vmem:[#allocation2 + $0x40] sm:$0xff] %v643
    %686 = vst [vmem:[#allocation2 + $0x48] sm:$0xff] %v644
    %687 = vrot.lane.b32.xlu0 %v643, 127
    %v688 = vpop.permute.xlu0 %687
    %689 = vrot.lane.b32.xlu0 %v644, 127
    %v690 = vpop.permute.xlu0 %689
    %v691 = vsel %vm331, %v688, %v690
    %v692 = vsel %vm331, %v690, %v688
    %v693 = vmul.f32 %v691, %v126
    %v694 = vmul.f32 %v692, %v130
    %695 = vst [vmem:[#allocation2 + $0x50] sm:$0xff] %v693
    %696 = vst [vmem:[#allocation2 + $0x58] sm:$0xff] %v694
    %697 = vrot.lane.b32.xlu0 %v643, 113
    %v698 = vpop.permute.xlu0 %697
    %699 = vrot.lane.b32.xlu0 %v644, 113
    %v700 = vpop.permute.xlu0 %699
    %v701 = vsel %vm342, %v698, %v700
    %v702 = vsel %vm342, %v700, %v698
    %v703 = vmul.f32 %v701, %v139
    %v704 = vmul.f32 %v702, %v143
    %705 = vst [vmem:[#allocation2 + $0x60] sm:$0xff] %v703
    %706 = vst [vmem:[#allocation2 + $0x68] sm:$0xff] %v704
    %707 = vrot.lane.b32.xlu0 %v643, 112
    %v708 = vpop.permute.xlu0 %707
    %709 = vrot.lane.b32.xlu0 %v644, 112
    %v710 = vpop.permute.xlu0 %709
    %v711 = vsel %vm353, %v708, %v710
    %v712 = vsel %vm353, %v710, %v708
    %v713 = vmul.f32 %v711, %v152
    %v714 = vmul.f32 %v712, %v156
    %715 = vst [vmem:[#allocation2 + $0x70] sm:$0xff] %v713
    %716 = vst [vmem:[#allocation2 + $0x78] sm:$0xff] %v714
    %717 = vrot.lane.b32.xlu0 %v643, 111
    %v718 = vpop.permute.xlu0 %717
    %719 = vrot.lane.b32.xlu0 %v644, 111
    %v720 = vpop.permute.xlu0 %719
    %v721 = vsel %vm364, %v718, %v720
    %v722 = vsel %vm364, %v720, %v718
    %v723 = vmul.f32 %v721, %v165
    %v724 = vmul.f32 %v722, %v169
    %725 = vst [vmem:[#allocation2 + $0x80] sm:$0xff] %v723
    %726 = vst [vmem:[#allocation2 + $0x88] sm:$0xff] %v724
    %s727 = scalar_lea.vmem [#allocation6], 16
    %v728 = vld [vmem:[%s727] sm:$0xff]
    %v729 = vld [vmem:[#allocation2] sm:$0xff]
    %v730 = vld [vmem:[#allocation2 + $0x8] sm:$0xff]
    %v731 = vld [vmem:[#allocation2 + $0x10] sm:$0xff]
    %v732 = vld [vmem:[#allocation2 + $0x18] sm:$0xff]
    %v733 = vld [vmem:[#allocation2 + $0x20] sm:$0xff]
    %v734 = vld [vmem:[#allocation2 + $0x28] sm:$0xff]
    %v735 = vld [vmem:[#allocation2 + $0x30] sm:$0xff]
    %v736 = vld [vmem:[#allocation2 + $0x38] sm:$0xff]
    %v737 = vld [vmem:[#allocation2 + $0x40] sm:$0xff]
    %v738 = vld [vmem:[#allocation2 + $0x48] sm:$0xff]
    %v739 = vld [vmem:[#allocation2 + $0x50] sm:$0xff]
    %v740 = vld [vmem:[#allocation2 + $0x58] sm:$0xff]
    %v741 = vld [vmem:[#allocation2 + $0x60] sm:$0xff]
    %v742 = vld [vmem:[#allocation2 + $0x68] sm:$0xff]
    %v743 = vld [vmem:[#allocation2 + $0x70] sm:$0xff]
    %v744 = vld [vmem:[#allocation2 + $0x78] sm:$0xff]
    %v745 = vld [vmem:[#allocation2 + $0x80] sm:$0xff]
    %v746 = vld [vmem:[#allocation2 + $0x88] sm:$0xff]
    %v748 = vsel %vm390, %v728, 0
    %750 = vmatprep.subr.mxu0 %v730
    %751 = vmatpush1.msra.mxu0 %v729
    %752 = vmatprep.subr.mxu0 %v732
    %753 = vmatpush1.msra.mxu0 %v731
    %754 = vmatprep.subr.mxu0 %v734
    %755 = vmatpush1.msra.mxu0 %v733
    %756 = vmatprep.subr.mxu0 %v736
    %757 = vmatpush1.msra.mxu0 %v735
    %758 = vmatprep.subr.mxu0 %v738
    %759 = vmatpush1.msra.mxu0 %v737
    %760 = vmatprep.subr.mxu0 %v740
    %761 = vmatpush1.msra.mxu0 %v739
    %762 = vmatprep.subr.mxu0 %v742
    %763 = vmatpush1.msra.mxu0 %v741
    %764 = vmatprep.subr.mxu0 %v744
    %765 = vmatpush1.msra.mxu0 %v743
    %766 = vmatprep.subr.mxu0 %v746
    %767 = vmatpush1.msra.mxu0 %v745
    %768 = vmatprep.subr.mxu0 0.0
    %769 = vmatpush1.msra.mxu0 0.0
    %770 = vmatprep.subr.mxu0 0.0
    %771 = vmatpush1.msra.mxu0 0.0
    %772 = vmatprep.subr.mxu0 0.0
    %773 = vmatpush1.msra.mxu0 0.0
    %774 = vmatprep.subr.mxu0 0.0
    %775 = vmatpush1.msra.mxu0 0.0
    %776 = vmatprep.subr.mxu0 0.0
    %777 = vmatpush1.msra.mxu0 0.0
    %778 = vmatprep.subr.mxu0 0.0
    %779 = vmatpush1.msra.mxu0 0.0
    %780 = vmatprep.subr.mxu0 0.0
    %781 = vmatpush1.msra.mxu0 0.0
    %782 = vmatprep.subr.mxu0 0.0
    %783 = vmatpush1.msra.mxu0 0.0
    %784 = vmatprep.subr.mxu0 0.0
    %785 = vmatpush1.msra.mxu0 0.0
    %786 = vmatprep.subr.mxu0 0.0
    %787 = vmatpush1.msra.mxu0 0.0
    %788 = vmatprep.subr.mxu0 0.0
    %789 = vmatpush1.msra.mxu0 0.0
    %790 = vmatprep.subr.mxu0 0.0
    %791 = vmatpush1.msra.mxu0 0.0
    %792 = vmatprep.subr.mxu0 0.0
    %793 = vmatpush1.msra.mxu0 0.0
    %794 = vmatprep.subr.mxu0 0.0
    %795 = vmatpush1.msra.mxu0 0.0
    %796 = vmatprep.subr.mxu0 0.0
    %797 = vmatpush1.msra.mxu0 0.0
    %798 = vmatprep.subr.mxu0 0.0
    %799 = vmatpush1.msra.mxu0 0.0
    %800 = vmatprep.subr.mxu0 0.0
    %801 = vmatpush1.msra.mxu0 0.0
    %802 = vmatprep.subr.mxu0 0.0
    %803 = vmatpush1.msra.mxu0 0.0
    %804 = vmatprep.subr.mxu0 0.0
    %805 = vmatpush1.msra.mxu0 0.0
    %806 = vmatprep.subr.mxu0 0.0
    %807 = vmatpush1.msra.mxu0 0.0
    %808 = vmatprep.subr.mxu0 0.0
    %809 = vmatpush1.msra.mxu0 0.0
    %810 = vmatprep.subr.mxu0 0.0
    %811 = vmatpush1.msra.mxu0 0.0
    %812 = vmatprep.subr.mxu0 0.0
    %813 = vmatpush1.msra.mxu0 0.0
    %814 = vmatprep.mubr.f32.mxu0 0.0
    %815 = vmatmul.mubr.f32.gmra.mrb[0].mxu0 %v748
    %v816 = vpop.f32.mrb[0].mxu0
    %v817 = vadd.f32 0.0, %v816
    %v818 = vpop.f32.mrb[0].mxu0
    %v819 = vadd.f32 0.0, %v818
    %820 = vdwg.mxu0
    %v821 = vmax.f32 %v817, 0.0
    %v822 = vmax.f32 %v819, 0.0
    %823 = vrot.lane.b32.xlu0 %v821, 17
    %v824 = vpop.permute.xlu0 %823
    %825 = vrot.lane.b32.xlu0 %v822, 17
    %v826 = vpop.permute.xlu0 %825
    %v827 = vsel %vm285, %v824, %v826
    %v828 = vsel %vm285, %v826, %v824
    %v829 = vmul.f32 %v828, %v74
    %v830 = vmul.f32 %v827, %v78
    %831 = vst [vmem:[#allocation2] sm:$0xff] %v829
    %832 = vst [vmem:[#allocation2 + $0x8] sm:$0xff] %v830
    %833 = vrot.lane.b32.xlu0 %v821, 16
    %v834 = vpop.permute.xlu0 %833
    %835 = vrot.lane.b32.xlu0 %v822, 16
    %v836 = vpop.permute.xlu0 %835
    %v837 = vsel %vm296, %v834, %v836
    %v838 = vsel %vm296, %v836, %v834
    %v839 = vmul.f32 %v838, %v87
    %v840 = vmul.f32 %v837, %v91
    %841 = vst [vmem:[#allocation2 + $0x10] sm:$0xff] %v839
    %842 = vst [vmem:[#allocation2 + $0x18] sm:$0xff] %v840
    %843 = vrot.lane.b32.xlu0 %v821, 15
    %v844 = vpop.permute.xlu0 %843
    %845 = vrot.lane.b32.xlu0 %v822, 15
    %v846 = vpop.permute.xlu0 %845
    %v847 = vsel %vm307, %v844, %v846
    %v848 = vsel %vm307, %v846, %v844
    %v849 = vmul.f32 %v848, %v100
    %v850 = vmul.f32 %v847, %v104
    %851 = vst [vmem:[#allocation2 + $0x20] sm:$0xff] %v849
    %852 = vst [vmem:[#allocation2 + $0x28] sm:$0xff] %v850
    %853 = vrot.lane.b32.xlu0 %v821, 1
    %v854 = vpop.permute.xlu0 %853
    %855 = vrot.lane.b32.xlu0 %v822, 1
    %v856 = vpop.permute.xlu0 %855
    %v857 = vsel %vm318, %v854, %v856
    %v858 = vsel %vm318, %v856, %v854
    %v859 = vmul.f32 %v858, %v113
    %v860 = vmul.f32 %v857, %v117
    %861 = vst [vmem:[#allocation2 + $0x30] sm:$0xff] %v859
    %862 = vst [vmem:[#allocation2 + $0x38] sm:$0xff] %v860
    %863 = vst [vmem:[#allocation2 + $0x40] sm:$0xff] %v821
    %864 = vst [vmem:[#allocation2 + $0x48] sm:$0xff] %v822
    %865 = vrot.lane.b32.xlu0 %v821, 127
    %v866 = vpop.permute.xlu0 %865
    %867 = vrot.lane.b32.xlu0 %v822, 127
    %v868 = vpop.permute.xlu0 %867
    %v869 = vsel %vm331, %v866, %v868
    %v870 = vsel %vm331, %v868, %v866
    %v871 = vmul.f32 %v869, %v126
    %v872 = vmul.f32 %v870, %v130
    %873 = vst [vmem:[#allocation2 + $0x50] sm:$0xff] %v871
    %874 = vst [vmem:[#allocation2 + $0x58] sm:$0xff] %v872
    %875 = vrot.lane.b32.xlu0 %v821, 113
    %v876 = vpop.permute.xlu0 %875
    %877 = vrot.lane.b32.xlu0 %v822, 113
    %v878 = vpop.permute.xlu0 %877
    %v879 = vsel %vm342, %v876, %v878
    %v880 = vsel %vm342, %v878, %v876
    %v881 = vmul.f32 %v879, %v139
    %v882 = vmul.f32 %v880, %v143
    %883 = vst [vmem:[#allocation2 + $0x60] sm:$0xff] %v881
    %884 = vst [vmem:[#allocation2 + $0x68] sm:$0xff] %v882
    %885 = vrot.lane.b32.xlu0 %v821, 112
    %v886 = vpop.permute.xlu0 %885
    %887 = vrot.lane.b32.xlu0 %v822, 112
    %v888 = vpop.permute.xlu0 %887
    %v889 = vsel %vm353, %v886, %v888
    %v890 = vsel %vm353, %v888, %v886
    %v891 = vmul.f32 %v889, %v152
    %v892 = vmul.f32 %v890, %v156
    %893 = vst [vmem:[#allocation2 + $0x70] sm:$0xff] %v891
    %894 = vst [vmem:[#allocation2 + $0x78] sm:$0xff] %v892
    %895 = vrot.lane.b32.xlu0 %v821, 111
    %v896 = vpop.permute.xlu0 %895
    %897 = vrot.lane.b32.xlu0 %v822, 111
    %v898 = vpop.permute.xlu0 %897
    %v899 = vsel %vm364, %v896, %v898
    %v900 = vsel %vm364, %v898, %v896
    %v901 = vmul.f32 %v899, %v165
    %v902 = vmul.f32 %v900, %v169
    %903 = vst [vmem:[#allocation2 + $0x80] sm:$0xff] %v901
    %904 = vst [vmem:[#allocation2 + $0x88] sm:$0xff] %v902
    %s905 = scalar_lea.vmem [#allocation6], 24
    %v906 = vld [vmem:[%s905] sm:$0xff]
    %v907 = vld [vmem:[#allocation2] sm:$0xff]
    %v908 = vld [vmem:[#allocation2 + $0x8] sm:$0xff]
    %v909 = vld [vmem:[#allocation2 + $0x10] sm:$0xff]
    %v910 = vld [vmem:[#allocation2 + $0x18] sm:$0xff]
    %v911 = vld [vmem:[#allocation2 + $0x20] sm:$0xff]
    %v912 = vld [vmem:[#allocation2 + $0x28] sm:$0xff]
    %v913 = vld [vmem:[#allocation2 + $0x30] sm:$0xff]
    %v914 = vld [vmem:[#allocation2 + $0x38] sm:$0xff]
    %v915 = vld [vmem:[#allocation2 + $0x40] sm:$0xff]
    %v916 = vld [vmem:[#allocation2 + $0x48] sm:$0xff]
    %v917 = vld [vmem:[#allocation2 + $0x50] sm:$0xff]
    %v918 = vld [vmem:[#allocation2 + $0x58] sm:$0xff]
    %v919 = vld [vmem:[#allocation2 + $0x60] sm:$0xff]
    %v920 = vld [vmem:[#allocation2 + $0x68] sm:$0xff]
    %v921 = vld [vmem:[#allocation2 + $0x70] sm:$0xff]
    %v922 = vld [vmem:[#allocation2 + $0x78] sm:$0xff]
    %v923 = vld [vmem:[#allocation2 + $0x80] sm:$0xff]
    %v924 = vld [vmem:[#allocation2 + $0x88] sm:$0xff]
    %v926 = vsel %vm390, %v906, 0
    %928 = vmatprep.subr.mxu0 %v908
    %929 = vmatpush1.msra.mxu0 %v907
    %930 = vmatprep.subr.mxu0 %v910
    %931 = vmatpush1.msra.mxu0 %v909
    %932 = vmatprep.subr.mxu0 %v912
    %933 = vmatpush1.msra.mxu0 %v911
    %934 = vmatprep.subr.mxu0 %v914
    %935 = vmatpush1.msra.mxu0 %v913
    %936 = vmatprep.subr.mxu0 %v916
    %937 = vmatpush1.msra.mxu0 %v915
    %938 = vmatprep.subr.mxu0 %v918
    %939 = vmatpush1.msra.mxu0 %v917
    %940 = vmatprep.subr.mxu0 %v920
    %941 = vmatpush1.msra.mxu0 %v919
    %942 = vmatprep.subr.mxu0 %v922
    %943 = vmatpush1.msra.mxu0 %v921
    %944 = vmatprep.subr.mxu0 %v924
    %945 = vmatpush1.msra.mxu0 %v923
    %946 = vmatprep.subr.mxu0 0.0
    %947 = vmatpush1.msra.mxu0 0.0
    %948 = vmatprep.subr.mxu0 0.0
    %949 = vmatpush1.msra.mxu0 0.0
    %950 = vmatprep.subr.mxu0 0.0
    %951 = vmatpush1.msra.mxu0 0.0
    %952 = vmatprep.subr.mxu0 0.0
    %953 = vmatpush1.msra.mxu0 0.0
    %954 = vmatprep.subr.mxu0 0.0
    %955 = vmatpush1.msra.mxu0 0.0
    %956 = vmatprep.subr.mxu0 0.0
    %957 = vmatpush1.msra.mxu0 0.0
    %958 = vmatprep.subr.mxu0 0.0
    %959 = vmatpush1.msra.mxu0 0.0
    %960 = vmatprep.subr.mxu0 0.0
    %961 = vmatpush1.msra.mxu0 0.0
    %962 = vmatprep.subr.mxu0 0.0
    %963 = vmatpush1.msra.mxu0 0.0
    %964 = vmatprep.subr.mxu0 0.0
    %965 = vmatpush1.msra.mxu0 0.0
    %966 = vmatprep.subr.mxu0 0.0
    %967 = vmatpush1.msra.mxu0 0.0
    %968 = vmatprep.subr.mxu0 0.0
    %969 = vmatpush1.msra.mxu0 0.0
    %970 = vmatprep.subr.mxu0 0.0
    %971 = vmatpush1.msra.mxu0 0.0
    %972 = vmatprep.subr.mxu0 0.0
    %973 = vmatpush1.msra.mxu0 0.0
    %974 = vmatprep.subr.mxu0 0.0
    %975 = vmatpush1.msra.mxu0 0.0
    %976 = vmatprep.subr.mxu0 0.0
    %977 = vmatpush1.msra.mxu0 0.0
    %978 = vmatprep.subr.mxu0 0.0
    %979 = vmatpush1.msra.mxu0 0.0
    %980 = vmatprep.subr.mxu0 0.0
    %981 = vmatpush1.msra.mxu0 0.0
    %982 = vmatprep.subr.mxu0 0.0
    %983 = vmatpush1.msra.mxu0 0.0
    %984 = vmatprep.subr.mxu0 0.0
    %985 = vmatpush1.msra.mxu0 0.0
    %986 = vmatprep.subr.mxu0 0.0
    %987 = vmatpush1.msra.mxu0 0.0
    %988 = vmatprep.subr.mxu0 0.0
    %989 = vmatpush1.msra.mxu0 0.0
    %990 = vmatprep.subr.mxu0 0.0
    %991 = vmatpush1.msra.mxu0 0.0
    %992 = vmatprep.mubr.f32.mxu0 0.0
    %993 = vmatmul.mubr.f32.gmra.mrb[0].mxu0 %v926
    %v994 = vpop.f32.mrb[0].mxu0
    %v995 = vadd.f32 %v639, %v994
    %v996 = vpop.f32.mrb[0].mxu0
    %v997 = vadd.f32 %v641, %v996
    %998 = vdwg.mxu0
    %v999 = vmax.f32 %v995, 0.0
    %v1000 = vmax.f32 %v997, 0.0
    %1001 = vrot.lane.b32.xlu0 %v999, 32
    %v1002 = vpop.permute.xlu0 %1001
    %1003 = vrot.lane.b32.xlu0 %v1000, 32
    %v1004 = vpop.permute.xlu0 %1003
    %vm1005 = vcmp.lt.s32.totalorder %v284, 32
    %v1006 = vsel %vm1005, %v1002, %v1004
    %v1007 = vsel %vm1005, %v1004, %v1002
    %v1008 = vadd.f32 %v1007, %v177
    %v1009 = vadd.f32 %v1006, %v181
    %v1010 = vmax.f32 %v999, %v1008
    %v1011 = vmax.f32 %v1000, %v1009
    %1012 = vrot.lane.b32.xlu0 %v999, 16
    %v1013 = vpop.permute.xlu0 %1012
    %1014 = vrot.lane.b32.xlu0 %v1000, 16
    %v1015 = vpop.permute.xlu0 %1014
    %v1016 = vsel %vm296, %v1013, %v1015
    %v1017 = vsel %vm296, %v1015, %v1013
    %v1018 = vadd.f32 %v1017, %v190
    %v1019 = vadd.f32 %v1016, %v194
    %v1020 = vmax.f32 %v1010, %v1018
    %v1021 = vmax.f32 %v1011, %v1019
    %1022 = vrot.lane.b32.xlu0 %v999, 112
    %v1023 = vpop.permute.xlu0 %1022
    %1024 = vrot.lane.b32.xlu0 %v1000, 112
    %v1025 = vpop.permute.xlu0 %1024
    %v1026 = vsel %vm353, %v1023, %v1025
    %v1027 = vsel %vm353, %v1025, %v1023
    %v1028 = vadd.f32 %v1026, %v203
    %v1029 = vadd.f32 %v1027, %v207
    %v1030 = vmax.f32 %v1020, %v1028
    %v1031 = vmax.f32 %v1021, %v1029
    %1032 = vrot.lane.b32.xlu0 %v999, 96
    %v1033 = vpop.permute.xlu0 %1032
    %1034 = vrot.lane.b32.xlu0 %v1000, 96
    %v1035 = vpop.permute.xlu0 %1034
    %vm1036 = vcmp.lt.s32.totalorder %v284, 96
    %v1037 = vsel %vm1036, %v1033, %v1035
    %v1038 = vsel %vm1036, %v1035, %v1033
    %v1039 = vadd.f32 %v1037, %v216
    %v1040 = vadd.f32 %v1038, %v220
    %v1041 = vmax.f32 %v1030, %v1039
    %v1042 = vmax.f32 %v1031, %v1040
    %1043 = vrot.lane.b32.xlu0 %v1041, 2
    %v1044 = vpop.permute.xlu0 %1043
    %1045 = vrot.lane.b32.xlu0 %v1042, 2
    %v1046 = vpop.permute.xlu0 %1045
    %vm1047 = vcmp.lt.s32.totalorder %v284, 2
    %v1048 = vsel %vm1047, %v1044, %v1046
    %v1049 = vsel %vm1047, %v1046, %v1044
    %v1050 = vadd.f32 %v1049, %v229
    %v1051 = vadd.f32 %v1048, %v233
    %v1052 = vmax.f32 %v1041, %v1050
    %v1053 = vmax.f32 %v1042, %v1051
    %1054 = vrot.lane.b32.xlu0 %v1041, 1
    %v1055 = vpop.permute.xlu0 %1054
    %1056 = vrot.lane.b32.xlu0 %v1042, 1
    %v1057 = vpop.permute.xlu0 %1056
    %v1058 = vsel %vm318, %v1055, %v1057
    %v1059 = vsel %vm318, %v1057, %v1055
    %v1060 = vadd.f32 %v1059, %v242
    %v1061 = vadd.f32 %v1058, %v246
    %v1062 = vmax.f32 %v1052, %v1060
    %v1063 = vmax.f32 %v1053, %v1061
    %1064 = vrot.lane.b32.xlu0 %v1041, 127
    %v1065 = vpop.permute.xlu0 %1064
    %1066 = vrot.lane.b32.xlu0 %v1042, 127
    %v1067 = vpop.permute.xlu0 %1066
    %v1068 = vsel %vm331, %v1065, %v1067
    %v1069 = vsel %vm331, %v1067, %v1065
    %v1070 = vadd.f32 %v1068, %v255
    %v1071 = vadd.f32 %v1069, %v259
    %v1072 = vmax.f32 %v1062, %v1070
    %v1073 = vmax.f32 %v1063, %v1071
    %1074 = vrot.lane.b32.xlu0 %v1041, 126
    %v1075 = vpop.permute.xlu0 %1074
    %1076 = vrot.lane.b32.xlu0 %v1042, 126
    %v1077 = vpop.permute.xlu0 %1076
    %vm1078 = vcmp.lt.s32.totalorder %v284, 126
    %v1079 = vsel %vm1078, %v1075, %v1077
    %v1080 = vsel %vm1078, %v1077, %v1075
    %v1081 = vadd.f32 %v1079, %v268
    %v1082 = vadd.f32 %v1080, %v272
    %v1083 = vmax.f32 %v1072, %v1081
    %v1084 = vmax.f32 %v1073, %v1082
    %1085 = vrot.lane.b32.xlu0 %v1083, 17
    %v1086 = vpop.permute.xlu0 %1085
    %1087 = vrot.lane.b32.xlu0 %v1084, 17
    %v1088 = vpop.permute.xlu0 %1087
    %v1089 = vsel %vm285, %v1086, %v1088
    %v1090 = vsel %vm285, %v1088, %v1086
    %v1091 = vmul.f32 %v1090, %v74
    %v1092 = vmul.f32 %v1089, %v78
    %1093 = vst [vmem:[#allocation2] sm:$0xff] %v1091
    %1094 = vst [vmem:[#allocation2 + $0x8] sm:$0xff] %v1092
    %1095 = vrot.lane.b32.xlu0 %v1083, 16
    %v1096 = vpop.permute.xlu0 %1095
    %1097 = vrot.lane.b32.xlu0 %v1084, 16
    %v1098 = vpop.permute.xlu0 %1097
    %v1099 = vsel %vm296, %v1096, %v1098
    %v1100 = vsel %vm296, %v1098, %v1096
    %v1101 = vmul.f32 %v1100, %v87
    %v1102 = vmul.f32 %v1099, %v91
    %1103 = vst [vmem:[#allocation2 + $0x10] sm:$0xff] %v1101
    %1104 = vst [vmem:[#allocation2 + $0x18] sm:$0xff] %v1102
    %1105 = vrot.lane.b32.xlu0 %v1083, 15
    %v1106 = vpop.permute.xlu0 %1105
    %1107 = vrot.lane.b32.xlu0 %v1084, 15
    %v1108 = vpop.permute.xlu0 %1107
    %v1109 = vsel %vm307, %v1106, %v1108
    %v1110 = vsel %vm307, %v1108, %v1106
    %v1111 = vmul.f32 %v1110, %v100
    %v1112 = vmul.f32 %v1109, %v104
    %1113 = vst [vmem:[#allocation2 + $0x20] sm:$0xff] %v1111
    %1114 = vst [vmem:[#allocation2 + $0x28] sm:$0xff] %v1112
    %1115 = vrot.lane.b32.xlu0 %v1083, 1
    %v1116 = vpop.permute.xlu0 %1115
    %1117 = vrot.lane.b32.xlu0 %v1084, 1
    %v1118 = vpop.permute.xlu0 %1117
    %v1119 = vsel %vm318, %v1116, %v1118
    %v1120 = vsel %vm318, %v1118, %v1116
    %v1121 = vmul.f32 %v1120, %v113
    %v1122 = vmul.f32 %v1119, %v117
    %1123 = vst [vmem:[#allocation2 + $0x30] sm:$0xff] %v1121
    %1124 = vst [vmem:[#allocation2 + $0x38] sm:$0xff] %v1122
    %1125 = vst [vmem:[#allocation2 + $0x40] sm:$0xff] %v1083
    %1126 = vst [vmem:[#allocation2 + $0x48] sm:$0xff] %v1084
    %1127 = vrot.lane.b32.xlu0 %v1083, 127
    %v1128 = vpop.permute.xlu0 %1127
    %1129 = vrot.lane.b32.xlu0 %v1084, 127
    %v1130 = vpop.permute.xlu0 %1129
    %v1131 = vsel %vm331, %v1128, %v1130
    %v1132 = vsel %vm331, %v1130, %v1128
    %v1133 = vmul.f32 %v1131, %v126
    %v1134 = vmul.f32 %v1132, %v130
    %1135 = vst [vmem:[#allocation2 + $0x50] sm:$0xff] %v1133
    %1136 = vst [vmem:[#allocation2 + $0x58] sm:$0xff] %v1134
    %1137 = vrot.lane.b32.xlu0 %v1083, 113
    %v1138 = vpop.permute.xlu0 %1137
    %1139 = vrot.lane.b32.xlu0 %v1084, 113
    %v1140 = vpop.permute.xlu0 %1139
    %v1141 = vsel %vm342, %v1138, %v1140
    %v1142 = vsel %vm342, %v1140, %v1138
    %v1143 = vmul.f32 %v1141, %v139
    %v1144 = vmul.f32 %v1142, %v143
    %1145 = vst [vmem:[#allocation2 + $0x60] sm:$0xff] %v1143
    %1146 = vst [vmem:[#allocation2 + $0x68] sm:$0xff] %v1144
    %1147 = vrot.lane.b32.xlu0 %v1083, 112
    %v1148 = vpop.permute.xlu0 %1147
    %1149 = vrot.lane.b32.xlu0 %v1084, 112
    %v1150 = vpop.permute.xlu0 %1149
    %v1151 = vsel %vm353, %v1148, %v1150
    %v1152 = vsel %vm353, %v1150, %v1148
    %v1153 = vmul.f32 %v1151, %v152
    %v1154 = vmul.f32 %v1152, %v156
    %1155 = vst [vmem:[#allocation2 + $0x70] sm:$0xff] %v1153
    %1156 = vst [vmem:[#allocation2 + $0x78] sm:$0xff] %v1154
    %1157 = vrot.lane.b32.xlu0 %v1083, 111
    %v1158 = vpop.permute.xlu0 %1157
    %1159 = vrot.lane.b32.xlu0 %v1084, 111
    %v1160 = vpop.permute.xlu0 %1159
    %v1161 = vsel %vm364, %v1158, %v1160
    %v1162 = vsel %vm364, %v1160, %v1158
    %v1163 = vmul.f32 %v1161, %v165
    %v1164 = vmul.f32 %v1162, %v169
    %1165 = vst [vmem:[#allocation2 + $0x80] sm:$0xff] %v1163
    %1166 = vst [vmem:[#allocation2 + $0x88] sm:$0xff] %v1164
    %s1167 = scalar_lea.vmem [#allocation6], 32
    %v1168 = vld [vmem:[%s1167] sm:$0xff]
    %v1169 = vld [vmem:[#allocation2] sm:$0xff]
    %v1170 = vld [vmem:[#allocation2 + $0x8] sm:$0xff]
    %v1171 = vld [vmem:[#allocation2 + $0x10] sm:$0xff]
    %v1172 = vld [vmem:[#allocation2 + $0x18] sm:$0xff]
    %v1173 = vld [vmem:[#allocation2 + $0x20] sm:$0xff]
    %v1174 = vld [vmem:[#allocation2 + $0x28] sm:$0xff]
    %v1175 = vld [vmem:[#allocation2 + $0x30] sm:$0xff]
    %v1176 = vld [vmem:[#allocation2 + $0x38] sm:$0xff]
    %v1177 = vld [vmem:[#allocation2 + $0x40] sm:$0xff]
    %v1178 = vld [vmem:[#allocation2 + $0x48] sm:$0xff]
    %v1179 = vld [vmem:[#allocation2 + $0x50] sm:$0xff]
    %v1180 = vld [vmem:[#allocation2 + $0x58] sm:$0xff]
    %v1181 = vld [vmem:[#allocation2 + $0x60] sm:$0xff]
    %v1182 = vld [vmem:[#allocation2 + $0x68] sm:$0xff]
    %v1183 = vld [vmem:[#allocation2 + $0x70] sm:$0xff]
    %v1184 = vld [vmem:[#allocation2 + $0x78] sm:$0xff]
    %v1185 = vld [vmem:[#allocation2 + $0x80] sm:$0xff]
    %v1186 = vld [vmem:[#allocation2 + $0x88] sm:$0xff]
    %v1188 = vsel %vm390, %v1168, 0
    %1190 = vmatprep.subr.mxu0 %v1170
    %1191 = vmatpush1.msra.mxu0 %v1169
    %1192 = vmatprep.subr.mxu0 %v1172
    %1193 = vmatpush1.msra.mxu0 %v1171
    %1194 = vmatprep.subr.mxu0 %v1174
    %1195 = vmatpush1.msra.mxu0 %v1173
    %1196 = vmatprep.subr.mxu0 %v1176
    %1197 = vmatpush1.msra.mxu0 %v1175
    %1198 = vmatprep.subr.mxu0 %v1178
    %1199 = vmatpush1.msra.mxu0 %v1177
    %1200 = vmatprep.subr.mxu0 %v1180
    %1201 = vmatpush1.msra.mxu0 %v1179
    %1202 = vmatprep.subr.mxu0 %v1182
    %1203 = vmatpush1.msra.mxu0 %v1181
    %1204 = vmatprep.subr.mxu0 %v1184
    %1205 = vmatpush1.msra.mxu0 %v1183
    %1206 = vmatprep.subr.mxu0 %v1186
    %1207 = vmatpush1.msra.mxu0 %v1185
    %1208 = vmatprep.subr.mxu0 0.0
    %1209 = vmatpush1.msra.mxu0 0.0
    %1210 = vmatprep.subr.mxu0 0.0
    %1211 = vmatpush1.msra.mxu0 0.0
    %1212 = vmatprep.subr.mxu0 0.0
    %1213 = vmatpush1.msra.mxu0 0.0
    %1214 = vmatprep.subr.mxu0 0.0
    %1215 = vmatpush1.msra.mxu0 0.0
    %1216 = vmatprep.subr.mxu0 0.0
    %1217 = vmatpush1.msra.mxu0 0.0
    %1218 = vmatprep.subr.mxu0 0.0
    %1219 = vmatpush1.msra.mxu0 0.0
    %1220 = vmatprep.subr.mxu0 0.0
    %1221 = vmatpush1.msra.mxu0 0.0
    %1222 = vmatprep.subr.mxu0 0.0
    %1223 = vmatpush1.msra.mxu0 0.0
    %1224 = vmatprep.subr.mxu0 0.0
    %1225 = vmatpush1.msra.mxu0 0.0
    %1226 = vmatprep.subr.mxu0 0.0
    %1227 = vmatpush1.msra.mxu0 0.0
    %1228 = vmatprep.subr.mxu0 0.0
    %1229 = vmatpush1.msra.mxu0 0.0
    %1230 = vmatprep.subr.mxu0 0.0
    %1231 = vmatpush1.msra.mxu0 0.0
    %1232 = vmatprep.subr.mxu0 0.0
    %1233 = vmatpush1.msra.mxu0 0.0
    %1234 = vmatprep.subr.mxu0 0.0
    %1235 = vmatpush1.msra.mxu0 0.0
    %1236 = vmatprep.subr.mxu0 0.0
    %1237 = vmatpush1.msra.mxu0 0.0
    %1238 = vmatprep.subr.mxu0 0.0
    %1239 = vmatpush1.msra.mxu0 0.0
    %1240 = vmatprep.subr.mxu0 0.0
    %1241 = vmatpush1.msra.mxu0 0.0
    %1242 = vmatprep.subr.mxu0 0.0
    %1243 = vmatpush1.msra.mxu0 0.0
    %1244 = vmatprep.subr.mxu0 0.0
    %1245 = vmatpush1.msra.mxu0 0.0
    %1246 = vmatprep.subr.mxu0 0.0
    %1247 = vmatpush1.msra.mxu0 0.0
    %1248 = vmatprep.subr.mxu0 0.0
    %1249 = vmatpush1.msra.mxu0 0.0
    %1250 = vmatprep.subr.mxu0 0.0
    %1251 = vmatpush1.msra.mxu0 0.0
    %1252 = vmatprep.subr.mxu0 0.0
    %1253 = vmatpush1.msra.mxu0 0.0
    %1254 = vmatprep.mubr.f32.mxu0 0.0
    %1255 = vmatmul.mubr.f32.gmra.mrb[0].mxu0 %v1188
    %v1256 = vpop.f32.mrb[0].mxu0
    %v1257 = vadd.f32 0.0, %v1256
    %v1258 = vpop.f32.mrb[0].mxu0
    %v1259 = vadd.f32 0.0, %v1258
    %1260 = vdwg.mxu0
    %v1261 = vadd.f32 %v999, %v1257
    %v1262 = vadd.f32 %v1000, %v1259
    %1263 = vrot.lane.b32.xlu0 %v1257, 32
    %v1264 = vpop.permute.xlu0 %1263
    %1265 = vrot.lane.b32.xlu0 %v1259, 32
    %v1266 = vpop.permute.xlu0 %1265
    %v1267 = vsel %vm1005, %v1264, %v1266
    %v1268 = vsel %vm1005, %v1266, %v1264
    %v1269 = vadd.f32 %v1268, %v177
    %v1270 = vadd.f32 %v1267, %v181
    %v1271 = vmax.f32 %v1257, %v1269
    %v1272 = vmax.f32 %v1259, %v1270
    %1273 = vrot.lane.b32.xlu0 %v1257, 16
    %v1274 = vpop.permute.xlu0 %1273
    %1275 = vrot.lane.b32.xlu0 %v1259, 16
    %v1276 = vpop.permute.xlu0 %1275
    %v1277 = vsel %vm296, %v1274, %v1276
    %v1278 = vsel %vm296, %v1276, %v1274
    %v1279 = vadd.f32 %v1278, %v190
    %v1280 = vadd.f32 %v1277, %v194
    %v1281 = vmax.f32 %v1271, %v1279
    %v1282 = vmax.f32 %v1272, %v1280
    %1283 = vrot.lane.b32.xlu0 %v1257, 112
    %v1284 = vpop.permute.xlu0 %1283
    %1285 = vrot.lane.b32.xlu0 %v1259, 112
    %v1286 = vpop.permute.xlu0 %1285
    %v1287 = vsel %vm353, %v1284, %v1286
    %v1288 = vsel %vm353, %v1286, %v1284
    %v1289 = vadd.f32 %v1287, %v203
    %v1290 = vadd.f32 %v1288, %v207
    %v1291 = vmax.f32 %v1281, %v1289
    %v1292 = vmax.f32 %v1282, %v1290
    %1293 = vrot.lane.b32.xlu0 %v1257, 96
    %v1294 = vpop.permute.xlu0 %1293
    %1295 = vrot.lane.b32.xlu0 %v1259, 96
    %v1296 = vpop.permute.xlu0 %1295
    %v1297 = vsel %vm1036, %v1294, %v1296
    %v1298 = vsel %vm1036, %v1296, %v1294
    %v1299 = vadd.f32 %v1297, %v216
    %v1300 = vadd.f32 %v1298, %v220
    %v1301 = vmax.f32 %v1291, %v1299
    %v1302 = vmax.f32 %v1292, %v1300
    %1303 = vrot.lane.b32.xlu0 %v1301, 2
    %v1304 = vpop.permute.xlu0 %1303
    %1305 = vrot.lane.b32.xlu0 %v1302, 2
    %v1306 = vpop.permute.xlu0 %1305
    %v1307 = vsel %vm1047, %v1304, %v1306
    %v1308 = vsel %vm1047, %v1306, %v1304
    %v1309 = vadd.f32 %v1308, %v229
    %v1310 = vadd.f32 %v1307, %v233
    %v1311 = vmax.f32 %v1301, %v1309
    %v1312 = vmax.f32 %v1302, %v1310
    %1313 = vrot.lane.b32.xlu0 %v1301, 1
    %v1314 = vpop.permute.xlu0 %1313
    %1315 = vrot.lane.b32.xlu0 %v1302, 1
    %v1316 = vpop.permute.xlu0 %1315
    %v1317 = vsel %vm318, %v1314, %v1316
    %v1318 = vsel %vm318, %v1316, %v1314
    %v1319 = vadd.f32 %v1318, %v242
    %v1320 = vadd.f32 %v1317, %v246
    %v1321 = vmax.f32 %v1311, %v1319
    %v1322 = vmax.f32 %v1312, %v1320
    %1323 = vrot.lane.b32.xlu0 %v1301, 127
    %v1324 = vpop.permute.xlu0 %1323
    %1325 = vrot.lane.b32.xlu0 %v1302, 127
    %v1326 = vpop.permute.xlu0 %1325
    %v1327 = vsel %vm331, %v1324, %v1326
    %v1328 = vsel %vm331, %v1326, %v1324
    %v1329 = vadd.f32 %v1327, %v255
    %v1330 = vadd.f32 %v1328, %v259
    %v1331 = vmax.f32 %v1321, %v1329
    %v1332 = vmax.f32 %v1322, %v1330
    %1333 = vrot.lane.b32.xlu0 %v1301, 126
    %v1334 = vpop.permute.xlu0 %1333
    %1335 = vrot.lane.b32.xlu0 %v1302, 126
    %v1336 = vpop.permute.xlu0 %1335
    %v1337 = vsel %vm1078, %v1334, %v1336
    %v1338 = vsel %vm1078, %v1336, %v1334
    %v1339 = vadd.f32 %v1337, %v268
    %v1340 = vadd.f32 %v1338, %v272
    %v1341 = vmax.f32 %v1331, %v1339
    %v1342 = vmax.f32 %v1332, %v1340
    %1343 = vrot.lane.b32.xlu0 %v1341, 17
    %v1344 = vpop.permute.xlu0 %1343
    %1345 = vrot.lane.b32.xlu0 %v1342, 17
    %v1346 = vpop.permute.xlu0 %1345
    %v1347 = vsel %vm285, %v1344, %v1346
    %v1348 = vsel %vm285, %v1346, %v1344
    %v1349 = vmul.f32 %v1348, %v74
    %v1350 = vmul.f32 %v1347, %v78
    %1351 = vst [vmem:[#allocation2] sm:$0xff] %v1349
    %1352 = vst [vmem:[#allocation2 + $0x8] sm:$0xff] %v1350
    %1353 = vrot.lane.b32.xlu0 %v1341, 16
    %v1354 = vpop.permute.xlu0 %1353
    %1355 = vrot.lane.b32.xlu0 %v1342, 16
    %v1356 = vpop.permute.xlu0 %1355
    %v1357 = vsel %vm296, %v1354, %v1356
    %v1358 = vsel %vm296, %v1356, %v1354
    %v1359 = vmul.f32 %v1358, %v87
    %v1360 = vmul.f32 %v1357, %v91
    %1361 = vst [vmem:[#allocation2 + $0x10] sm:$0xff] %v1359
    %1362 = vst [vmem:[#allocation2 + $0x18] sm:$0xff] %v1360
    %1363 = vrot.lane.b32.xlu0 %v1341, 15
    %v1364 = vpop.permute.xlu0 %1363
    %1365 = vrot.lane.b32.xlu0 %v1342, 15
    %v1366 = vpop.permute.xlu0 %1365
    %v1367 = vsel %vm307, %v1364, %v1366
    %v1368 = vsel %vm307, %v1366, %v1364
    %v1369 = vmul.f32 %v1368, %v100
    %v1370 = vmul.f32 %v1367, %v104
    %1371 = vst [vmem:[#allocation2 + $0x20] sm:$0xff] %v1369
    %1372 = vst [vmem:[#allocation2 + $0x28] sm:$0xff] %v1370
    %1373 = vrot.lane.b32.xlu0 %v1341, 1
    %v1374 = vpop.permute.xlu0 %1373
    %1375 = vrot.lane.b32.xlu0 %v1342, 1
    %v1376 = vpop.permute.xlu0 %1375
    %v1377 = vsel %vm318, %v1374, %v1376
    %v1378 = vsel %vm318, %v1376, %v1374
    %v1379 = vmul.f32 %v1378, %v113
    %v1380 = vmul.f32 %v1377, %v117
    %1381 = vst [vmem:[#allocation2 + $0x30] sm:$0xff] %v1379
    %1382 = vst [vmem:[#allocation2 + $0x38] sm:$0xff] %v1380
    %1383 = vst [vmem:[#allocation2 + $0x40] sm:$0xff] %v1341
    %1384 = vst [vmem:[#allocation2 + $0x48] sm:$0xff] %v1342
    %1385 = vrot.lane.b32.xlu0 %v1341, 127
    %v1386 = vpop.permute.xlu0 %1385
    %1387 = vrot.lane.b32.xlu0 %v1342, 127
    %v1388 = vpop.permute.xlu0 %1387
    %v1389 = vsel %vm331, %v1386, %v1388
    %v1390 = vsel %vm331, %v1388, %v1386
    %v1391 = vmul.f32 %v1389, %v126
    %v1392 = vmul.f32 %v1390, %v130
    %1393 = vst [vmem:[#allocation2 + $0x50] sm:$0xff] %v1391
    %1394 = vst [vmem:[#allocation2 + $0x58] sm:$0xff] %v1392
    %1395 = vrot.lane.b32.xlu0 %v1341, 113
    %v1396 = vpop.permute.xlu0 %1395
    %1397 = vrot.lane.b32.xlu0 %v1342, 113
    %v1398 = vpop.permute.xlu0 %1397
    %v1399 = vsel %vm342, %v1396, %v1398
    %v1400 = vsel %vm342, %v1398, %v1396
    %v1401 = vmul.f32 %v1399, %v139
    %v1402 = vmul.f32 %v1400, %v143
    %1403 = vst [vmem:[#allocation2 + $0x60] sm:$0xff] %v1401
    %1404 = vst [vmem:[#allocation2 + $0x68] sm:$0xff] %v1402
    %1405 = vrot.lane.b32.xlu0 %v1341, 112
    %v1406 = vpop.permute.xlu0 %1405
    %1407 = vrot.lane.b32.xlu0 %v1342, 112
    %v1408 = vpop.permute.xlu0 %1407
    %v1409 = vsel %vm353, %v1406, %v1408
    %v1410 = vsel %vm353, %v1408, %v1406
    %v1411 = vmul.f32 %v1409, %v152
    %v1412 = vmul.f32 %v1410, %v156
    %1413 = vst [vmem:[#allocation2 + $0x70] sm:$0xff] %v1411
    %1414 = vst [vmem:[#allocation2 + $0x78] sm:$0xff] %v1412
    %1415 = vrot.lane.b32.xlu0 %v1341, 111
    %v1416 = vpop.permute.xlu0 %1415
    %1417 = vrot.lane.b32.xlu0 %v1342, 111
    %v1418 = vpop.permute.xlu0 %1417
    %v1419 = vsel %vm364, %v1416, %v1418
    %v1420 = vsel %vm364, %v1418, %v1416
    %v1421 = vmul.f32 %v1419, %v165
    %v1422 = vmul.f32 %v1420, %v169
    %1423 = vst [vmem:[#allocation2 + $0x80] sm:$0xff] %v1421
    %1424 = vst [vmem:[#allocation2 + $0x88] sm:$0xff] %v1422
    %s1425 = scalar_lea.vmem [#allocation6], 40
    %v1426 = vld [vmem:[%s1425] sm:$0xff]
    %v1427 = vld [vmem:[#allocation2] sm:$0xff]
    %v1428 = vld [vmem:[#allocation2 + $0x8] sm:$0xff]
    %v1429 = vld [vmem:[#allocation2 + $0x10] sm:$0xff]
    %v1430 = vld [vmem:[#allocation2 + $0x18] sm:$0xff]
    %v1431 = vld [vmem:[#allocation2 + $0x20] sm:$0xff]
    %v1432 = vld [vmem:[#allocation2 + $0x28] sm:$0xff]
    %v1433 = vld [vmem:[#allocation2 + $0x30] sm:$0xff]
    %v1434 = vld [vmem:[#allocation2 + $0x38] sm:$0xff]
    %v1435 = vld [vmem:[#allocation2 + $0x40] sm:$0xff]
    %v1436 = vld [vmem:[#allocation2 + $0x48] sm:$0xff]
    %v1437 = vld [vmem:[#allocation2 + $0x50] sm:$0xff]
    %v1438 = vld [vmem:[#allocation2 + $0x58] sm:$0xff]
    %v1439 = vld [vmem:[#allocation2 + $0x60] sm:$0xff]
    %v1440 = vld [vmem:[#allocation2 + $0x68] sm:$0xff]
    %v1441 = vld [vmem:[#allocation2 + $0x70] sm:$0xff]
    %v1442 = vld [vmem:[#allocation2 + $0x78] sm:$0xff]
    %v1443 = vld [vmem:[#allocation2 + $0x80] sm:$0xff]
    %v1444 = vld [vmem:[#allocation2 + $0x88] sm:$0xff]
    %v1446 = vsel %vm390, %v1426, 0
    %1448 = vmatprep.subr.mxu0 %v1428
    %1449 = vmatpush1.msra.mxu0 %v1427
    %1450 = vmatprep.subr.mxu0 %v1430
    %1451 = vmatpush1.msra.mxu0 %v1429
    %1452 = vmatprep.subr.mxu0 %v1432
    %1453 = vmatpush1.msra.mxu0 %v1431
    %1454 = vmatprep.subr.mxu0 %v1434
    %1455 = vmatpush1.msra.mxu0 %v1433
    %1456 = vmatprep.subr.mxu0 %v1436
    %1457 = vmatpush1.msra.mxu0 %v1435
    %1458 = vmatprep.subr.mxu0 %v1438
    %1459 = vmatpush1.msra.mxu0 %v1437
    %1460 = vmatprep.subr.mxu0 %v1440
    %1461 = vmatpush1.msra.mxu0 %v1439
    %1462 = vmatprep.subr.mxu0 %v1442
    %1463 = vmatpush1.msra.mxu0 %v1441
    %1464 = vmatprep.subr.mxu0 %v1444
    %1465 = vmatpush1.msra.mxu0 %v1443
    %1466 = vmatprep.subr.mxu0 0.0
    %1467 = vmatpush1.msra.mxu0 0.0
    %1468 = vmatprep.subr.mxu0 0.0
    %1469 = vmatpush1.msra.mxu0 0.0
    %1470 = vmatprep.subr.mxu0 0.0
    %1471 = vmatpush1.msra.mxu0 0.0
    %1472 = vmatprep.subr.mxu0 0.0
    %1473 = vmatpush1.msra.mxu0 0.0
    %1474 = vmatprep.subr.mxu0 0.0
    %1475 = vmatpush1.msra.mxu0 0.0
    %1476 = vmatprep.subr.mxu0 0.0
    %1477 = vmatpush1.msra.mxu0 0.0
    %1478 = vmatprep.subr.mxu0 0.0
    %1479 = vmatpush1.msra.mxu0 0.0
    %1480 = vmatprep.subr.mxu0 0.0
    %1481 = vmatpush1.msra.mxu0 0.0
    %1482 = vmatprep.subr.mxu0 0.0
    %1483 = vmatpush1.msra.mxu0 0.0
    %1484 = vmatprep.subr.mxu0 0.0
    %1485 = vmatpush1.msra.mxu0 0.0
    %1486 = vmatprep.subr.mxu0 0.0
    %1487 = vmatpush1.msra.mxu0 0.0
    %1488 = vmatprep.subr.mxu0 0.0
    %1489 = vmatpush1.msra.mxu0 0.0
    %1490 = vmatprep.subr.mxu0 0.0
    %1491 = vmatpush1.msra.mxu0 0.0
    %1492 = vmatprep.subr.mxu0 0.0
    %1493 = vmatpush1.msra.mxu0 0.0
    %1494 = vmatprep.subr.mxu0 0.0
    %1495 = vmatpush1.msra.mxu0 0.0
    %1496 = vmatprep.subr.mxu0 0.0
    %1497 = vmatpush1.msra.mxu0 0.0
    %1498 = vmatprep.subr.mxu0 0.0
    %1499 = vmatpush1.msra.mxu0 0.0
    %1500 = vmatprep.subr.mxu0 0.0
    %1501 = vmatpush1.msra.mxu0 0.0
    %1502 = vmatprep.subr.mxu0 0.0
    %1503 = vmatpush1.msra.mxu0 0.0
    %1504 = vmatprep.subr.mxu0 0.0
    %1505 = vmatpush1.msra.mxu0 0.0
    %1506 = vmatprep.subr.mxu0 0.0
    %1507 = vmatpush1.msra.mxu0 0.0
    %1508 = vmatprep.subr.mxu0 0.0
    %1509 = vmatpush1.msra.mxu0 0.0
    %1510 = vmatprep.subr.mxu0 0.0
    %1511 = vmatpush1.msra.mxu0 0.0
    %1512 = vmatprep.mubr.f32.mxu0 0.0
    %1513 = vmatmul.mubr.f32.gmra.mrb[0].mxu0 %v1446
    %v1514 = vpop.f32.mrb[0].mxu0
    %v1515 = vadd.f32 0.0, %v1514
    %v1516 = vpop.f32.mrb[0].mxu0
    %v1517 = vadd.f32 0.0, %v1516
    %1518 = vdwg.mxu0
    %v1519 = vadd.f32 %v1261, %v1515
    %v1520 = vadd.f32 %v1262, %v1517
    %1521 = vrot.lane.b32.xlu0 %v1515, 32
    %v1522 = vpop.permute.xlu0 %1521
    %1523 = vrot.lane.b32.xlu0 %v1517, 32
    %v1524 = vpop.permute.xlu0 %1523
    %v1525 = vsel %vm1005, %v1522, %v1524
    %v1526 = vsel %vm1005, %v1524, %v1522
    %v1527 = vadd.f32 %v1526, %v177
    %v1528 = vadd.f32 %v1525, %v181
    %v1529 = vmax.f32 %v1515, %v1527
    %v1530 = vmax.f32 %v1517, %v1528
    %1531 = vrot.lane.b32.xlu0 %v1515, 16
    %v1532 = vpop.permute.xlu0 %1531
    %1533 = vrot.lane.b32.xlu0 %v1517, 16
    %v1534 = vpop.permute.xlu0 %1533
    %v1535 = vsel %vm296, %v1532, %v1534
    %v1536 = vsel %vm296, %v1534, %v1532
    %v1537 = vadd.f32 %v1536, %v190
    %v1538 = vadd.f32 %v1535, %v194
    %v1539 = vmax.f32 %v1529, %v1537
    %v1540 = vmax.f32 %v1530, %v1538
    %1541 = vrot.lane.b32.xlu0 %v1515, 112
    %v1542 = vpop.permute.xlu0 %1541
    %1543 = vrot.lane.b32.xlu0 %v1517, 112
    %v1544 = vpop.permute.xlu0 %1543
    %v1545 = vsel %vm353, %v1542, %v1544
    %v1546 = vsel %vm353, %v1544, %v1542
    %v1547 = vadd.f32 %v1545, %v203
    %v1548 = vadd.f32 %v1546, %v207
    %v1549 = vmax.f32 %v1539, %v1547
    %v1550 = vmax.f32 %v1540, %v1548
    %1551 = vrot.lane.b32.xlu0 %v1515, 96
    %v1552 = vpop.permute.xlu0 %1551
    %1553 = vrot.lane.b32.xlu0 %v1517, 96
    %v1554 = vpop.permute.xlu0 %1553
    %v1555 = vsel %vm1036, %v1552, %v1554
    %v1556 = vsel %vm1036, %v1554, %v1552
    %v1557 = vadd.f32 %v1555, %v216
    %v1558 = vadd.f32 %v1556, %v220
    %v1559 = vmax.f32 %v1549, %v1557
    %v1560 = vmax.f32 %v1550, %v1558
    %1561 = vrot.lane.b32.xlu0 %v1559, 2
    %v1562 = vpop.permute.xlu0 %1561
    %1563 = vrot.lane.b32.xlu0 %v1560, 2
    %v1564 = vpop.permute.xlu0 %1563
    %v1565 = vsel %vm1047, %v1562, %v1564
    %v1566 = vsel %vm1047, %v1564, %v1562
    %v1567 = vadd.f32 %v1566, %v229
    %v1568 = vadd.f32 %v1565, %v233
    %v1569 = vmax.f32 %v1559, %v1567
    %v1570 = vmax.f32 %v1560, %v1568
    %1571 = vrot.lane.b32.xlu0 %v1559, 1
    %v1572 = vpop.permute.xlu0 %1571
    %1573 = vrot.lane.b32.xlu0 %v1560, 1
    %v1574 = vpop.permute.xlu0 %1573
    %v1575 = vsel %vm318, %v1572, %v1574
    %v1576 = vsel %vm318, %v1574, %v1572
    %v1577 = vadd.f32 %v1576, %v242
    %v1578 = vadd.f32 %v1575, %v246
    %v1579 = vmax.f32 %v1569, %v1577
    %v1580 = vmax.f32 %v1570, %v1578
    %1581 = vrot.lane.b32.xlu0 %v1559, 127
    %v1582 = vpop.permute.xlu0 %1581
    %1583 = vrot.lane.b32.xlu0 %v1560, 127
    %v1584 = vpop.permute.xlu0 %1583
    %v1585 = vsel %vm331, %v1582, %v1584
    %v1586 = vsel %vm331, %v1584, %v1582
    %v1587 = vadd.f32 %v1585, %v255
    %v1588 = vadd.f32 %v1586, %v259
    %v1589 = vmax.f32 %v1579, %v1587
    %v1590 = vmax.f32 %v1580, %v1588
    %1591 = vrot.lane.b32.xlu0 %v1559, 126
    %v1592 = vpop.permute.xlu0 %1591
    %1593 = vrot.lane.b32.xlu0 %v1560, 126
    %v1594 = vpop.permute.xlu0 %1593
    %v1595 = vsel %vm1078, %v1592, %v1594
    %v1596 = vsel %vm1078, %v1594, %v1592
    %v1597 = vadd.f32 %v1595, %v268
    %v1598 = vadd.f32 %v1596, %v272
    %v1599 = vmax.f32 %v1589, %v1597
    %v1600 = vmax.f32 %v1590, %v1598
    %1601 = vrot.lane.b32.xlu0 %v1599, 17
    %v1602 = vpop.permute.xlu0 %1601
    %1603 = vrot.lane.b32.xlu0 %v1600, 17
    %v1604 = vpop.permute.xlu0 %1603
    %v1605 = vsel %vm285, %v1602, %v1604
    %v1606 = vsel %vm285, %v1604, %v1602
    %v1607 = vmul.f32 %v1606, %v74
    %v1608 = vmul.f32 %v1605, %v78
    %1609 = vst [vmem:[#allocation2] sm:$0xff] %v1607
    %1610 = vst [vmem:[#allocation2 + $0x8] sm:$0xff] %v1608
    %1611 = vrot.lane.b32.xlu0 %v1599, 16
    %v1612 = vpop.permute.xlu0 %1611
    %1613 = vrot.lane.b32.xlu0 %v1600, 16
    %v1614 = vpop.permute.xlu0 %1613
    %v1615 = vsel %vm296, %v1612, %v1614
    %v1616 = vsel %vm296, %v1614, %v1612
    %v1617 = vmul.f32 %v1616, %v87
    %v1618 = vmul.f32 %v1615, %v91
    %1619 = vst [vmem:[#allocation2 + $0x10] sm:$0xff] %v1617
    %1620 = vst [vmem:[#allocation2 + $0x18] sm:$0xff] %v1618
    %1621 = vrot.lane.b32.xlu0 %v1599, 15
    %v1622 = vpop.permute.xlu0 %1621
    %1623 = vrot.lane.b32.xlu0 %v1600, 15
    %v1624 = vpop.permute.xlu0 %1623
    %v1625 = vsel %vm307, %v1622, %v1624
    %v1626 = vsel %vm307, %v1624, %v1622
    %v1627 = vmul.f32 %v1626, %v100
    %v1628 = vmul.f32 %v1625, %v104
    %1629 = vst [vmem:[#allocation2 + $0x20] sm:$0xff] %v1627
    %1630 = vst [vmem:[#allocation2 + $0x28] sm:$0xff] %v1628
    %1631 = vrot.lane.b32.xlu0 %v1599, 1
    %v1632 = vpop.permute.xlu0 %1631
    %1633 = vrot.lane.b32.xlu0 %v1600, 1
    %v1634 = vpop.permute.xlu0 %1633
    %v1635 = vsel %vm318, %v1632, %v1634
    %v1636 = vsel %vm318, %v1634, %v1632
    %v1637 = vmul.f32 %v1636, %v113
    %v1638 = vmul.f32 %v1635, %v117
    %1639 = vst [vmem:[#allocation2 + $0x30] sm:$0xff] %v1637
    %1640 = vst [vmem:[#allocation2 + $0x38] sm:$0xff] %v1638
    %1641 = vst [vmem:[#allocation2 + $0x40] sm:$0xff] %v1599
    %1642 = vst [vmem:[#allocation2 + $0x48] sm:$0xff] %v1600
    %1643 = vrot.lane.b32.xlu0 %v1599, 127
    %v1644 = vpop.permute.xlu0 %1643
    %1645 = vrot.lane.b32.xlu0 %v1600, 127
    %v1646 = vpop.permute.xlu0 %1645
    %v1647 = vsel %vm331, %v1644, %v1646
    %v1648 = vsel %vm331, %v1646, %v1644
    %v1649 = vmul.f32 %v1647, %v126
    %v1650 = vmul.f32 %v1648, %v130
    %1651 = vst [vmem:[#allocation2 + $0x50] sm:$0xff] %v1649
    %1652 = vst [vmem:[#allocation2 + $0x58] sm:$0xff] %v1650
    %1653 = vrot.lane.b32.xlu0 %v1599, 113
    %v1654 = vpop.permute.xlu0 %1653
    %1655 = vrot.lane.b32.xlu0 %v1600, 113
    %v1656 = vpop.permute.xlu0 %1655
    %v1657 = vsel %vm342, %v1654, %v1656
    %v1658 = vsel %vm342, %v1656, %v1654
    %v1659 = vmul.f32 %v1657, %v139
    %v1660 = vmul.f32 %v1658, %v143
    %1661 = vst [vmem:[#allocation2 + $0x60] sm:$0xff] %v1659
    %1662 = vst [vmem:[#allocation2 + $0x68] sm:$0xff] %v1660
    %1663 = vrot.lane.b32.xlu0 %v1599, 112
    %v1664 = vpop.permute.xlu0 %1663
    %1665 = vrot.lane.b32.xlu0 %v1600, 112
    %v1666 = vpop.permute.xlu0 %1665
    %v1667 = vsel %vm353, %v1664, %v1666
    %v1668 = vsel %vm353, %v1666, %v1664
    %v1669 = vmul.f32 %v1667, %v152
    %v1670 = vmul.f32 %v1668, %v156
    %1671 = vst [vmem:[#allocation2 + $0x70] sm:$0xff] %v1669
    %1672 = vst [vmem:[#allocation2 + $0x78] sm:$0xff] %v1670
    %1673 = vrot.lane.b32.xlu0 %v1599, 111
    %v1674 = vpop.permute.xlu0 %1673
    %1675 = vrot.lane.b32.xlu0 %v1600, 111
    %v1676 = vpop.permute.xlu0 %1675
    %v1677 = vsel %vm364, %v1674, %v1676
    %v1678 = vsel %vm364, %v1676, %v1674
    %v1679 = vmul.f32 %v1677, %v165
    %v1680 = vmul.f32 %v1678, %v169
    %1681 = vst [vmem:[#allocation2 + $0x80] sm:$0xff] %v1679
    %1682 = vst [vmem:[#allocation2 + $0x88] sm:$0xff] %v1680
    %s1683 = scalar_lea.vmem [#allocation6], 48
    %v1684 = vld [vmem:[%s1683] sm:$0xff]
    %v1685 = vld [vmem:[#allocation2] sm:$0xff]
    %v1686 = vld [vmem:[#allocation2 + $0x8] sm:$0xff]
    %v1687 = vld [vmem:[#allocation2 + $0x10] sm:$0xff]
    %v1688 = vld [vmem:[#allocation2 + $0x18] sm:$0xff]
    %v1689 = vld [vmem:[#allocation2 + $0x20] sm:$0xff]
    %v1690 = vld [vmem:[#allocation2 + $0x28] sm:$0xff]
    %v1691 = vld [vmem:[#allocation2 + $0x30] sm:$0xff]
    %v1692 = vld [vmem:[#allocation2 + $0x38] sm:$0xff]
    %v1693 = vld [vmem:[#allocation2 + $0x40] sm:$0xff]
    %v1694 = vld [vmem:[#allocation2 + $0x48] sm:$0xff]
    %v1695 = vld [vmem:[#allocation2 + $0x50] sm:$0xff]
    %v1696 = vld [vmem:[#allocation2 + $0x58] sm:$0xff]
    %v1697 = vld [vmem:[#allocation2 + $0x60] sm:$0xff]
    %v1698 = vld [vmem:[#allocation2 + $0x68] sm:$0xff]
    %v1699 = vld [vmem:[#allocation2 + $0x70] sm:$0xff]
    %v1700 = vld [vmem:[#allocation2 + $0x78] sm:$0xff]
    %v1701 = vld [vmem:[#allocation2 + $0x80] sm:$0xff]
    %v1702 = vld [vmem:[#allocation2 + $0x88] sm:$0xff]
    %v1704 = vsel %vm390, %v1684, 0
    %1706 = vmatprep.subr.mxu0 %v1686
    %1707 = vmatpush1.msra.mxu0 %v1685
    %1708 = vmatprep.subr.mxu0 %v1688
    %1709 = vmatpush1.msra.mxu0 %v1687
    %1710 = vmatprep.subr.mxu0 %v1690
    %1711 = vmatpush1.msra.mxu0 %v1689
    %1712 = vmatprep.subr.mxu0 %v1692
    %1713 = vmatpush1.msra.mxu0 %v1691
    %1714 = vmatprep.subr.mxu0 %v1694
    %1715 = vmatpush1.msra.mxu0 %v1693
    %1716 = vmatprep.subr.mxu0 %v1696
    %1717 = vmatpush1.msra.mxu0 %v1695
    %1718 = vmatprep.subr.mxu0 %v1698
    %1719 = vmatpush1.msra.mxu0 %v1697
    %1720 = vmatprep.subr.mxu0 %v1700
    %1721 = vmatpush1.msra.mxu0 %v1699
    %1722 = vmatprep.subr.mxu0 %v1702
    %1723 = vmatpush1.msra.mxu0 %v1701
    %1724 = vmatprep.subr.mxu0 0.0
    %1725 = vmatpush1.msra.mxu0 0.0
    %1726 = vmatprep.subr.mxu0 0.0
    %1727 = vmatpush1.msra.mxu0 0.0
    %1728 = vmatprep.subr.mxu0 0.0
    %1729 = vmatpush1.msra.mxu0 0.0
    %1730 = vmatprep.subr.mxu0 0.0
    %1731 = vmatpush1.msra.mxu0 0.0
    %1732 = vmatprep.subr.mxu0 0.0
    %1733 = vmatpush1.msra.mxu0 0.0
    %1734 = vmatprep.subr.mxu0 0.0
    %1735 = vmatpush1.msra.mxu0 0.0
    %1736 = vmatprep.subr.mxu0 0.0
    %1737 = vmatpush1.msra.mxu0 0.0
    %1738 = vmatprep.subr.mxu0 0.0
    %1739 = vmatpush1.msra.mxu0 0.0
    %1740 = vmatprep.subr.mxu0 0.0
    %1741 = vmatpush1.msra.mxu0 0.0
    %1742 = vmatprep.subr.mxu0 0.0
    %1743 = vmatpush1.msra.mxu0 0.0
    %1744 = vmatprep.subr.mxu0 0.0
    %1745 = vmatpush1.msra.mxu0 0.0
    %1746 = vmatprep.subr.mxu0 0.0
    %1747 = vmatpush1.msra.mxu0 0.0
    %1748 = vmatprep.subr.mxu0 0.0
    %1749 = vmatpush1.msra.mxu0 0.0
    %1750 = vmatprep.subr.mxu0 0.0
    %1751 = vmatpush1.msra.mxu0 0.0
    %1752 = vmatprep.subr.mxu0 0.0
    %1753 = vmatpush1.msra.mxu0 0.0
    %1754 = vmatprep.subr.mxu0 0.0
    %1755 = vmatpush1.msra.mxu0 0.0
    %1756 = vmatprep.subr.mxu0 0.0
    %1757 = vmatpush1.msra.mxu0 0.0
    %1758 = vmatprep.subr.mxu0 0.0
    %1759 = vmatpush1.msra.mxu0 0.0
    %1760 = vmatprep.subr.mxu0 0.0
    %1761 = vmatpush1.msra.mxu0 0.0
    %1762 = vmatprep.subr.mxu0 0.0
    %1763 = vmatpush1.msra.mxu0 0.0
    %1764 = vmatprep.subr.mxu0 0.0
    %1765 = vmatpush1.msra.mxu0 0.0
    %1766 = vmatprep.subr.mxu0 0.0
    %1767 = vmatpush1.msra.mxu0 0.0
    %1768 = vmatprep.subr.mxu0 0.0
    %1769 = vmatpush1.msra.mxu0 0.0
    %1770 = vmatprep.mubr.f32.mxu0 0.0
    %1771 = vmatmul.mubr.f32.gmra.mrb[0].mxu0 %v1704
    %v1772 = vpop.f32.mrb[0].mxu0
    %v1773 = vadd.f32 0.0, %v1772
    %v1774 = vpop.f32.mrb[0].mxu0
    %v1775 = vadd.f32 0.0, %v1774
    %1776 = vdwg.mxu0
    %v1777 = vadd.f32 %v1519, %v1773
    %v1778 = vadd.f32 %v1520, %v1775
    %v1779 = vmax.f32 %v1777, 0.0
    %v1780 = vmax.f32 %v1778, 0.0
    %1781 = vrot.lane.b32.xlu0 %v1779, 17
    %v1782 = vpop.permute.xlu0 %1781
    %1783 = vrot.lane.b32.xlu0 %v1780, 17
    %v1784 = vpop.permute.xlu0 %1783
    %v1785 = vsel %vm285, %v1782, %v1784
    %v1786 = vsel %vm285, %v1784, %v1782
    %v1787 = vmul.f32 %v1786, %v74
    %v1788 = vmul.f32 %v1785, %v78
    %1789 = vst [vmem:[#allocation2] sm:$0xff] %v1787
    %1790 = vst [vmem:[#allocation2 + $0x8] sm:$0xff] %v1788
    %1791 = vrot.lane.b32.xlu0 %v1779, 16
    %v1792 = vpop.permute.xlu0 %1791
    %1793 = vrot.lane.b32.xlu0 %v1780, 16
    %v1794 = vpop.permute.xlu0 %1793
    %v1795 = vsel %vm296, %v1792, %v1794
    %v1796 = vsel %vm296, %v1794, %v1792
    %v1797 = vmul.f32 %v1796, %v87
    %v1798 = vmul.f32 %v1795, %v91
    %1799 = vst [vmem:[#allocation2 + $0x10] sm:$0xff] %v1797
    %1800 = vst [vmem:[#allocation2 + $0x18] sm:$0xff] %v1798
    %1801 = vrot.lane.b32.xlu0 %v1779, 15
    %v1802 = vpop.permute.xlu0 %1801
    %1803 = vrot.lane.b32.xlu0 %v1780, 15
    %v1804 = vpop.permute.xlu0 %1803
    %v1805 = vsel %vm307, %v1802, %v1804
    %v1806 = vsel %vm307, %v1804, %v1802
    %v1807 = vmul.f32 %v1806, %v100
    %v1808 = vmul.f32 %v1805, %v104
    %1809 = vst [vmem:[#allocation2 + $0x20] sm:$0xff] %v1807
    %1810 = vst [vmem:[#allocation2 + $0x28] sm:$0xff] %v1808
    %1811 = vrot.lane.b32.xlu0 %v1779, 1
    %v1812 = vpop.permute.xlu0 %1811
    %1813 = vrot.lane.b32.xlu0 %v1780, 1
    %v1814 = vpop.permute.xlu0 %1813
    %v1815 = vsel %vm318, %v1812, %v1814
    %v1816 = vsel %vm318, %v1814, %v1812
    %v1817 = vmul.f32 %v1816, %v113
    %v1818 = vmul.f32 %v1815, %v117
    %1819 = vst [vmem:[#allocation2 + $0x30] sm:$0xff] %v1817
    %1820 = vst [vmem:[#allocation2 + $0x38] sm:$0xff] %v1818
    %1821 = vst [vmem:[#allocation2 + $0x40] sm:$0xff] %v1779
    %1822 = vst [vmem:[#allocation2 + $0x48] sm:$0xff] %v1780
    %1823 = vrot.lane.b32.xlu0 %v1779, 127
    %v1824 = vpop.permute.xlu0 %1823
    %1825 = vrot.lane.b32.xlu0 %v1780, 127
    %v1826 = vpop.permute.xlu0 %1825
    %v1827 = vsel %vm331, %v1824, %v1826
    %v1828 = vsel %vm331, %v1826, %v1824
    %v1829 = vmul.f32 %v1827, %v126
    %v1830 = vmul.f32 %v1828, %v130
    %1831 = vst [vmem:[#allocation2 + $0x50] sm:$0xff] %v1829
    %1832 = vst [vmem:[#allocation2 + $0x58] sm:$0xff] %v1830
    %1833 = vrot.lane.b32.xlu0 %v1779, 113
    %v1834 = vpop.permute.xlu0 %1833
    %1835 = vrot.lane.b32.xlu0 %v1780, 113
    %v1836 = vpop.permute.xlu0 %1835
    %v1837 = vsel %vm342, %v1834, %v1836
    %v1838 = vsel %vm342, %v1836, %v1834
    %v1839 = vmul.f32 %v1837, %v139
    %v1840 = vmul.f32 %v1838, %v143
    %1841 = vst [vmem:[#allocation2 + $0x60] sm:$0xff] %v1839
    %1842 = vst [vmem:[#allocation2 + $0x68] sm:$0xff] %v1840
    %1843 = vrot.lane.b32.xlu0 %v1779, 112
    %v1844 = vpop.permute.xlu0 %1843
    %1845 = vrot.lane.b32.xlu0 %v1780, 112
    %v1846 = vpop.permute.xlu0 %1845
    %v1847 = vsel %vm353, %v1844, %v1846
    %v1848 = vsel %vm353, %v1846, %v1844
    %v1849 = vmul.f32 %v1847, %v152
    %v1850 = vmul.f32 %v1848, %v156
    %1851 = vst [vmem:[#allocation2 + $0x70] sm:$0xff] %v1849
    %1852 = vst [vmem:[#allocation2 + $0x78] sm:$0xff] %v1850
    %1853 = vrot.lane.b32.xlu0 %v1779, 111
    %v1854 = vpop.permute.xlu0 %1853
    %1855 = vrot.lane.b32.xlu0 %v1780, 111
    %v1856 = vpop.permute.xlu0 %1855
    %v1857 = vsel %vm364, %v1854, %v1856
    %v1858 = vsel %vm364, %v1856, %v1854
    %v1859 = vmul.f32 %v1857, %v165
    %v1860 = vmul.f32 %v1858, %v169
    %1861 = vst [vmem:[#allocation2 + $0x80] sm:$0xff] %v1859
    %1862 = vst [vmem:[#allocation2 + $0x88] sm:$0xff] %v1860
    %s1863 = scalar_lea.vmem [#allocation6], 56
    %v1864 = vld [vmem:[%s1863] sm:$0xff]
    %v1865 = vld [vmem:[#allocation2] sm:$0xff]
    %v1866 = vld [vmem:[#allocation2 + $0x8] sm:$0xff]
    %v1867 = vld [vmem:[#allocation2 + $0x10] sm:$0xff]
    %v1868 = vld [vmem:[#allocation2 + $0x18] sm:$0xff]
    %v1869 = vld [vmem:[#allocation2 + $0x20] sm:$0xff]
    %v1870 = vld [vmem:[#allocation2 + $0x28] sm:$0xff]
    %v1871 = vld [vmem:[#allocation2 + $0x30] sm:$0xff]
    %v1872 = vld [vmem:[#allocation2 + $0x38] sm:$0xff]
    %v1873 = vld [vmem:[#allocation2 + $0x40] sm:$0xff]
    %v1874 = vld [vmem:[#allocation2 + $0x48] sm:$0xff]
    %v1875 = vld [vmem:[#allocation2 + $0x50] sm:$0xff]
    %v1876 = vld [vmem:[#allocation2 + $0x58] sm:$0xff]
    %v1877 = vld [vmem:[#allocation2 + $0x60] sm:$0xff]
    %v1878 = vld [vmem:[#allocation2 + $0x68] sm:$0xff]
    %v1879 = vld [vmem:[#allocation2 + $0x70] sm:$0xff]
    %v1880 = vld [vmem:[#allocation2 + $0x78] sm:$0xff]
    %v1881 = vld [vmem:[#allocation2 + $0x80] sm:$0xff]
    %v1882 = vld [vmem:[#allocation2 + $0x88] sm:$0xff]
    %v1884 = vsel %vm390, %v1864, 0
    %1886 = vmatprep.subr.mxu0 %v1866
    %1887 = vmatpush1.msra.mxu0 %v1865
    %1888 = vmatprep.subr.mxu0 %v1868
    %1889 = vmatpush1.msra.mxu0 %v1867
    %1890 = vmatprep.subr.mxu0 %v1870
    %1891 = vmatpush1.msra.mxu0 %v1869
    %1892 = vmatprep.subr.mxu0 %v1872
    %1893 = vmatpush1.msra.mxu0 %v1871
    %1894 = vmatprep.subr.mxu0 %v1874
    %1895 = vmatpush1.msra.mxu0 %v1873
    %1896 = vmatprep.subr.mxu0 %v1876
    %1897 = vmatpush1.msra.mxu0 %v1875
    %1898 = vmatprep.subr.mxu0 %v1878
    %1899 = vmatpush1.msra.mxu0 %v1877
    %1900 = vmatprep.subr.mxu0 %v1880
    %1901 = vmatpush1.msra.mxu0 %v1879
    %1902 = vmatprep.subr.mxu0 %v1882
    %1903 = vmatpush1.msra.mxu0 %v1881
    %1904 = vmatprep.subr.mxu0 0.0
    %1905 = vmatpush1.msra.mxu0 0.0
    %1906 = vmatprep.subr.mxu0 0.0
    %1907 = vmatpush1.msra.mxu0 0.0
    %1908 = vmatprep.subr.mxu0 0.0
    %1909 = vmatpush1.msra.mxu0 0.0
    %1910 = vmatprep.subr.mxu0 0.0
    %1911 = vmatpush1.msra.mxu0 0.0
    %1912 = vmatprep.subr.mxu0 0.0
    %1913 = vmatpush1.msra.mxu0 0.0
    %1914 = vmatprep.subr.mxu0 0.0
    %1915 = vmatpush1.msra.mxu0 0.0
    %1916 = vmatprep.subr.mxu0 0.0
    %1917 = vmatpush1.msra.mxu0 0.0
    %1918 = vmatprep.subr.mxu0 0.0
    %1919 = vmatpush1.msra.mxu0 0.0
    %1920 = vmatprep.subr.mxu0 0.0
    %1921 = vmatpush1.msra.mxu0 0.0
    %1922 = vmatprep.subr.mxu0 0.0
    %1923 = vmatpush1.msra.mxu0 0.0
    %1924 = vmatprep.subr.mxu0 0.0
    %1925 = vmatpush1.msra.mxu0 0.0
    %1926 = vmatprep.subr.mxu0 0.0
    %1927 = vmatpush1.msra.mxu0 0.0
    %1928 = vmatprep.subr.mxu0 0.0
    %1929 = vmatpush1.msra.mxu0 0.0
    %1930 = vmatprep.subr.mxu0 0.0
    %1931 = vmatpush1.msra.mxu0 0.0
    %1932 = vmatprep.subr.mxu0 0.0
    %1933 = vmatpush1.msra.mxu0 0.0
    %1934 = vmatprep.subr.mxu0 0.0
    %1935 = vmatpush1.msra.mxu0 0.0
    %1936 = vmatprep.subr.mxu0 0.0
    %1937 = vmatpush1.msra.mxu0 0.0
    %1938 = vmatprep.subr.mxu0 0.0
    %1939 = vmatpush1.msra.mxu0 0.0
    %1940 = vmatprep.subr.mxu0 0.0
    %1941 = vmatpush1.msra.mxu0 0.0
    %1942 = vmatprep.subr.mxu0 0.0
    %1943 = vmatpush1.msra.mxu0 0.0
    %1944 = vmatprep.subr.mxu0 0.0
    %1945 = vmatpush1.msra.mxu0 0.0
    %1946 = vmatprep.subr.mxu0 0.0
    %1947 = vmatpush1.msra.mxu0 0.0
    %1948 = vmatprep.subr.mxu0 0.0
    %1949 = vmatpush1.msra.mxu0 0.0
    %1950 = vmatprep.mubr.f32.mxu0 0.0
    %1951 = vmatmul.mubr.f32.gmra.mrb[0].mxu0 %v1884
    %v1952 = vpop.f32.mrb[0].mxu0
    %v1953 = vadd.f32 0.0, %v1952
    %v1954 = vpop.f32.mrb[0].mxu0
    %v1955 = vadd.f32 0.0, %v1954
    %1956 = vdwg.mxu0
    %v1957 = vmax.f32 %v1953, 0.0
    %v1958 = vmax.f32 %v1955, 0.0
    %1959 = vrot.lane.b32.xlu0 %v1957, 17
    %v1960 = vpop.permute.xlu0 %1959
    %1961 = vrot.lane.b32.xlu0 %v1958, 17
    %v1962 = vpop.permute.xlu0 %1961
    %v1963 = vsel %vm285, %v1960, %v1962
    %v1964 = vsel %vm285, %v1962, %v1960
    %v1965 = vmul.f32 %v1964, %v74
    %v1966 = vmul.f32 %v1963, %v78
    %1967 = vst [vmem:[#allocation2] sm:$0xff] %v1965
    %1968 = vst [vmem:[#allocation2 + $0x8] sm:$0xff] %v1966
    %1969 = vrot.lane.b32.xlu0 %v1957, 16
    %v1970 = vpop.permute.xlu0 %1969
    %1971 = vrot.lane.b32.xlu0 %v1958, 16
    %v1972 = vpop.permute.xlu0 %1971
    %v1973 = vsel %vm296, %v1970, %v1972
    %v1974 = vsel %vm296, %v1972, %v1970
    %v1975 = vmul.f32 %v1974, %v87
    %v1976 = vmul.f32 %v1973, %v91
    %1977 = vst [vmem:[#allocation2 + $0x10] sm:$0xff] %v1975
    %1978 = vst [vmem:[#allocation2 + $0x18] sm:$0xff] %v1976
    %1979 = vrot.lane.b32.xlu0 %v1957, 15
    %v1980 = vpop.permute.xlu0 %1979
    %1981 = vrot.lane.b32.xlu0 %v1958, 15
    %v1982 = vpop.permute.xlu0 %1981
    %v1983 = vsel %vm307, %v1980, %v1982
    %v1984 = vsel %vm307, %v1982, %v1980
    %v1985 = vmul.f32 %v1984, %v100
    %v1986 = vmul.f32 %v1983, %v104
    %1987 = vst [vmem:[#allocation2 + $0x20] sm:$0xff] %v1985
    %1988 = vst [vmem:[#allocation2 + $0x28] sm:$0xff] %v1986
    %1989 = vrot.lane.b32.xlu0 %v1957, 1
    %v1990 = vpop.permute.xlu0 %1989
    %1991 = vrot.lane.b32.xlu0 %v1958, 1
    %v1992 = vpop.permute.xlu0 %1991
    %v1993 = vsel %vm318, %v1990, %v1992
    %v1994 = vsel %vm318, %v1992, %v1990
    %v1995 = vmul.f32 %v1994, %v113
    %v1996 = vmul.f32 %v1993, %v117
    %1997 = vst [vmem:[#allocation2 + $0x30] sm:$0xff] %v1995
    %1998 = vst [vmem:[#allocation2 + $0x38] sm:$0xff] %v1996
    %1999 = vst [vmem:[#allocation2 + $0x40] sm:$0xff] %v1957
    %2000 = vst [vmem:[#allocation2 + $0x48] sm:$0xff] %v1958
    %2001 = vrot.lane.b32.xlu0 %v1957, 127
    %v2002 = vpop.permute.xlu0 %2001
    %2003 = vrot.lane.b32.xlu0 %v1958, 127
    %v2004 = vpop.permute.xlu0 %2003
    %v2005 = vsel %vm331, %v2002, %v2004
    %v2006 = vsel %vm331, %v2004, %v2002
    %v2007 = vmul.f32 %v2005, %v126
    %v2008 = vmul.f32 %v2006, %v130
    %2009 = vst [vmem:[#allocation2 + $0x50] sm:$0xff] %v2007
    %2010 = vst [vmem:[#allocation2 + $0x58] sm:$0xff] %v2008
    %2011 = vrot.lane.b32.xlu0 %v1957, 113
    %v2012 = vpop.permute.xlu0 %2011
    %2013 = vrot.lane.b32.xlu0 %v1958, 113
    %v2014 = vpop.permute.xlu0 %2013
    %v2015 = vsel %vm342, %v2012, %v2014
    %v2016 = vsel %vm342, %v2014, %v2012
    %v2017 = vmul.f32 %v2015, %v139
    %v2018 = vmul.f32 %v2016, %v143
    %2019 = vst [vmem:[#allocation2 + $0x60] sm:$0xff] %v2017
    %2020 = vst [vmem:[#allocation2 + $0x68] sm:$0xff] %v2018
    %2021 = vrot.lane.b32.xlu0 %v1957, 112
    %v2022 = vpop.permute.xlu0 %2021
    %2023 = vrot.lane.b32.xlu0 %v1958, 112
    %v2024 = vpop.permute.xlu0 %2023
    %v2025 = vsel %vm353, %v2022, %v2024
    %v2026 = vsel %vm353, %v2024, %v2022
    %v2027 = vmul.f32 %v2025, %v152
    %v2028 = vmul.f32 %v2026, %v156
    %2029 = vst [vmem:[#allocation2 + $0x70] sm:$0xff] %v2027
    %2030 = vst [vmem:[#allocation2 + $0x78] sm:$0xff] %v2028
    %2031 = vrot.lane.b32.xlu0 %v1957, 111
    %v2032 = vpop.permute.xlu0 %2031
    %2033 = vrot.lane.b32.xlu0 %v1958, 111
    %v2034 = vpop.permute.xlu0 %2033
    %v2035 = vsel %vm364, %v2032, %v2034
    %v2036 = vsel %vm364, %v2034, %v2032
    %v2037 = vmul.f32 %v2035, %v165
    %v2038 = vmul.f32 %v2036, %v169
    %2039 = vst [vmem:[#allocation2 + $0x80] sm:$0xff] %v2037
    %2040 = vst [vmem:[#allocation2 + $0x88] sm:$0xff] %v2038
    %s2041 = scalar_lea.vmem [#allocation6], 64
    %v2042 = vld [vmem:[%s2041] sm:$0xff]
    %v2043 = vld [vmem:[#allocation2] sm:$0xff]
    %v2044 = vld [vmem:[#allocation2 + $0x8] sm:$0xff]
    %v2045 = vld [vmem:[#allocation2 + $0x10] sm:$0xff]
    %v2046 = vld [vmem:[#allocation2 + $0x18] sm:$0xff]
    %v2047 = vld [vmem:[#allocation2 + $0x20] sm:$0xff]
    %v2048 = vld [vmem:[#allocation2 + $0x28] sm:$0xff]
    %v2049 = vld [vmem:[#allocation2 + $0x30] sm:$0xff]
    %v2050 = vld [vmem:[#allocation2 + $0x38] sm:$0xff]
    %v2051 = vld [vmem:[#allocation2 + $0x40] sm:$0xff]
    %v2052 = vld [vmem:[#allocation2 + $0x48] sm:$0xff]
    %v2053 = vld [vmem:[#allocation2 + $0x50] sm:$0xff]
    %v2054 = vld [vmem:[#allocation2 + $0x58] sm:$0xff]
    %v2055 = vld [vmem:[#allocation2 + $0x60] sm:$0xff]
    %v2056 = vld [vmem:[#allocation2 + $0x68] sm:$0xff]
    %v2057 = vld [vmem:[#allocation2 + $0x70] sm:$0xff]
    %v2058 = vld [vmem:[#allocation2 + $0x78] sm:$0xff]
    %v2059 = vld [vmem:[#allocation2 + $0x80] sm:$0xff]
    %v2060 = vld [vmem:[#allocation2 + $0x88] sm:$0xff]
    %v2062 = vsel %vm390, %v2042, 0
    %2064 = vmatprep.subr.mxu0 %v2044
    %2065 = vmatpush1.msra.mxu0 %v2043
    %2066 = vmatprep.subr.mxu0 %v2046
    %2067 = vmatpush1.msra.mxu0 %v2045
    %2068 = vmatprep.subr.mxu0 %v2048
    %2069 = vmatpush1.msra.mxu0 %v2047
    %2070 = vmatprep.subr.mxu0 %v2050
    %2071 = vmatpush1.msra.mxu0 %v2049
    %2072 = vmatprep.subr.mxu0 %v2052
    %2073 = vmatpush1.msra.mxu0 %v2051
    %2074 = vmatprep.subr.mxu0 %v2054
    %2075 = vmatpush1.msra.mxu0 %v2053
    %2076 = vmatprep.subr.mxu0 %v2056
    %2077 = vmatpush1.msra.mxu0 %v2055
    %2078 = vmatprep.subr.mxu0 %v2058
    %2079 = vmatpush1.msra.mxu0 %v2057
    %2080 = vmatprep.subr.mxu0 %v2060
    %2081 = vmatpush1.msra.mxu0 %v2059
    %2082 = vmatprep.subr.mxu0 0.0
    %2083 = vmatpush1.msra.mxu0 0.0
    %2084 = vmatprep.subr.mxu0 0.0
    %2085 = vmatpush1.msra.mxu0 0.0
    %2086 = vmatprep.subr.mxu0 0.0
    %2087 = vmatpush1.msra.mxu0 0.0
    %2088 = vmatprep.subr.mxu0 0.0
    %2089 = vmatpush1.msra.mxu0 0.0
    %2090 = vmatprep.subr.mxu0 0.0
    %2091 = vmatpush1.msra.mxu0 0.0
    %2092 = vmatprep.subr.mxu0 0.0
    %2093 = vmatpush1.msra.mxu0 0.0
    %2094 = vmatprep.subr.mxu0 0.0
    %2095 = vmatpush1.msra.mxu0 0.0
    %2096 = vmatprep.subr.mxu0 0.0
    %2097 = vmatpush1.msra.mxu0 0.0
    %2098 = vmatprep.subr.mxu0 0.0
    %2099 = vmatpush1.msra.mxu0 0.0
    %2100 = vmatprep.subr.mxu0 0.0
    %2101 = vmatpush1.msra.mxu0 0.0
    %2102 = vmatprep.subr.mxu0 0.0
    %2103 = vmatpush1.msra.mxu0 0.0
    %2104 = vmatprep.subr.mxu0 0.0
    %2105 = vmatpush1.msra.mxu0 0.0
    %2106 = vmatprep.subr.mxu0 0.0
    %2107 = vmatpush1.msra.mxu0 0.0
    %2108 = vmatprep.subr.mxu0 0.0
    %2109 = vmatpush1.msra.mxu0 0.0
    %2110 = vmatprep.subr.mxu0 0.0
    %2111 = vmatpush1.msra.mxu0 0.0
    %2112 = vmatprep.subr.mxu0 0.0
    %2113 = vmatpush1.msra.mxu0 0.0
    %2114 = vmatprep.subr.mxu0 0.0
    %2115 = vmatpush1.msra.mxu0 0.0
    %2116 = vmatprep.subr.mxu0 0.0
    %2117 = vmatpush1.msra.mxu0 0.0
    %2118 = vmatprep.subr.mxu0 0.0
    %2119 = vmatpush1.msra.mxu0 0.0
    %2120 = vmatprep.subr.mxu0 0.0
    %2121 = vmatpush1.msra.mxu0 0.0
    %2122 = vmatprep.subr.mxu0 0.0
    %2123 = vmatpush1.msra.mxu0 0.0
    %2124 = vmatprep.subr.mxu0 0.0
    %2125 = vmatpush1.msra.mxu0 0.0
    %2126 = vmatprep.subr.mxu0 0.0
    %2127 = vmatpush1.msra.mxu0 0.0
    %2128 = vmatprep.mubr.f32.mxu0 0.0
    %2129 = vmatmul.mubr.f32.gmra.mrb[0].mxu0 %v2062
    %v2130 = vpop.f32.mrb[0].mxu0
    %v2131 = vadd.f32 %v1777, %v2130
    %v2132 = vpop.f32.mrb[0].mxu0
    %v2133 = vadd.f32 %v1778, %v2132
    %2134 = vdwg.mxu0
    %2135 = vst [vmem:[#allocation11] sm:$0xff] %v2131
    %2136 = vst [vmem:[#allocation11 + $0x8] sm:$0xff] %v2133
    // Predicated region
    $region34: #{tpu_custom_call.1} parent=1 // pred_check
      _
    $region35: #{tpu_custom_call.1} parent=1 // pred_check_branch
      %2138 = sbr.rel (0) target = $region37
    $region36: #{tpu_custom_call.1} parent=1 // pred_region
      %s2140 = ssub.s32 256, 256
      %2141 = vsyncadd [#allocation5], %s2140
      %s2143 = sshll.u32 [#allocation11], 4
      %s2144 = int_to_ptr.vmem [resolvable:$true] %s2143
      %2146 = dma.vmem_to_hbm [thread:$0]  %s2144, 256, %s4, [#allocation5]
    $region37: #{tpu_custom_call.1} parent=1 // pred_fallthru
      _
    // Predicated region
    $region38: #{tpu_custom_call.1} parent=1 // pred_check
      _
    $region39: #{tpu_custom_call.1} parent=1 // pred_check_branch
      %2148 = sbr.rel (0) target = $region41
    $region40: #{tpu_custom_call.1} parent=1 // pred_region
      %2149 = dma.done [#allocation5], 256
    $region41: #{tpu_custom_call.1} parent=1 // pred_fallthru
      _
    %2150 = vsyncpa [#allocation4], 1
    %2151 = vsyncpa [#allocation7], 1
    %2152 = vsyncpa [#allocation10], 1
    %2153 = vsyncpa [#allocation5], 1

</llo_original>
